<compile_context>
chip_gen: v6e
topology: v6e:2x2x1
jax: 0.10.0
libtpu: 0.0.40
codegen_flags: <defaults>
</compile_context>

<pallas_src>
import functools
import math

import jax
import jax.numpy as jnp
from jax.experimental import pallas as pl
from jax.experimental.pallas import tpu as pltpu

LN_EPS = 1e-5  # PyTorch nn.LayerNorm default


# ------------------------------ fused kernel -------------------------------

def _fused_kws_kernel(x_ref, pe_ref, inp_w_ref, wqkv_ref, bqkv_ref, wout_ref,
                      vec_ref, wff1_ref, bff1_ref, wff2_ref, outw_ref,
                      outb_ref, o_ref, *, num_layers, num_heads, seq, emb):
    """One program = one batch element's full forward pass.

    Shapes (per program):
      x_ref    (S, Din)           f32   rows of this batch element
      pe_ref   (S, E)             f32   positional encoding + folded input bias
      inp_w_ref(Din, E)           bf16
      wqkv_ref (L, 3, H, E, Dh)   bf16  per-head Q/K/V weights (Q pre-scaled)
      bqkv_ref (L, 3, H, 1, Dh)   f32   per-head Q/K/V biases  (Q pre-scaled)
      wout_ref (L, H, Dh, E)      bf16  attention output projection (per head)
      vec_ref  (L, 6, E)          f32   [out_b, n1_g, n1_b, ff2_b, n2_g, n2_b]
      wff1_ref (L, E, 4E)         bf16
      bff1_ref (L, 1, 4E)         f32
      wff2_ref (L, 4E, E)         bf16
      outw_ref (1, E)             f32
      outb_ref (1, 1)             f32
      o_ref    (1, 1, S)          f32   lane-dense logits row
    """
    H, S, E = num_heads, seq, emb
    bf16 = jnp.bfloat16

    def layernorm(y, g, b):
        mean = jnp.mean(y, axis=-1, keepdims=True)
        c = y - mean
        var = jnp.mean(c * c, axis=-1, keepdims=True)
        return c * jax.lax.rsqrt(var + LN_EPS) * g + b

    # Input projection (bf16 x bf16 -> f32 acc) + positional encoding
    # (input-projection bias already folded into pe_ref on the host).
    x = jnp.dot(x_ref[...].astype(bf16), inp_w_ref[...],
                preferred_element_type=jnp.float32) + pe_ref[...]

    for l in range(num_layers):
        # ---- multi-head self-attention: all heads batched, no scratch ----
        xh = jnp.broadcast_to(x.astype(bf16), (H, S, E))
        q = jnp.einsum('hse,hed->hsd', xh, wqkv_ref[l, 0],
                       preferred_element_type=jnp.float32) + bqkv_ref[l, 0]
        k = jnp.einsum('hse,hed->hsd', xh, wqkv_ref[l, 1],
                       preferred_element_type=jnp.float32) + bqkv_ref[l, 1]
        v = jnp.einsum('hse,hed->hsd', xh, wqkv_ref[l, 2],
                       preferred_element_type=jnp.float32) + bqkv_ref[l, 2]

        # scores: Q already carries the 1/sqrt(Dh) scale
        s = jnp.einsum('hqd,hkd->hqk', q.astype(bf16), k.astype(bf16),
                       preferred_element_type=jnp.float32)
        s = s - jnp.max(s, axis=-1, keepdims=True)
        p = jnp.exp(s)
        p = p * pl.reciprocal(jnp.sum(p, axis=-1, keepdims=True), approx=True)

        ctx = jnp.einsum('hqk,hkd->hqd', p.astype(bf16), v.astype(bf16),
                         preferred_element_type=jnp.float32)
        # concat-heads + out_proj == sum over heads of (ctx_h @ Wout_h)
        attended = jnp.einsum('hsd,hde->hse', ctx.astype(bf16), wout_ref[l],
                              preferred_element_type=jnp.float32)
        attended = jnp.sum(attended, axis=0) + vec_ref[l, 0]
        x = layernorm(x + attended, vec_ref[l, 1], vec_ref[l, 2])

        # ---- feed-forward ----
        hidden = jnp.maximum(
            jnp.dot(x.astype(bf16), wff1_ref[l],
                    preferred_element_type=jnp.float32) + bff1_ref[l], 0.0)
        ff = jnp.dot(hidden.astype(bf16), wff2_ref[l],
                     preferred_element_type=jnp.float32) + vec_ref[l, 3]
        x = layernorm(x + ff, vec_ref[l, 4], vec_ref[l, 5])

    # Output projection (Dout = 1), emitted lane-dense as a (1, S) row:
    # (1, E) . (S, E)^T -> (1, S)
    logits = jax.lax.dot_general(outw_ref[...], x, (((1,), (1,)), ((), ())),
                                 preferred_element_type=jnp.float32)
    logits = logits + outb_ref[...]
    o_ref[...] = logits.reshape(o_ref.shape)


# ------------------------------ host wrapper --------------------------------

def _full_spec(arr):
    zeros = (0,) * arr.ndim
    return pl.BlockSpec(arr.shape, lambda b, _z=zeros: _z)


def simple_kws_forward(audio_features, packed):
    """audio_features: (B, S, input_dim) -> (B, S, 1). Fully fused forward."""
    B, S, Din = audio_features.shape
    E = packed["inp_w"].shape[1]
    L, _, H, _, Dh = packed["w_qkv"].shape
    FF = packed["w_ff1"].shape[-1]

    x2d = audio_features.reshape(B * S, Din)          # batch-major rows (free)

    inputs = [x2d, packed["pe_b"], packed["inp_w"], packed["w_qkv"],
              packed["b_qkv"], packed["w_out"], packed["vec"],
              packed["w_ff1"], packed["b_ff1"], packed["w_ff2"],
              packed["out_w"], packed["out_b"]]

    in_specs = [pl.BlockSpec((S, Din), lambda b: (b, 0)),     # x rows per batch
                pl.BlockSpec((S, E), lambda b: (0, 0))]       # shared PE slab
    in_specs += [_full_spec(a) for a in inputs[2:]]           # resident weights

    out_specs = pl.BlockSpec((1, 1, S), lambda b: (b, 0, 0))

    # Advisory cost estimate for the XLA scheduler.
    flops = 2 * B * S * Din * E + 2 * B * S * E
    flops += L * (2 * B * S * E * 3 * E + 4 * B * S * S * E
                  + 2 * B * S * E * E + 4 * B * S * E * FF)
    transcendentals = L * B * H * S * S
    bytes_accessed = (sum(int(a.size) * a.dtype.itemsize for a in inputs)
                      + B * S * 4)

    kernel = functools.partial(_fused_kws_kernel, num_layers=L, num_heads=H,
                               seq=S, emb=E)
    out = pl.pallas_call(
        kernel,
        out_shape=jax.ShapeDtypeStruct((B, 1, S), jnp.float32),
        grid=(B,),
        in_specs=in_specs,
        out_specs=out_specs,
        compiler_params=pltpu.CompilerParams(
            dimension_semantics=("parallel",)),
        cost_estimate=pl.CostEstimate(flops=flops,
                                      transcendentals=transcendentals,
                                      bytes_accessed=bytes_accessed),
    )(*inputs)
    return out.reshape(B, S, 1)                        # middle dim is 1: free


# ------------------------------ params init ---------------------------------

def positional_encoding(max_len, d_model):
    position = jnp.arange(max_len, dtype=jnp.float32)[:, None]
    div_term = jnp.exp(jnp.arange(0, d_model, 2, dtype=jnp.float32)
                       * -(math.log(10000.0) / d_model))
    pe = jnp.zeros((max_len, d_model), jnp.float32)
    pe = pe.at[:, 0::2].set(jnp.sin(position * div_term))
    pe = pe.at[:, 1::2].set(jnp.cos(position * div_term))
    return pe                                           # (max_len, d_model)


def init_params(key, input_dim, hidden_dim, num_heads, num_layers, max_seq=64):
    # Weights stored pre-transposed as (in_features, out_features); biases as
    # (1, out_features).
    def dense_t(k, in_f, out_f, scale=0.05):
        kw, kb = jax.random.split(k)
        return (scale * jax.random.normal(kw, (in_f, out_f), jnp.float32),
                scale * jax.random.normal(kb, (1, out_f), jnp.float32))

    k_in, k_out, *k_layers = jax.random.split(key, 2 + num_layers)
    inp_w, inp_b = dense_t(k_in, input_dim, hidden_dim)

    kw, kb = jax.random.split(k_out)
    out_w = 0.05 * jax.random.normal(kw, (1, hidden_dim), jnp.float32)
    out_b = 0.05 * jax.random.normal(kb, (1, 1), jnp.float32)

    layers = []
    for kl in k_layers:
        ks = jax.random.split(kl, 4)
        in_proj_w, in_proj_b = dense_t(ks[0], hidden_dim, 3 * hidden_dim)
        out_proj_w, out_proj_b = dense_t(ks[1], hidden_dim, hidden_dim)
        ff1_w, ff1_b = dense_t(ks[2], hidden_dim, 4 * hidden_dim)
        ff2_w, ff2_b = dense_t(ks[3], 4 * hidden_dim, hidden_dim)
        layers.append(dict(
            in_proj_w=in_proj_w, in_proj_b=in_proj_b,
            out_proj_w=out_proj_w, out_proj_b=out_proj_b,
            norm1_g=jnp.ones((1, hidden_dim), jnp.float32),
            norm1_b=jnp.zeros((1, hidden_dim), jnp.float32),
            ff1_w=ff1_w, ff1_b=ff1_b,
            ff2_w=ff2_w, ff2_b=ff2_b,
            norm2_g=jnp.ones((1, hidden_dim), jnp.float32),
            norm2_b=jnp.zeros((1, hidden_dim), jnp.float32),
        ))

    return dict(inp_w=inp_w, inp_b=inp_b,
                pe=positional_encoding(max_seq, hidden_dim),
                layers=layers,
                out_w=out_w, out_b=out_b)


def pack_params(params, num_heads, seq_len):
    """One-time param prep: fold constants, split heads, stack layers, cast to
    bf16 at the MXU inputs."""
    E = params["inp_w"].shape[1]
    H = num_heads
    Dh = E // H
    scale = 1.0 / math.sqrt(Dh)
    bf16 = jnp.bfloat16

    # fold input-projection bias into the positional-encoding slab
    pe_b = params["pe"][:seq_len] + params["inp_b"]          # (S, E)

    wqkv, bqkv, wout, vecs, wff1, bff1, wff2 = [], [], [], [], [], [], []
    for lp in params["layers"]:
        w3 = lp["in_proj_w"].reshape(E, 3, H, Dh).transpose(1, 2, 0, 3)
        b3 = lp["in_proj_b"][0].reshape(3, H, 1, Dh)
        # fold 1/sqrt(Dh) into the Q projection (weights AND bias)
        w3 = w3.at[0].multiply(scale)
        b3 = b3.at[0].multiply(scale)
        wqkv.append(w3)                                   # (3, H, E, Dh)
        bqkv.append(b3)                                   # (3, H, 1, Dh)
        wout.append(lp["out_proj_w"].reshape(H, Dh, E))   # (H, Dh, E)
        vecs.append(jnp.stack([lp["out_proj_b"][0], lp["norm1_g"][0],
                               lp["norm1_b"][0], lp["ff2_b"][0],
                               lp["norm2_g"][0], lp["norm2_b"][0]]))
        wff1.append(lp["ff1_w"])
        bff1.append(lp["ff1_b"])
        wff2.append(lp["ff2_w"])

    return dict(
        pe_b=pe_b,
        inp_w=params["inp_w"].astype(bf16),
        w_qkv=jnp.stack(wqkv).astype(bf16),    # (L, 3, H, E, Dh)
        b_qkv=jnp.stack(bqkv),                 # (L, 3, H, 1, Dh) f32
        w_out=jnp.stack(wout).astype(bf16),    # (L, H, Dh, E)
        vec=jnp.stack(vecs),                   # (L, 6, E) f32
        w_ff1=jnp.stack(wff1).astype(bf16),    # (L, E, 4E)
        b_ff1=jnp.stack(bff1),                 # (L, 1, 4E) f32
        w_ff2=jnp.stack(wff2).astype(bf16),    # (L, 4E, E)
        out_w=params["out_w"],                 # (1, E) f32
        out_b=params["out_b"],                 # (1, 1) f32
    )


# ---------------------------------- main -------------------------------------

if __name__ == "__main__":
    # Small shapes consistent with the module's forward:
    # batch=2, seq=8, input_dim=32, hidden_dim=32, heads=4, layers=2.
    B, S, INPUT_DIM = 2, 8, 32
    HIDDEN_DIM, NUM_HEADS, NUM_LAYERS = 32, 4, 2

    key = jax.random.PRNGKey(0)
    k_x, k_p = jax.random.split(key)
    audio = jax.random.normal(k_x, (B, S, INPUT_DIM), jnp.float32)
    params = init_params(k_p, INPUT_DIM, HIDDEN_DIM, NUM_HEADS, NUM_LAYERS)
    packed = pack_params(params, NUM_HEADS, S)   # one-time host-side prep

    # TODO(synk): dropout layers are eval-mode identity (inference semantics).
    fwd = jax.jit(simple_kws_forward)
    out = jax.block_until_ready(fwd(audio, packed))
    assert out.shape == (B, S, 1), out.shape
    assert bool(jnp.all(jnp.isfinite(out)))
    print("KERNEL_OK")
</pallas_src>

<mosaic_0001>
module attributes {stable_mosaic.version = 11 : i64} {
  func.func @_fused_kws_kernel(%arg0: i32, %arg1: memref<8x32xf32, #tpu.memory_space<vmem>>, %arg2: memref<8x32xf32, #tpu.memory_space<vmem>>, %arg3: memref<32x32xbf16, #tpu.memory_space<vmem>>, %arg4: memref<2x3x4x32x8xbf16, #tpu.memory_space<vmem>>, %arg5: memref<2x3x4x1x8xf32, #tpu.memory_space<vmem>>, %arg6: memref<2x4x8x32xbf16, #tpu.memory_space<vmem>>, %arg7: memref<2x6x32xf32, #tpu.memory_space<vmem>>, %arg8: memref<2x32x128xbf16, #tpu.memory_space<vmem>>, %arg9: memref<2x1x128xf32, #tpu.memory_space<vmem>>, %arg10: memref<2x128x32xbf16, #tpu.memory_space<vmem>>, %arg11: memref<1x32xf32, #tpu.memory_space<vmem>>, %arg12: memref<1x1xf32, #tpu.memory_space<vmem>>, %arg13: memref<1x1x8xf32, #tpu.memory_space<vmem>>) attributes {dimension_semantics = [#tpu.dimension_semantics<parallel>], iteration_bounds = array<i64: 2>, scalar_prefetch = 0 : i64, scratch_operands = 0 : i64, tpu.core_type = #tpu.core_type<tc>, window_params = [{transform_indices = @transform_0, window_bounds = array<i64: 8, 32>}, {pipeline_mode = #tpu.pipeline_mode<synchronous>, transform_indices = @transform_1, window_bounds = array<i64: 8, 32>}, {pipeline_mode = #tpu.pipeline_mode<synchronous>, transform_indices = @transform_2, window_bounds = array<i64: 32, 32>}, {pipeline_mode = #tpu.pipeline_mode<synchronous>, transform_indices = @transform_3, window_bounds = array<i64: 2, 3, 4, 32, 8>}, {pipeline_mode = #tpu.pipeline_mode<synchronous>, transform_indices = @transform_4, window_bounds = array<i64: 2, 3, 4, 1, 8>}, {pipeline_mode = #tpu.pipeline_mode<synchronous>, transform_indices = @transform_5, window_bounds = array<i64: 2, 4, 8, 32>}, {pipeline_mode = #tpu.pipeline_mode<synchronous>, transform_indices = @transform_6, window_bounds = array<i64: 2, 6, 32>}, {pipeline_mode = #tpu.pipeline_mode<synchronous>, transform_indices = @transform_7, window_bounds = array<i64: 2, 32, 128>}, {pipeline_mode = #tpu.pipeline_mode<synchronous>, transform_indices = @transform_8, window_bounds = array<i64: 2, 1, 128>}, {pipeline_mode = #tpu.pipeline_mode<synchronous>, transform_indices = @transform_9, window_bounds = array<i64: 2, 128, 32>}, {pipeline_mode = #tpu.pipeline_mode<synchronous>, transform_indices = @transform_10, window_bounds = array<i64: 1, 32>}, {pipeline_mode = #tpu.pipeline_mode<synchronous>, transform_indices = @transform_11, window_bounds = array<i64: 1, 1>}, {transform_indices = @transform_12, window_bounds = array<i64: 1, 1, 8>}]} {
    %c0 = arith.constant 0 : index
    %c0_0 = arith.constant 0 : index
    %0 = vector.load %arg1[%c0, %c0_0] : memref<8x32xf32, #tpu.memory_space<vmem>>, vector<8x32xf32>
    %1 = arith.truncf %0 : vector<8x32xf32> to vector<8x32xbf16>
    %c0_1 = arith.constant 0 : index
    %c0_2 = arith.constant 0 : index
    %2 = vector.load %arg3[%c0_1, %c0_2] : memref<32x32xbf16, #tpu.memory_space<vmem>>, vector<32x32xbf16>
    %cst = arith.constant dense<0.000000e+00> : vector<8x32xf32>
    %3 = tpu.matmul %1, %2, %cst {dimension_numbers = #tpu.dot_dimension_numbers<[1], [0], [0], [1], [0, 0, 1, 1], [], []>} : vector<8x32xbf16>, vector<32x32xbf16>, vector<8x32xf32> -> vector<8x32xf32>
    %c0_3 = arith.constant 0 : index
    %c0_4 = arith.constant 0 : index
    %4 = vector.load %arg2[%c0_3, %c0_4] : memref<8x32xf32, #tpu.memory_space<vmem>>, vector<8x32xf32>
    %5 = arith.addf %3, %4 : vector<8x32xf32>
    %6 = arith.truncf %5 : vector<8x32xf32> to vector<8x32xbf16>
    %7 = vector.shape_cast %6 : vector<8x32xbf16> to vector<1x8x32xbf16>
    %8 = vector.broadcast %7 : vector<1x8x32xbf16> to vector<4x8x32xbf16>
    %c0_5 = arith.constant 0 : index
    %c0_6 = arith.constant 0 : index
    %c0_7 = arith.constant 0 : index
    %c0_8 = arith.constant 0 : index
    %c0_9 = arith.constant 0 : index
    %9 = vector.load %arg4[%c0_5, %c0_6, %c0_7, %c0_8, %c0_9] : memref<2x3x4x32x8xbf16, #tpu.memory_space<vmem>>, vector<1x1x4x32x8xbf16>
    %10 = vector.shape_cast %9 : vector<1x1x4x32x8xbf16> to vector<4x32x8xbf16>
    "tpu.trace_start"() <{level = 10 : i32, message = "hse,hed->hsd"}> : () -> ()
    %cst_10 = arith.constant dense<0.000000e+00> : vector<4x8x8xf32>
    %11 = tpu.matmul %8, %10, %cst_10 {dimension_numbers = #tpu.dot_dimension_numbers<[2], [1], [1], [2], [0, 0, 0, 1, 1, 2], [0], [0]>} : vector<4x8x32xbf16>, vector<4x32x8xbf16>, vector<4x8x8xf32> -> vector<4x8x8xf32>
    "tpu.trace_stop"() : () -> ()
    %c0_11 = arith.constant 0 : index
    %c0_12 = arith.constant 0 : index
    %c0_13 = arith.constant 0 : index
    %c0_14 = arith.constant 0 : index
    %c0_15 = arith.constant 0 : index
    %12 = vector.load %arg5[%c0_11, %c0_12, %c0_13, %c0_14, %c0_15] : memref<2x3x4x1x8xf32, #tpu.memory_space<vmem>>, vector<1x1x4x1x8xf32>
    %13 = vector.shape_cast %12 : vector<1x1x4x1x8xf32> to vector<4x1x8xf32>
    %14 = vector.broadcast %13 : vector<4x1x8xf32> to vector<4x8x8xf32>
    %15 = arith.addf %11, %14 : vector<4x8x8xf32>
    %c0_16 = arith.constant 0 : index
    %c1 = arith.constant 1 : index
    %c0_17 = arith.constant 0 : index
    %c0_18 = arith.constant 0 : index
    %c0_19 = arith.constant 0 : index
    %16 = vector.load %arg4[%c0_16, %c1, %c0_17, %c0_18, %c0_19] : memref<2x3x4x32x8xbf16, #tpu.memory_space<vmem>>, vector<1x1x4x32x8xbf16>
    %17 = vector.shape_cast %16 : vector<1x1x4x32x8xbf16> to vector<4x32x8xbf16>
    "tpu.trace_start"() <{level = 10 : i32, message = "hse,hed->hsd"}> : () -> ()
    %cst_20 = arith.constant dense<0.000000e+00> : vector<4x8x8xf32>
    %18 = tpu.matmul %8, %17, %cst_20 {dimension_numbers = #tpu.dot_dimension_numbers<[2], [1], [1], [2], [0, 0, 0, 1, 1, 2], [0], [0]>} : vector<4x8x32xbf16>, vector<4x32x8xbf16>, vector<4x8x8xf32> -> vector<4x8x8xf32>
    "tpu.trace_stop"() : () -> ()
    %c0_21 = arith.constant 0 : index
    %c1_22 = arith.constant 1 : index
    %c0_23 = arith.constant 0 : index
    %c0_24 = arith.constant 0 : index
    %c0_25 = arith.constant 0 : index
    %19 = vector.load %arg5[%c0_21, %c1_22, %c0_23, %c0_24, %c0_25] : memref<2x3x4x1x8xf32, #tpu.memory_space<vmem>>, vector<1x1x4x1x8xf32>
    %20 = vector.shape_cast %19 : vector<1x1x4x1x8xf32> to vector<4x1x8xf32>
    %21 = vector.broadcast %20 : vector<4x1x8xf32> to vector<4x8x8xf32>
    %22 = arith.addf %18, %21 : vector<4x8x8xf32>
    %c0_26 = arith.constant 0 : index
    %c2 = arith.constant 2 : index
    %c0_27 = arith.constant 0 : index
    %c0_28 = arith.constant 0 : index
    %c0_29 = arith.constant 0 : index
    %23 = vector.load %arg4[%c0_26, %c2, %c0_27, %c0_28, %c0_29] : memref<2x3x4x32x8xbf16, #tpu.memory_space<vmem>>, vector<1x1x4x32x8xbf16>
    %24 = vector.shape_cast %23 : vector<1x1x4x32x8xbf16> to vector<4x32x8xbf16>
    "tpu.trace_start"() <{level = 10 : i32, message = "hse,hed->hsd"}> : () -> ()
    %cst_30 = arith.constant dense<0.000000e+00> : vector<4x8x8xf32>
    %25 = tpu.matmul %8, %24, %cst_30 {dimension_numbers = #tpu.dot_dimension_numbers<[2], [1], [1], [2], [0, 0, 0, 1, 1, 2], [0], [0]>} : vector<4x8x32xbf16>, vector<4x32x8xbf16>, vector<4x8x8xf32> -> vector<4x8x8xf32>
    "tpu.trace_stop"() : () -> ()
    %c0_31 = arith.constant 0 : index
    %c2_32 = arith.constant 2 : index
    %c0_33 = arith.constant 0 : index
    %c0_34 = arith.constant 0 : index
    %c0_35 = arith.constant 0 : index
    %26 = vector.load %arg5[%c0_31, %c2_32, %c0_33, %c0_34, %c0_35] : memref<2x3x4x1x8xf32, #tpu.memory_space<vmem>>, vector<1x1x4x1x8xf32>
    %27 = vector.shape_cast %26 : vector<1x1x4x1x8xf32> to vector<4x1x8xf32>
    %28 = vector.broadcast %27 : vector<4x1x8xf32> to vector<4x8x8xf32>
    %29 = arith.addf %25, %28 : vector<4x8x8xf32>
    %30 = arith.truncf %15 : vector<4x8x8xf32> to vector<4x8x8xbf16>
    %31 = arith.truncf %22 : vector<4x8x8xf32> to vector<4x8x8xbf16>
    "tpu.trace_start"() <{level = 10 : i32, message = "hqd,hkd->hqk"}> : () -> ()
    %cst_36 = arith.constant dense<0.000000e+00> : vector<4x8x8xf32>
    %32 = tpu.matmul %30, %31, %cst_36 {dimension_numbers = #tpu.dot_dimension_numbers<[2], [2], [1], [1], [0, 0, 0, 1, 1, 1], [0], [0]>} : vector<4x8x8xbf16>, vector<4x8x8xbf16>, vector<4x8x8xf32> -> vector<4x8x8xf32>
    "tpu.trace_stop"() : () -> ()
    %cst_37 = arith.constant dense<0xFF800000> : vector<4x8xf32>
    %33 = vector.multi_reduction <maximumf>, %32, %cst_37 [2] : vector<4x8x8xf32> to vector<4x8xf32>
    %34 = vector.shape_cast %33 : vector<4x8xf32> to vector<4x8x1xf32>
    %35 = vector.broadcast %34 : vector<4x8x1xf32> to vector<4x8x8xf32>
    %36 = arith.subf %32, %35 : vector<4x8x8xf32>
    %37 = math.exp %36 : vector<4x8x8xf32>
    %cst_38 = arith.constant dense<0.000000e+00> : vector<4x8xf32>
    %38 = vector.multi_reduction <add>, %37, %cst_38 [2] : vector<4x8x8xf32> to vector<4x8xf32>
    %39 = vector.shape_cast %38 : vector<4x8xf32> to vector<4x8x1xf32>
    %40 = tpu.reciprocal %39 {approx = true} : vector<4x8x1xf32> -> vector<4x8x1xf32>
    %41 = vector.broadcast %40 : vector<4x8x1xf32> to vector<4x8x8xf32>
    %42 = arith.mulf %37, %41 : vector<4x8x8xf32>
    %43 = arith.truncf %42 : vector<4x8x8xf32> to vector<4x8x8xbf16>
    %44 = arith.truncf %29 : vector<4x8x8xf32> to vector<4x8x8xbf16>
    "tpu.trace_start"() <{level = 10 : i32, message = "hqk,hkd->hqd"}> : () -> ()
    %cst_39 = arith.constant dense<0.000000e+00> : vector<4x8x8xf32>
    %45 = tpu.matmul %43, %44, %cst_39 {dimension_numbers = #tpu.dot_dimension_numbers<[2], [1], [1], [2], [0, 0, 0, 1, 1, 2], [0], [0]>} : vector<4x8x8xbf16>, vector<4x8x8xbf16>, vector<4x8x8xf32> -> vector<4x8x8xf32>
    "tpu.trace_stop"() : () -> ()
    %46 = arith.truncf %45 : vector<4x8x8xf32> to vector<4x8x8xbf16>
    %c0_40 = arith.constant 0 : index
    %c0_41 = arith.constant 0 : index
    %c0_42 = arith.constant 0 : index
    %c0_43 = arith.constant 0 : index
    %47 = vector.load %arg6[%c0_40, %c0_41, %c0_42, %c0_43] : memref<2x4x8x32xbf16, #tpu.memory_space<vmem>>, vector<1x4x8x32xbf16>
    %48 = vector.shape_cast %47 : vector<1x4x8x32xbf16> to vector<4x8x32xbf16>
    "tpu.trace_start"() <{level = 10 : i32, message = "hsd,hde->hse"}> : () -> ()
    %cst_44 = arith.constant dense<0.000000e+00> : vector<4x8x32xf32>
    %49 = tpu.matmul %46, %48, %cst_44 {dimension_numbers = #tpu.dot_dimension_numbers<[2], [1], [1], [2], [0, 0, 0, 1, 1, 2], [0], [0]>} : vector<4x8x8xbf16>, vector<4x8x32xbf16>, vector<4x8x32xf32> -> vector<4x8x32xf32>
    "tpu.trace_stop"() : () -> ()
    %cst_45 = arith.constant dense<0.000000e+00> : vector<8x32xf32>
    %50 = vector.multi_reduction <add>, %49, %cst_45 [0] : vector<4x8x32xf32> to vector<8x32xf32>
    %c0_46 = arith.constant 0 : index
    %c0_47 = arith.constant 0 : index
    %c0_48 = arith.constant 0 : index
    %51 = vector.load %arg7[%c0_46, %c0_47, %c0_48] : memref<2x6x32xf32, #tpu.memory_space<vmem>>, vector<1x1x32xf32>
    %52 = vector.shape_cast %51 : vector<1x1x32xf32> to vector<32xf32>
    %53 = vector.shape_cast %52 : vector<32xf32> to vector<1x32xf32>
    %54 = vector.broadcast %53 : vector<1x32xf32> to vector<8x32xf32>
    %55 = arith.addf %50, %54 : vector<8x32xf32>
    %56 = arith.addf %5, %55 : vector<8x32xf32>
    %c0_49 = arith.constant 0 : index
    %c1_50 = arith.constant 1 : index
    %c0_51 = arith.constant 0 : index
    %57 = vector.load %arg7[%c0_49, %c1_50, %c0_51] : memref<2x6x32xf32, #tpu.memory_space<vmem>>, vector<1x1x32xf32>
    %58 = vector.shape_cast %57 : vector<1x1x32xf32> to vector<32xf32>
    %c0_52 = arith.constant 0 : index
    %c2_53 = arith.constant 2 : index
    %c0_54 = arith.constant 0 : index
    %59 = vector.load %arg7[%c0_52, %c2_53, %c0_54] : memref<2x6x32xf32, #tpu.memory_space<vmem>>, vector<1x1x32xf32>
    %60 = vector.shape_cast %59 : vector<1x1x32xf32> to vector<32xf32>
    %cst_55 = arith.constant dense<0.000000e+00> : vector<8xf32>
    %61 = vector.multi_reduction <add>, %56, %cst_55 [1] : vector<8x32xf32> to vector<8xf32>
    %62 = vector.shape_cast %61 : vector<8xf32> to vector<8x1xf32>
    %cst_56 = arith.constant 3.200000e+01 : f32
    %63 = vector.broadcast %cst_56 : f32 to vector<8x1xf32>
    %64 = arith.divf %62, %63 : vector<8x1xf32>
    %65 = vector.broadcast %64 : vector<8x1xf32> to vector<8x32xf32>
    %66 = arith.subf %56, %65 : vector<8x32xf32>
    %67 = arith.mulf %66, %66 : vector<8x32xf32>
    %cst_57 = arith.constant dense<0.000000e+00> : vector<8xf32>
    %68 = vector.multi_reduction <add>, %67, %cst_57 [1] : vector<8x32xf32> to vector<8xf32>
    %69 = vector.shape_cast %68 : vector<8xf32> to vector<8x1xf32>
    %cst_58 = arith.constant 3.200000e+01 : f32
    %70 = vector.broadcast %cst_58 : f32 to vector<8x1xf32>
    %71 = arith.divf %69, %70 : vector<8x1xf32>
    %cst_59 = arith.constant 9.99999974E-6 : f32
    %72 = vector.broadcast %cst_59 : f32 to vector<8x1xf32>
    %73 = arith.addf %71, %72 : vector<8x1xf32>
    %74 = math.rsqrt %73 : vector<8x1xf32>
    %75 = vector.broadcast %74 : vector<8x1xf32> to vector<8x32xf32>
    %76 = arith.mulf %66, %75 : vector<8x32xf32>
    %77 = vector.shape_cast %58 : vector<32xf32> to vector<1x32xf32>
    %78 = vector.broadcast %77 : vector<1x32xf32> to vector<8x32xf32>
    %79 = arith.mulf %76, %78 : vector<8x32xf32>
    %80 = vector.shape_cast %60 : vector<32xf32> to vector<1x32xf32>
    %81 = vector.broadcast %80 : vector<1x32xf32> to vector<8x32xf32>
    %82 = arith.addf %79, %81 : vector<8x32xf32>
    %83 = arith.truncf %82 : vector<8x32xf32> to vector<8x32xbf16>
    %c0_60 = arith.constant 0 : index
    %c0_61 = arith.constant 0 : index
    %c0_62 = arith.constant 0 : index
    %84 = vector.load %arg8[%c0_60, %c0_61, %c0_62] : memref<2x32x128xbf16, #tpu.memory_space<vmem>>, vector<1x32x128xbf16>
    %85 = vector.shape_cast %84 : vector<1x32x128xbf16> to vector<32x128xbf16>
    %cst_63 = arith.constant dense<0.000000e+00> : vector<8x128xf32>
    %86 = tpu.matmul %83, %85, %cst_63 {dimension_numbers = #tpu.dot_dimension_numbers<[1], [0], [0], [1], [0, 0, 1, 1], [], []>} : vector<8x32xbf16>, vector<32x128xbf16>, vector<8x128xf32> -> vector<8x128xf32>
    %c0_64 = arith.constant 0 : index
    %c0_65 = arith.constant 0 : index
    %c0_66 = arith.constant 0 : index
    %87 = vector.load %arg9[%c0_64, %c0_65, %c0_66] : memref<2x1x128xf32, #tpu.memory_space<vmem>>, vector<1x1x128xf32>
    %88 = vector.shape_cast %87 : vector<1x1x128xf32> to vector<1x128xf32>
    %89 = vector.broadcast %88 : vector<1x128xf32> to vector<8x128xf32>
    %90 = arith.addf %86, %89 : vector<8x128xf32>
    %cst_67 = arith.constant 0.000000e+00 : f32
    %91 = vector.broadcast %cst_67 : f32 to vector<8x128xf32>
    %92 = arith.maximumf %90, %91 : vector<8x128xf32>
    %93 = arith.truncf %92 : vector<8x128xf32> to vector<8x128xbf16>
    %c0_68 = arith.constant 0 : index
    %c0_69 = arith.constant 0 : index
    %c0_70 = arith.constant 0 : index
    %94 = vector.load %arg10[%c0_68, %c0_69, %c0_70] : memref<2x128x32xbf16, #tpu.memory_space<vmem>>, vector<1x128x32xbf16>
    %95 = vector.shape_cast %94 : vector<1x128x32xbf16> to vector<128x32xbf16>
    %cst_71 = arith.constant dense<0.000000e+00> : vector<8x32xf32>
    %96 = tpu.matmul %93, %95, %cst_71 {dimension_numbers = #tpu.dot_dimension_numbers<[1], [0], [0], [1], [0, 0, 1, 1], [], []>} : vector<8x128xbf16>, vector<128x32xbf16>, vector<8x32xf32> -> vector<8x32xf32>
    %c0_72 = arith.constant 0 : index
    %c3 = arith.constant 3 : index
    %c0_73 = arith.constant 0 : index
    %97 = vector.load %arg7[%c0_72, %c3, %c0_73] : memref<2x6x32xf32, #tpu.memory_space<vmem>>, vector<1x1x32xf32>
    %98 = vector.shape_cast %97 : vector<1x1x32xf32> to vector<32xf32>
    %99 = vector.shape_cast %98 : vector<32xf32> to vector<1x32xf32>
    %100 = vector.broadcast %99 : vector<1x32xf32> to vector<8x32xf32>
    %101 = arith.addf %96, %100 : vector<8x32xf32>
    %102 = arith.addf %82, %101 : vector<8x32xf32>
    %c0_74 = arith.constant 0 : index
    %c4 = arith.constant 4 : index
    %c0_75 = arith.constant 0 : index
    %103 = vector.load %arg7[%c0_74, %c4, %c0_75] : memref<2x6x32xf32, #tpu.memory_space<vmem>>, vector<1x1x32xf32>
    %104 = vector.shape_cast %103 : vector<1x1x32xf32> to vector<32xf32>
    %c0_76 = arith.constant 0 : index
    %c5 = arith.constant 5 : index
    %c0_77 = arith.constant 0 : index
    %105 = vector.load %arg7[%c0_76, %c5, %c0_77] : memref<2x6x32xf32, #tpu.memory_space<vmem>>, vector<1x1x32xf32>
    %106 = vector.shape_cast %105 : vector<1x1x32xf32> to vector<32xf32>
    %cst_78 = arith.constant dense<0.000000e+00> : vector<8xf32>
    %107 = vector.multi_reduction <add>, %102, %cst_78 [1] : vector<8x32xf32> to vector<8xf32>
    %108 = vector.shape_cast %107 : vector<8xf32> to vector<8x1xf32>
    %cst_79 = arith.constant 3.200000e+01 : f32
    %109 = vector.broadcast %cst_79 : f32 to vector<8x1xf32>
    %110 = arith.divf %108, %109 : vector<8x1xf32>
    %111 = vector.broadcast %110 : vector<8x1xf32> to vector<8x32xf32>
    %112 = arith.subf %102, %111 : vector<8x32xf32>
    %113 = arith.mulf %112, %112 : vector<8x32xf32>
    %cst_80 = arith.constant dense<0.000000e+00> : vector<8xf32>
    %114 = vector.multi_reduction <add>, %113, %cst_80 [1] : vector<8x32xf32> to vector<8xf32>
    %115 = vector.shape_cast %114 : vector<8xf32> to vector<8x1xf32>
    %cst_81 = arith.constant 3.200000e+01 : f32
    %116 = vector.broadcast %cst_81 : f32 to vector<8x1xf32>
    %117 = arith.divf %115, %116 : vector<8x1xf32>
    %cst_82 = arith.constant 9.99999974E-6 : f32
    %118 = vector.broadcast %cst_82 : f32 to vector<8x1xf32>
    %119 = arith.addf %117, %118 : vector<8x1xf32>
    %120 = math.rsqrt %119 : vector<8x1xf32>
    %121 = vector.broadcast %120 : vector<8x1xf32> to vector<8x32xf32>
    %122 = arith.mulf %112, %121 : vector<8x32xf32>
    %123 = vector.shape_cast %104 : vector<32xf32> to vector<1x32xf32>
    %124 = vector.broadcast %123 : vector<1x32xf32> to vector<8x32xf32>
    %125 = arith.mulf %122, %124 : vector<8x32xf32>
    %126 = vector.shape_cast %106 : vector<32xf32> to vector<1x32xf32>
    %127 = vector.broadcast %126 : vector<1x32xf32> to vector<8x32xf32>
    %128 = arith.addf %125, %127 : vector<8x32xf32>
    %129 = arith.truncf %128 : vector<8x32xf32> to vector<8x32xbf16>
    %130 = vector.shape_cast %129 : vector<8x32xbf16> to vector<1x8x32xbf16>
    %131 = vector.broadcast %130 : vector<1x8x32xbf16> to vector<4x8x32xbf16>
    %c1_83 = arith.constant 1 : index
    %c0_84 = arith.constant 0 : index
    %c0_85 = arith.constant 0 : index
    %c0_86 = arith.constant 0 : index
    %c0_87 = arith.constant 0 : index
    %132 = vector.load %arg4[%c1_83, %c0_84, %c0_85, %c0_86, %c0_87] : memref<2x3x4x32x8xbf16, #tpu.memory_space<vmem>>, vector<1x1x4x32x8xbf16>
    %133 = vector.shape_cast %132 : vector<1x1x4x32x8xbf16> to vector<4x32x8xbf16>
    "tpu.trace_start"() <{level = 10 : i32, message = "hse,hed->hsd"}> : () -> ()
    %cst_88 = arith.constant dense<0.000000e+00> : vector<4x8x8xf32>
    %134 = tpu.matmul %131, %133, %cst_88 {dimension_numbers = #tpu.dot_dimension_numbers<[2], [1], [1], [2], [0, 0, 0, 1, 1, 2], [0], [0]>} : vector<4x8x32xbf16>, vector<4x32x8xbf16>, vector<4x8x8xf32> -> vector<4x8x8xf32>
    "tpu.trace_stop"() : () -> ()
    %c1_89 = arith.constant 1 : index
    %c0_90 = arith.constant 0 : index
    %c0_91 = arith.constant 0 : index
    %c0_92 = arith.constant 0 : index
    %c0_93 = arith.constant 0 : index
    %135 = vector.load %arg5[%c1_89, %c0_90, %c0_91, %c0_92, %c0_93] : memref<2x3x4x1x8xf32, #tpu.memory_space<vmem>>, vector<1x1x4x1x8xf32>
    %136 = vector.shape_cast %135 : vector<1x1x4x1x8xf32> to vector<4x1x8xf32>
    %137 = vector.broadcast %136 : vector<4x1x8xf32> to vector<4x8x8xf32>
    %138 = arith.addf %134, %137 : vector<4x8x8xf32>
    %c1_94 = arith.constant 1 : index
    %c1_95 = arith.constant 1 : index
    %c0_96 = arith.constant 0 : index
    %c0_97 = arith.constant 0 : index
    %c0_98 = arith.constant 0 : index
    %139 = vector.load %arg4[%c1_94, %c1_95, %c0_96, %c0_97, %c0_98] : memref<2x3x4x32x8xbf16, #tpu.memory_space<vmem>>, vector<1x1x4x32x8xbf16>
    %140 = vector.shape_cast %139 : vector<1x1x4x32x8xbf16> to vector<4x32x8xbf16>
    "tpu.trace_start"() <{level = 10 : i32, message = "hse,hed->hsd"}> : () -> ()
    %cst_99 = arith.constant dense<0.000000e+00> : vector<4x8x8xf32>
    %141 = tpu.matmul %131, %140, %cst_99 {dimension_numbers = #tpu.dot_dimension_numbers<[2], [1], [1], [2], [0, 0, 0, 1, 1, 2], [0], [0]>} : vector<4x8x32xbf16>, vector<4x32x8xbf16>, vector<4x8x8xf32> -> vector<4x8x8xf32>
    "tpu.trace_stop"() : () -> ()
    %c1_100 = arith.constant 1 : index
    %c1_101 = arith.constant 1 : index
    %c0_102 = arith.constant 0 : index
    %c0_103 = arith.constant 0 : index
    %c0_104 = arith.constant 0 : index
    %142 = vector.load %arg5[%c1_100, %c1_101, %c0_102, %c0_103, %c0_104] : memref<2x3x4x1x8xf32, #tpu.memory_space<vmem>>, vector<1x1x4x1x8xf32>
    %143 = vector.shape_cast %142 : vector<1x1x4x1x8xf32> to vector<4x1x8xf32>
    %144 = vector.broadcast %143 : vector<4x1x8xf32> to vector<4x8x8xf32>
    %145 = arith.addf %141, %144 : vector<4x8x8xf32>
    %c1_105 = arith.constant 1 : index
    %c2_106 = arith.constant 2 : index
    %c0_107 = arith.constant 0 : index
    %c0_108 = arith.constant 0 : index
    %c0_109 = arith.constant 0 : index
    %146 = vector.load %arg4[%c1_105, %c2_106, %c0_107, %c0_108, %c0_109] : memref<2x3x4x32x8xbf16, #tpu.memory_space<vmem>>, vector<1x1x4x32x8xbf16>
    %147 = vector.shape_cast %146 : vector<1x1x4x32x8xbf16> to vector<4x32x8xbf16>
    "tpu.trace_start"() <{level = 10 : i32, message = "hse,hed->hsd"}> : () -> ()
    %cst_110 = arith.constant dense<0.000000e+00> : vector<4x8x8xf32>
    %148 = tpu.matmul %131, %147, %cst_110 {dimension_numbers = #tpu.dot_dimension_numbers<[2], [1], [1], [2], [0, 0, 0, 1, 1, 2], [0], [0]>} : vector<4x8x32xbf16>, vector<4x32x8xbf16>, vector<4x8x8xf32> -> vector<4x8x8xf32>
    "tpu.trace_stop"() : () -> ()
    %c1_111 = arith.constant 1 : index
    %c2_112 = arith.constant 2 : index
    %c0_113 = arith.constant 0 : index
    %c0_114 = arith.constant 0 : index
    %c0_115 = arith.constant 0 : index
    %149 = vector.load %arg5[%c1_111, %c2_112, %c0_113, %c0_114, %c0_115] : memref<2x3x4x1x8xf32, #tpu.memory_space<vmem>>, vector<1x1x4x1x8xf32>
    %150 = vector.shape_cast %149 : vector<1x1x4x1x8xf32> to vector<4x1x8xf32>
    %151 = vector.broadcast %150 : vector<4x1x8xf32> to vector<4x8x8xf32>
    %152 = arith.addf %148, %151 : vector<4x8x8xf32>
    %153 = arith.truncf %138 : vector<4x8x8xf32> to vector<4x8x8xbf16>
    %154 = arith.truncf %145 : vector<4x8x8xf32> to vector<4x8x8xbf16>
    "tpu.trace_start"() <{level = 10 : i32, message = "hqd,hkd->hqk"}> : () -> ()
    %cst_116 = arith.constant dense<0.000000e+00> : vector<4x8x8xf32>
    %155 = tpu.matmul %153, %154, %cst_116 {dimension_numbers = #tpu.dot_dimension_numbers<[2], [2], [1], [1], [0, 0, 0, 1, 1, 1], [0], [0]>} : vector<4x8x8xbf16>, vector<4x8x8xbf16>, vector<4x8x8xf32> -> vector<4x8x8xf32>
    "tpu.trace_stop"() : () -> ()
    %cst_117 = arith.constant dense<0xFF800000> : vector<4x8xf32>
    %156 = vector.multi_reduction <maximumf>, %155, %cst_117 [2] : vector<4x8x8xf32> to vector<4x8xf32>
    %157 = vector.shape_cast %156 : vector<4x8xf32> to vector<4x8x1xf32>
    %158 = vector.broadcast %157 : vector<4x8x1xf32> to vector<4x8x8xf32>
    %159 = arith.subf %155, %158 : vector<4x8x8xf32>
    %160 = math.exp %159 : vector<4x8x8xf32>
    %cst_118 = arith.constant dense<0.000000e+00> : vector<4x8xf32>
    %161 = vector.multi_reduction <add>, %160, %cst_118 [2] : vector<4x8x8xf32> to vector<4x8xf32>
    %162 = vector.shape_cast %161 : vector<4x8xf32> to vector<4x8x1xf32>
    %163 = tpu.reciprocal %162 {approx = true} : vector<4x8x1xf32> -> vector<4x8x1xf32>
    %164 = vector.broadcast %163 : vector<4x8x1xf32> to vector<4x8x8xf32>
    %165 = arith.mulf %160, %164 : vector<4x8x8xf32>
    %166 = arith.truncf %165 : vector<4x8x8xf32> to vector<4x8x8xbf16>
    %167 = arith.truncf %152 : vector<4x8x8xf32> to vector<4x8x8xbf16>
    "tpu.trace_start"() <{level = 10 : i32, message = "hqk,hkd->hqd"}> : () -> ()
    %cst_119 = arith.constant dense<0.000000e+00> : vector<4x8x8xf32>
    %168 = tpu.matmul %166, %167, %cst_119 {dimension_numbers = #tpu.dot_dimension_numbers<[2], [1], [1], [2], [0, 0, 0, 1, 1, 2], [0], [0]>} : vector<4x8x8xbf16>, vector<4x8x8xbf16>, vector<4x8x8xf32> -> vector<4x8x8xf32>
    "tpu.trace_stop"() : () -> ()
    %169 = arith.truncf %168 : vector<4x8x8xf32> to vector<4x8x8xbf16>
    %c1_120 = arith.constant 1 : index
    %c0_121 = arith.constant 0 : index
    %c0_122 = arith.constant 0 : index
    %c0_123 = arith.constant 0 : index
    %170 = vector.load %arg6[%c1_120, %c0_121, %c0_122, %c0_123] : memref<2x4x8x32xbf16, #tpu.memory_space<vmem>>, vector<1x4x8x32xbf16>
    %171 = vector.shape_cast %170 : vector<1x4x8x32xbf16> to vector<4x8x32xbf16>
    "tpu.trace_start"() <{level = 10 : i32, message = "hsd,hde->hse"}> : () -> ()
    %cst_124 = arith.constant dense<0.000000e+00> : vector<4x8x32xf32>
    %172 = tpu.matmul %169, %171, %cst_124 {dimension_numbers = #tpu.dot_dimension_numbers<[2], [1], [1], [2], [0, 0, 0, 1, 1, 2], [0], [0]>} : vector<4x8x8xbf16>, vector<4x8x32xbf16>, vector<4x8x32xf32> -> vector<4x8x32xf32>
    "tpu.trace_stop"() : () -> ()
    %cst_125 = arith.constant dense<0.000000e+00> : vector<8x32xf32>
    %173 = vector.multi_reduction <add>, %172, %cst_125 [0] : vector<4x8x32xf32> to vector<8x32xf32>
    %c1_126 = arith.constant 1 : index
    %c0_127 = arith.constant 0 : index
    %c0_128 = arith.constant 0 : index
    %174 = vector.load %arg7[%c1_126, %c0_127, %c0_128] : memref<2x6x32xf32, #tpu.memory_space<vmem>>, vector<1x1x32xf32>
    %175 = vector.shape_cast %174 : vector<1x1x32xf32> to vector<32xf32>
    %176 = vector.shape_cast %175 : vector<32xf32> to vector<1x32xf32>
    %177 = vector.broadcast %176 : vector<1x32xf32> to vector<8x32xf32>
    %178 = arith.addf %173, %177 : vector<8x32xf32>
    %179 = arith.addf %128, %178 : vector<8x32xf32>
    %c1_129 = arith.constant 1 : index
    %c1_130 = arith.constant 1 : index
    %c0_131 = arith.constant 0 : index
    %180 = vector.load %arg7[%c1_129, %c1_130, %c0_131] : memref<2x6x32xf32, #tpu.memory_space<vmem>>, vector<1x1x32xf32>
    %181 = vector.shape_cast %180 : vector<1x1x32xf32> to vector<32xf32>
    %c1_132 = arith.constant 1 : index
    %c2_133 = arith.constant 2 : index
    %c0_134 = arith.constant 0 : index
    %182 = vector.load %arg7[%c1_132, %c2_133, %c0_134] : memref<2x6x32xf32, #tpu.memory_space<vmem>>, vector<1x1x32xf32>
    %183 = vector.shape_cast %182 : vector<1x1x32xf32> to vector<32xf32>
    %cst_135 = arith.constant dense<0.000000e+00> : vector<8xf32>
    %184 = vector.multi_reduction <add>, %179, %cst_135 [1] : vector<8x32xf32> to vector<8xf32>
    %185 = vector.shape_cast %184 : vector<8xf32> to vector<8x1xf32>
    %cst_136 = arith.constant 3.200000e+01 : f32
    %186 = vector.broadcast %cst_136 : f32 to vector<8x1xf32>
    %187 = arith.divf %185, %186 : vector<8x1xf32>
    %188 = vector.broadcast %187 : vector<8x1xf32> to vector<8x32xf32>
    %189 = arith.subf %179, %188 : vector<8x32xf32>
    %190 = arith.mulf %189, %189 : vector<8x32xf32>
    %cst_137 = arith.constant dense<0.000000e+00> : vector<8xf32>
    %191 = vector.multi_reduction <add>, %190, %cst_137 [1] : vector<8x32xf32> to vector<8xf32>
    %192 = vector.shape_cast %191 : vector<8xf32> to vector<8x1xf32>
    %cst_138 = arith.constant 3.200000e+01 : f32
    %193 = vector.broadcast %cst_138 : f32 to vector<8x1xf32>
    %194 = arith.divf %192, %193 : vector<8x1xf32>
    %cst_139 = arith.constant 9.99999974E-6 : f32
    %195 = vector.broadcast %cst_139 : f32 to vector<8x1xf32>
    %196 = arith.addf %194, %195 : vector<8x1xf32>
    %197 = math.rsqrt %196 : vector<8x1xf32>
    %198 = vector.broadcast %197 : vector<8x1xf32> to vector<8x32xf32>
    %199 = arith.mulf %189, %198 : vector<8x32xf32>
    %200 = vector.shape_cast %181 : vector<32xf32> to vector<1x32xf32>
    %201 = vector.broadcast %200 : vector<1x32xf32> to vector<8x32xf32>
    %202 = arith.mulf %199, %201 : vector<8x32xf32>
    %203 = vector.shape_cast %183 : vector<32xf32> to vector<1x32xf32>
    %204 = vector.broadcast %203 : vector<1x32xf32> to vector<8x32xf32>
    %205 = arith.addf %202, %204 : vector<8x32xf32>
    %206 = arith.truncf %205 : vector<8x32xf32> to vector<8x32xbf16>
    %c1_140 = arith.constant 1 : index
    %c0_141 = arith.constant 0 : index
    %c0_142 = arith.constant 0 : index
    %207 = vector.load %arg8[%c1_140, %c0_141, %c0_142] : memref<2x32x128xbf16, #tpu.memory_space<vmem>>, vector<1x32x128xbf16>
    %208 = vector.shape_cast %207 : vector<1x32x128xbf16> to vector<32x128xbf16>
    %cst_143 = arith.constant dense<0.000000e+00> : vector<8x128xf32>
    %209 = tpu.matmul %206, %208, %cst_143 {dimension_numbers = #tpu.dot_dimension_numbers<[1], [0], [0], [1], [0, 0, 1, 1], [], []>} : vector<8x32xbf16>, vector<32x128xbf16>, vector<8x128xf32> -> vector<8x128xf32>
    %c1_144 = arith.constant 1 : index
    %c0_145 = arith.constant 0 : index
    %c0_146 = arith.constant 0 : index
    %210 = vector.load %arg9[%c1_144, %c0_145, %c0_146] : memref<2x1x128xf32, #tpu.memory_space<vmem>>, vector<1x1x128xf32>
    %211 = vector.shape_cast %210 : vector<1x1x128xf32> to vector<1x128xf32>
    %212 = vector.broadcast %211 : vector<1x128xf32> to vector<8x128xf32>
    %213 = arith.addf %209, %212 : vector<8x128xf32>
    %cst_147 = arith.constant 0.000000e+00 : f32
    %214 = vector.broadcast %cst_147 : f32 to vector<8x128xf32>
    %215 = arith.maximumf %213, %214 : vector<8x128xf32>
    %216 = arith.truncf %215 : vector<8x128xf32> to vector<8x128xbf16>
    %c1_148 = arith.constant 1 : index
    %c0_149 = arith.constant 0 : index
    %c0_150 = arith.constant 0 : index
    %217 = vector.load %arg10[%c1_148, %c0_149, %c0_150] : memref<2x128x32xbf16, #tpu.memory_space<vmem>>, vector<1x128x32xbf16>
    %218 = vector.shape_cast %217 : vector<1x128x32xbf16> to vector<128x32xbf16>
    %cst_151 = arith.constant dense<0.000000e+00> : vector<8x32xf32>
    %219 = tpu.matmul %216, %218, %cst_151 {dimension_numbers = #tpu.dot_dimension_numbers<[1], [0], [0], [1], [0, 0, 1, 1], [], []>} : vector<8x128xbf16>, vector<128x32xbf16>, vector<8x32xf32> -> vector<8x32xf32>
    %c1_152 = arith.constant 1 : index
    %c3_153 = arith.constant 3 : index
    %c0_154 = arith.constant 0 : index
    %220 = vector.load %arg7[%c1_152, %c3_153, %c0_154] : memref<2x6x32xf32, #tpu.memory_space<vmem>>, vector<1x1x32xf32>
    %221 = vector.shape_cast %220 : vector<1x1x32xf32> to vector<32xf32>
    %222 = vector.shape_cast %221 : vector<32xf32> to vector<1x32xf32>
    %223 = vector.broadcast %222 : vector<1x32xf32> to vector<8x32xf32>
    %224 = arith.addf %219, %223 : vector<8x32xf32>
    %225 = arith.addf %205, %224 : vector<8x32xf32>
    %c1_155 = arith.constant 1 : index
    %c4_156 = arith.constant 4 : index
    %c0_157 = arith.constant 0 : index
    %226 = vector.load %arg7[%c1_155, %c4_156, %c0_157] : memref<2x6x32xf32, #tpu.memory_space<vmem>>, vector<1x1x32xf32>
    %227 = vector.shape_cast %226 : vector<1x1x32xf32> to vector<32xf32>
    %c1_158 = arith.constant 1 : index
    %c5_159 = arith.constant 5 : index
    %c0_160 = arith.constant 0 : index
    %228 = vector.load %arg7[%c1_158, %c5_159, %c0_160] : memref<2x6x32xf32, #tpu.memory_space<vmem>>, vector<1x1x32xf32>
    %229 = vector.shape_cast %228 : vector<1x1x32xf32> to vector<32xf32>
    %cst_161 = arith.constant dense<0.000000e+00> : vector<8xf32>
    %230 = vector.multi_reduction <add>, %225, %cst_161 [1] : vector<8x32xf32> to vector<8xf32>
    %231 = vector.shape_cast %230 : vector<8xf32> to vector<8x1xf32>
    %cst_162 = arith.constant 3.200000e+01 : f32
    %232 = vector.broadcast %cst_162 : f32 to vector<8x1xf32>
    %233 = arith.divf %231, %232 : vector<8x1xf32>
    %234 = vector.broadcast %233 : vector<8x1xf32> to vector<8x32xf32>
    %235 = arith.subf %225, %234 : vector<8x32xf32>
    %236 = arith.mulf %235, %235 : vector<8x32xf32>
    %cst_163 = arith.constant dense<0.000000e+00> : vector<8xf32>
    %237 = vector.multi_reduction <add>, %236, %cst_163 [1] : vector<8x32xf32> to vector<8xf32>
    %238 = vector.shape_cast %237 : vector<8xf32> to vector<8x1xf32>
    %cst_164 = arith.constant 3.200000e+01 : f32
    %239 = vector.broadcast %cst_164 : f32 to vector<8x1xf32>
    %240 = arith.divf %238, %239 : vector<8x1xf32>
    %cst_165 = arith.constant 9.99999974E-6 : f32
    %241 = vector.broadcast %cst_165 : f32 to vector<8x1xf32>
    %242 = arith.addf %240, %241 : vector<8x1xf32>
    %243 = math.rsqrt %242 : vector<8x1xf32>
    %244 = vector.broadcast %243 : vector<8x1xf32> to vector<8x32xf32>
    %245 = arith.mulf %235, %244 : vector<8x32xf32>
    %246 = vector.shape_cast %227 : vector<32xf32> to vector<1x32xf32>
    %247 = vector.broadcast %246 : vector<1x32xf32> to vector<8x32xf32>
    %248 = arith.mulf %245, %247 : vector<8x32xf32>
    %249 = vector.shape_cast %229 : vector<32xf32> to vector<1x32xf32>
    %250 = vector.broadcast %249 : vector<1x32xf32> to vector<8x32xf32>
    %251 = arith.addf %248, %250 : vector<8x32xf32>
    %c0_166 = arith.constant 0 : index
    %c0_167 = arith.constant 0 : index
    %252 = vector.load %arg11[%c0_166, %c0_167] : memref<1x32xf32, #tpu.memory_space<vmem>>, vector<1x32xf32>
    %cst_168 = arith.constant dense<0.000000e+00> : vector<1x8xf32>
    %253 = tpu.matmul %252, %251, %cst_168 {dimension_numbers = #tpu.dot_dimension_numbers<[1], [1], [0], [0], [0, 0, 1, 0], [], []>} : vector<1x32xf32>, vector<8x32xf32>, vector<1x8xf32> -> vector<1x8xf32>
    %c0_169 = arith.constant 0 : index
    %c0_170 = arith.constant 0 : index
    %254 = vector.load %arg12[%c0_169, %c0_170] : memref<1x1xf32, #tpu.memory_space<vmem>>, vector<1x1xf32>
    %255 = vector.broadcast %254 : vector<1x1xf32> to vector<1x8xf32>
    %256 = arith.addf %253, %255 : vector<1x8xf32>
    %257 = vector.shape_cast %256 : vector<1x8xf32> to vector<1x1x8xf32>
    %c0_171 = arith.constant 0 : index
    %c0_172 = arith.constant 0 : index
    %c0_173 = arith.constant 0 : index
    %258 = vector.load %arg13[%c0_171, %c0_172, %c0_173] : memref<1x1x8xf32, #tpu.memory_space<vmem>>, vector<1x1x8xf32>
    tpu.vector_store %arg13[%c0_171, %c0_172, %c0_173], %257 {strides = array<i32>} : memref<1x1x8xf32, #tpu.memory_space<vmem>>, vector<1x1x8xf32>,
    return
  }
  func.func @transform_0(%arg0: i32) -> (i32, i32) {
    %c0_i32 = arith.constant 0 : i32
    %c0_i32_0 = arith.constant 0 : i32
    return %arg0, %c0_i32 : i32, i32
  }
  func.func @transform_1(%arg0: i32) -> (i32, i32) {
    %c0_i32 = arith.constant 0 : i32
    %c0_i32_0 = arith.constant 0 : i32
    %c0_i32_1 = arith.constant 0 : i32
    return %c0_i32, %c0_i32_0 : i32, i32
  }
  func.func @transform_2(%arg0: i32) -> (i32, i32) {
    %c0_i32 = arith.constant 0 : i32
    %c0_i32_0 = arith.constant 0 : i32
    %c0_i32_1 = arith.constant 0 : i32
    return %c0_i32, %c0_i32_0 : i32, i32
  }
  func.func @transform_3(%arg0: i32) -> (i32, i32, i32, i32, i32) {
    %c0_i32 = arith.constant 0 : i32
    %c0_i32_0 = arith.constant 0 : i32
    %c0_i32_1 = arith.constant 0 : i32
    %c0_i32_2 = arith.constant 0 : i32
    %c0_i32_3 = arith.constant 0 : i32
    %c0_i32_4 = arith.constant 0 : i32
    return %c0_i32, %c0_i32_0, %c0_i32_1, %c0_i32_2, %c0_i32_3 : i32, i32, i32, i32, i32
  }
  func.func @transform_4(%arg0: i32) -> (i32, i32, i32, i32, i32) {
    %c0_i32 = arith.constant 0 : i32
    %c0_i32_0 = arith.constant 0 : i32
    %c0_i32_1 = arith.constant 0 : i32
    %c0_i32_2 = arith.constant 0 : i32
    %c0_i32_3 = arith.constant 0 : i32
    %c0_i32_4 = arith.constant 0 : i32
    return %c0_i32, %c0_i32_0, %c0_i32_1, %c0_i32_2, %c0_i32_3 : i32, i32, i32, i32, i32
  }
  func.func @transform_5(%arg0: i32) -> (i32, i32, i32, i32) {
    %c0_i32 = arith.constant 0 : i32
    %c0_i32_0 = arith.constant 0 : i32
    %c0_i32_1 = arith.constant 0 : i32
    %c0_i32_2 = arith.constant 0 : i32
    %c0_i32_3 = arith.constant 0 : i32
    return %c0_i32, %c0_i32_0, %c0_i32_1, %c0_i32_2 : i32, i32, i32, i32
  }
  func.func @transform_6(%arg0: i32) -> (i32, i32, i32) {
    %c0_i32 = arith.constant 0 : i32
    %c0_i32_0 = arith.constant 0 : i32
    %c0_i32_1 = arith.constant 0 : i32
    %c0_i32_2 = arith.constant 0 : i32
    return %c0_i32, %c0_i32_0, %c0_i32_1 : i32, i32, i32
  }
  func.func @transform_7(%arg0: i32) -> (i32, i32, i32) {
    %c0_i32 = arith.constant 0 : i32
    %c0_i32_0 = arith.constant 0 : i32
    %c0_i32_1 = arith.constant 0 : i32
    %c0_i32_2 = arith.constant 0 : i32
    return %c0_i32, %c0_i32_0, %c0_i32_1 : i32, i32, i32
  }
  func.func @transform_8(%arg0: i32) -> (i32, i32, i32) {
    %c0_i32 = arith.constant 0 : i32
    %c0_i32_0 = arith.constant 0 : i32
    %c0_i32_1 = arith.constant 0 : i32
    %c0_i32_2 = arith.constant 0 : i32
    return %c0_i32, %c0_i32_0, %c0_i32_1 : i32, i32, i32
  }
  func.func @transform_9(%arg0: i32) -> (i32, i32, i32) {
    %c0_i32 = arith.constant 0 : i32
    %c0_i32_0 = arith.constant 0 : i32
    %c0_i32_1 = arith.constant 0 : i32
    %c0_i32_2 = arith.constant 0 : i32
    return %c0_i32, %c0_i32_0, %c0_i32_1 : i32, i32, i32
  }
  func.func @transform_10(%arg0: i32) -> (i32, i32) {
    %c0_i32 = arith.constant 0 : i32
    %c0_i32_0 = arith.constant 0 : i32
    %c0_i32_1 = arith.constant 0 : i32
    return %c0_i32, %c0_i32_0 : i32, i32
  }
  func.func @transform_11(%arg0: i32) -> (i32, i32) {
    %c0_i32 = arith.constant 0 : i32
    %c0_i32_0 = arith.constant 0 : i32
    %c0_i32_1 = arith.constant 0 : i32
    return %c0_i32, %c0_i32_0 : i32, i32
  }
  func.func @transform_12(%arg0: i32) -> (i32, i32, i32) {
    %c0_i32 = arith.constant 0 : i32
    %c0_i32_0 = arith.constant 0 : i32
    %c0_i32_1 = arith.constant 0 : i32
    return %arg0, %c0_i32, %c0_i32_0 : i32, i32, i32
  }
}

</mosaic_0001>

<llo_original>
// kernel: simple_kws_forward.1
$region0: #{simple_kws_forward.1}
  #allocation0 [shape = 'u32[]', space=smem, size = 0x4, offset = 0x4, fixed_abs, tag = 'smem constant byte address 0x4 - core index']
  #allocation1 [shape = 'u32[144,128]{1,0:T(1,128)}', space=vmem, size = 0x12000, scoped, tag = 'internal scratch']
  #allocation2 [shape = 'f32[1,1]{1,0:T(1,128)S(1)}', space=vmem, size = 0x200, scoped, tag = 'scoped memory for simple_kws_forward.1']
  %s0 = inlined_call_operand.vmem [shape: f32[16,32], index: 0, kind: input, shape index: {}]
  %s1 = inlined_call_operand.vmem [shape: f32[8,32], index: 1, kind: input, shape index: {}]
  %s2 = inlined_call_operand.vmem [shape: bf16[32,32], index: 2, kind: input, shape index: {}]
  %s3 = inlined_call_operand.vmem [shape: bf16[2,3,4,32,8], index: 3, kind: input, shape index: {}]
  %s4 = inlined_call_operand.vmem [shape: f32[2,3,4,1,8], index: 4, kind: input, shape index: {}]
  %s5 = inlined_call_operand.vmem [shape: bf16[2,4,8,32], index: 5, kind: input, shape index: {}]
  %s6 = inlined_call_operand.vmem [shape: f32[2,6,32], index: 6, kind: input, shape index: {}]
  %s7 = inlined_call_operand.vmem [shape: bf16[2,32,128], index: 7, kind: input, shape index: {}]
  %s8 = inlined_call_operand.vmem [shape: f32[2,1,128], index: 8, kind: input, shape index: {}]
  %s9 = inlined_call_operand.vmem [shape: bf16[2,128,32], index: 9, kind: input, shape index: {}]
  %s10 = inlined_call_operand.vmem [shape: f32[1,32], index: 10, kind: input, shape index: {}]
  %s11 = inlined_call_operand.<no memory space> [shape: f32[1,1], index: 11, kind: input, shape index: {}]
  %s12 = inlined_call_operand.hbm [shape: f32[2,1,8], index: 12, kind: output, shape index: {}]
  %s13 = sld [smem:[#allocation0]]
  $region81: #{simple_kws_forward.1} parent=0
    _
  %s15 = ssub.s32 1, %s13
  %s16 = scalar_select 0, %s15, %s13
  %v17 = vstv %s11
  %18 = vst [vmem:[#allocation2] sm:$0x1] %v17
  $region1: #{simple_kws_forward.1} parent=0
    #allocation3 [shape = 'u8[1024]{0}', space=vmem, size = 0x400, scoped, tag = 'output window, operand 0']
    #allocation4 [shape = 's32[2]{0}', space=sflag, size = 0x8, scoped, tag = 'scoped memory for simple_kws_forward.1']
    %19 = vsyncpa [#allocation4], 0
    %s20 = scalar_lea.sflag [#allocation4], 1
    %21 = vsyncpa %s20, 0
    loop: start=0, step=1, limit=4
    $region2: #{simple_kws_forward.1} parent=1 // loop_pre_header
      _
    $region3: #{simple_kws_forward.1} parent=1 // loop_header
      %s23 = sphi 0, %s27
      %p24 = scmp.ge.s32.totalorder %s23, 4
      %s33 = sphi 0, %s35
      %s36 = sphi 0, %s33
      %s37 = sphi 0, %s36
      %s53 = sphi 0, %s37
      %s57 = sphi 0, %s57
      %s59 = sphi 0, %s57
      %s60 = sphi 0, %s59
      %s74 = sphi 0, %s60
      %s78 = sphi 0, %s78
      %s80 = sphi 0, %s78
      %s81 = sphi 0, %s80
      %s95 = sphi 0, %s81
      %s99 = sphi 0, %s99
      %s101 = sphi 0, %s99
      %s102 = sphi 0, %s101
      %s116 = sphi 0, %s102
      %s120 = sphi 0, %s120
      %s122 = sphi 0, %s120
      %s123 = sphi 0, %s122
      %s137 = sphi 0, %s123
      %s141 = sphi 0, %s141
      %s143 = sphi 0, %s141
      %s144 = sphi 0, %s143
      %s158 = sphi 0, %s144
      %s162 = sphi 0, %s162
      %s164 = sphi 0, %s162
      %s165 = sphi 0, %s164
      %s179 = sphi 0, %s165
      %s183 = sphi 0, %s183
      %s185 = sphi 0, %s183
      %s186 = sphi 0, %s185
      %s200 = sphi 0, %s186
      %s204 = sphi 0, %s204
      %s206 = sphi 0, %s204
      %s207 = sphi 0, %s206
      %s221 = sphi 0, %s207
      %s225 = sphi 0, %s225
      %s227 = sphi 0, %s225
      %s228 = sphi 0, %s227
      %s242 = sphi 0, %s228
      %s246 = sphi 0, %s246
      %s248 = sphi 0, %s246
      %s249 = sphi 0, %s248
      %s263 = sphi 0, %s249
      %s267 = sphi 0, %s267
      %s269 = sphi 0, %s267
      %s270 = sphi 0, %s269
      %s284 = sphi 0, %s270
      %s290 = sphi 0, %s292
      %s293 = sphi 0, %s290
      %s294 = sphi 0, %s293
      %s310 = sphi 0, %s294
    $region4: #{simple_kws_forward.1} parent=1 // loop_header_branch
      %26 = sbr.rel (%p24) target = $region8
    $region5: #{simple_kws_forward.1} parent=1 // loop_body
      %s28 = ssub.s32 %s23, 1
      %s29 = ssub.s32 %s23, 2
      %s30 = sadd.s32 %s23, 1
      %s31 = ssub.s32 %s23, %s30
      %p32 = scmp.eq.s32.totalorder %s31, 0
      %s34 = sadd.s32 %s33, 1
      %s35 = scalar_select %p32, %s33, %s34
      %p38 = pneg %p32
      %p39 = scmp.eq.s32.totalorder %s23, 1
      %p40 = por %p38, %p39
      %p41 = scmp.ne.s32.totalorder %s33, %s36
      %p42 = scmp.eq.s32.totalorder %s23, 0
      %p43 = por %p41, %p42
      %p44 = scmp.ne.s32.totalorder %s33, %s36
      %p45 = scmp.eq.s32.totalorder %s28, 1
      %p46 = por %p44, %p45
      %p47 = scmp.ne.s32.totalorder %s36, %s37
      %p48 = scmp.eq.s32.totalorder %s28, 0
      %p49 = por %p47, %p48
      %p50 = scmp.ne.s32.totalorder %s36, %s37
      %p51 = scmp.eq.s32.totalorder %s29, 1
      %p52 = por %p50, %p51
      %p54 = scmp.ne.s32.totalorder %s37, %s53
      %p55 = scmp.eq.s32.totalorder %s29, 0
      %p56 = por %p54, %p55
      %s58 = sadd.s32 %s57, 1
      %p61 = scmp.eq.s32.totalorder %s23, 1
      %p62 = scmp.ne.s32.totalorder %s57, %s59
      %p63 = scmp.eq.s32.totalorder %s23, 0
      %p64 = por %p62, %p63
      %p65 = scmp.ne.s32.totalorder %s57, %s59
      %p66 = scmp.eq.s32.totalorder %s28, 1
      %p67 = por %p65, %p66
      %p68 = scmp.ne.s32.totalorder %s59, %s60
      %p69 = scmp.eq.s32.totalorder %s28, 0
      %p70 = por %p68, %p69
      %p71 = scmp.ne.s32.totalorder %s59, %s60
      %p72 = scmp.eq.s32.totalorder %s29, 1
      %p73 = por %p71, %p72
      %p75 = scmp.ne.s32.totalorder %s60, %s74
      %p76 = scmp.eq.s32.totalorder %s29, 0
      %p77 = por %p75, %p76
      %s79 = sadd.s32 %s78, 1
      %p82 = scmp.eq.s32.totalorder %s23, 1
      %p83 = scmp.ne.s32.totalorder %s78, %s80
      %p84 = scmp.eq.s32.totalorder %s23, 0
      %p85 = por %p83, %p84
      %p86 = scmp.ne.s32.totalorder %s78, %s80
      %p87 = scmp.eq.s32.totalorder %s28, 1
      %p88 = por %p86, %p87
      %p89 = scmp.ne.s32.totalorder %s80, %s81
      %p90 = scmp.eq.s32.totalorder %s28, 0
      %p91 = por %p89, %p90
      %p92 = scmp.ne.s32.totalorder %s80, %s81
      %p93 = scmp.eq.s32.totalorder %s29, 1
      %p94 = por %p92, %p93
      %p96 = scmp.ne.s32.totalorder %s81, %s95
      %p97 = scmp.eq.s32.totalorder %s29, 0
      %p98 = por %p96, %p97
      %s100 = sadd.s32 %s99, 1
      %p103 = scmp.eq.s32.totalorder %s23, 1
      %p104 = scmp.ne.s32.totalorder %s99, %s101
      %p105 = scmp.eq.s32.totalorder %s23, 0
      %p106 = por %p104, %p105
      %p107 = scmp.ne.s32.totalorder %s99, %s101
      %p108 = scmp.eq.s32.totalorder %s28, 1
      %p109 = por %p107, %p108
      %p110 = scmp.ne.s32.totalorder %s101, %s102
      %p111 = scmp.eq.s32.totalorder %s28, 0
      %p112 = por %p110, %p111
      %p113 = scmp.ne.s32.totalorder %s101, %s102
      %p114 = scmp.eq.s32.totalorder %s29, 1
      %p115 = por %p113, %p114
      %p117 = scmp.ne.s32.totalorder %s102, %s116
      %p118 = scmp.eq.s32.totalorder %s29, 0
      %p119 = por %p117, %p118
      %s121 = sadd.s32 %s120, 1
      %p124 = scmp.eq.s32.totalorder %s23, 1
      %p125 = scmp.ne.s32.totalorder %s120, %s122
      %p126 = scmp.eq.s32.totalorder %s23, 0
      %p127 = por %p125, %p126
      %p128 = scmp.ne.s32.totalorder %s120, %s122
      %p129 = scmp.eq.s32.totalorder %s28, 1
      %p130 = por %p128, %p129
      %p131 = scmp.ne.s32.totalorder %s122, %s123
      %p132 = scmp.eq.s32.totalorder %s28, 0
      %p133 = por %p131, %p132
      %p134 = scmp.ne.s32.totalorder %s122, %s123
      %p135 = scmp.eq.s32.totalorder %s29, 1
      %p136 = por %p134, %p135
      %p138 = scmp.ne.s32.totalorder %s123, %s137
      %p139 = scmp.eq.s32.totalorder %s29, 0
      %p140 = por %p138, %p139
      %s142 = sadd.s32 %s141, 1
      %p145 = scmp.eq.s32.totalorder %s23, 1
      %p146 = scmp.ne.s32.totalorder %s141, %s143
      %p147 = scmp.eq.s32.totalorder %s23, 0
      %p148 = por %p146, %p147
      %p149 = scmp.ne.s32.totalorder %s141, %s143
      %p150 = scmp.eq.s32.totalorder %s28, 1
      %p151 = por %p149, %p150
      %p152 = scmp.ne.s32.totalorder %s143, %s144
      %p153 = scmp.eq.s32.totalorder %s28, 0
      %p154 = por %p152, %p153
      %p155 = scmp.ne.s32.totalorder %s143, %s144
      %p156 = scmp.eq.s32.totalorder %s29, 1
      %p157 = por %p155, %p156
      %p159 = scmp.ne.s32.totalorder %s144, %s158
      %p160 = scmp.eq.s32.totalorder %s29, 0
      %p161 = por %p159, %p160
      %s163 = sadd.s32 %s162, 1
      %p166 = scmp.eq.s32.totalorder %s23, 1
      %p167 = scmp.ne.s32.totalorder %s162, %s164
      %p168 = scmp.eq.s32.totalorder %s23, 0
      %p169 = por %p167, %p168
      %p170 = scmp.ne.s32.totalorder %s162, %s164
      %p171 = scmp.eq.s32.totalorder %s28, 1
      %p172 = por %p170, %p171
      %p173 = scmp.ne.s32.totalorder %s164, %s165
      %p174 = scmp.eq.s32.totalorder %s28, 0
      %p175 = por %p173, %p174
      %p176 = scmp.ne.s32.totalorder %s164, %s165
      %p177 = scmp.eq.s32.totalorder %s29, 1
      %p178 = por %p176, %p177
      %p180 = scmp.ne.s32.totalorder %s165, %s179
      %p181 = scmp.eq.s32.totalorder %s29, 0
      %p182 = por %p180, %p181
      %s184 = sadd.s32 %s183, 1
      %p187 = scmp.eq.s32.totalorder %s23, 1
      %p188 = scmp.ne.s32.totalorder %s183, %s185
      %p189 = scmp.eq.s32.totalorder %s23, 0
      %p190 = por %p188, %p189
      %p191 = scmp.ne.s32.totalorder %s183, %s185
      %p192 = scmp.eq.s32.totalorder %s28, 1
      %p193 = por %p191, %p192
      %p194 = scmp.ne.s32.totalorder %s185, %s186
      %p195 = scmp.eq.s32.totalorder %s28, 0
      %p196 = por %p194, %p195
      %p197 = scmp.ne.s32.totalorder %s185, %s186
      %p198 = scmp.eq.s32.totalorder %s29, 1
      %p199 = por %p197, %p198
      %p201 = scmp.ne.s32.totalorder %s186, %s200
      %p202 = scmp.eq.s32.totalorder %s29, 0
      %p203 = por %p201, %p202
      %s205 = sadd.s32 %s204, 1
      %p208 = scmp.eq.s32.totalorder %s23, 1
      %p209 = scmp.ne.s32.totalorder %s204, %s206
      %p210 = scmp.eq.s32.totalorder %s23, 0
      %p211 = por %p209, %p210
      %p212 = scmp.ne.s32.totalorder %s204, %s206
      %p213 = scmp.eq.s32.totalorder %s28, 1
      %p214 = por %p212, %p213
      %p215 = scmp.ne.s32.totalorder %s206, %s207
      %p216 = scmp.eq.s32.totalorder %s28, 0
      %p217 = por %p215, %p216
      %p218 = scmp.ne.s32.totalorder %s206, %s207
      %p219 = scmp.eq.s32.totalorder %s29, 1
      %p220 = por %p218, %p219
      %p222 = scmp.ne.s32.totalorder %s207, %s221
      %p223 = scmp.eq.s32.totalorder %s29, 0
      %p224 = por %p222, %p223
      %s226 = sadd.s32 %s225, 1
      %p229 = scmp.eq.s32.totalorder %s23, 1
      %p230 = scmp.ne.s32.totalorder %s225, %s227
      %p231 = scmp.eq.s32.totalorder %s23, 0
      %p232 = por %p230, %p231
      %p233 = scmp.ne.s32.totalorder %s225, %s227
      %p234 = scmp.eq.s32.totalorder %s28, 1
      %p235 = por %p233, %p234
      %p236 = scmp.ne.s32.totalorder %s227, %s228
      %p237 = scmp.eq.s32.totalorder %s28, 0
      %p238 = por %p236, %p237
      %p239 = scmp.ne.s32.totalorder %s227, %s228
      %p240 = scmp.eq.s32.totalorder %s29, 1
      %p241 = por %p239, %p240
      %p243 = scmp.ne.s32.totalorder %s228, %s242
      %p244 = scmp.eq.s32.totalorder %s29, 0
      %p245 = por %p243, %p244
      %s247 = sadd.s32 %s246, 1
      %p250 = scmp.eq.s32.totalorder %s23, 1
      %p251 = scmp.ne.s32.totalorder %s246, %s248
      %p252 = scmp.eq.s32.totalorder %s23, 0
      %p253 = por %p251, %p252
      %p254 = scmp.ne.s32.totalorder %s246, %s248
      %p255 = scmp.eq.s32.totalorder %s28, 1
      %p256 = por %p254, %p255
      %p257 = scmp.ne.s32.totalorder %s248, %s249
      %p258 = scmp.eq.s32.totalorder %s28, 0
      %p259 = por %p257, %p258
      %p260 = scmp.ne.s32.totalorder %s248, %s249
      %p261 = scmp.eq.s32.totalorder %s29, 1
      %p262 = por %p260, %p261
      %p264 = scmp.ne.s32.totalorder %s249, %s263
      %p265 = scmp.eq.s32.totalorder %s29, 0
      %p266 = por %p264, %p265
      %s268 = sadd.s32 %s267, 1
      %p271 = scmp.eq.s32.totalorder %s23, 1
      %p272 = scmp.ne.s32.totalorder %s267, %s269
      %p273 = scmp.eq.s32.totalorder %s23, 0
      %p274 = por %p272, %p273
      %p275 = scmp.ne.s32.totalorder %s267, %s269
      %p276 = scmp.eq.s32.totalorder %s28, 1
      %p277 = por %p275, %p276
      %p278 = scmp.ne.s32.totalorder %s269, %s270
      %p279 = scmp.eq.s32.totalorder %s28, 0
      %p280 = por %p278, %p279
      %p281 = scmp.ne.s32.totalorder %s269, %s270
      %p282 = scmp.eq.s32.totalorder %s29, 1
      %p283 = por %p281, %p282
      %p285 = scmp.ne.s32.totalorder %s270, %s284
      %p286 = scmp.eq.s32.totalorder %s29, 0
      %p287 = por %p285, %p286
      %s288 = ssub.s32 %s23, %s30
      %p289 = scmp.eq.s32.totalorder %s288, 0
      %s291 = sadd.s32 %s290, 1
      %s292 = scalar_select %p289, %s290, %s291
      %p295 = pneg %p289
      %p296 = scmp.eq.s32.totalorder %s23, 1
      %p297 = por %p295, %p296
      %p298 = scmp.ne.s32.totalorder %s290, %s293
      %p299 = scmp.eq.s32.totalorder %s23, 0
      %p300 = por %p298, %p299
      %p301 = scmp.ne.s32.totalorder %s290, %s293
      %p302 = scmp.eq.s32.totalorder %s28, 1
      %p303 = por %p301, %p302
      %p304 = scmp.ne.s32.totalorder %s293, %s294
      %p305 = scmp.eq.s32.totalorder %s28, 0
      %p306 = por %p304, %p305
      %p307 = scmp.ne.s32.totalorder %s293, %s294
      %p308 = scmp.eq.s32.totalorder %s29, 1
      %p309 = por %p307, %p308
      %p311 = scmp.ne.s32.totalorder %s294, %s310
      %p312 = scmp.eq.s32.totalorder %s29, 0
      %p313 = por %p311, %p312
      %p314 = scmp.le.s32.totalorder 1, %s23
      %p315 = scmp.lt.s32.totalorder %s23, 3
      %p316 = pnand %p314, %p315
      %p317 = pneg %p316
      // Predicated region
      $region9: #{simple_kws_forward.1} parent=5 // pred_check
        _
      $region10: #{simple_kws_forward.1} parent=5 // pred_check_branch
        %319 = sbr.rel (%p316) target = $region12
      $region11: #{simple_kws_forward.1} parent=5 // pred_region
        %s320 = ssub.s32 %s23, 1
        // Predicated region
        $region13: #{simple_kws_forward.1} parent=11 // pred_check
          %p321 = pneg %p70
        $region14: #{simple_kws_forward.1} parent=11 // pred_check_branch
          %323 = sbr.rel (%p321) target = $region16
        $region15: #{simple_kws_forward.1} parent=11 // pred_region
          _
        $region16: #{simple_kws_forward.1} parent=11 // pred_fallthru
          _
        // Predicated region
        $region17: #{simple_kws_forward.1} parent=11 // pred_check
          %p324 = pneg %p91
        $region18: #{simple_kws_forward.1} parent=11 // pred_check_branch
          %326 = sbr.rel (%p324) target = $region20
        $region19: #{simple_kws_forward.1} parent=11 // pred_region
          _
        $region20: #{simple_kws_forward.1} parent=11 // pred_fallthru
          _
        // Predicated region
        $region21: #{simple_kws_forward.1} parent=11 // pred_check
          %p327 = pneg %p112
        $region22: #{simple_kws_forward.1} parent=11 // pred_check_branch
          %329 = sbr.rel (%p327) target = $region24
        $region23: #{simple_kws_forward.1} parent=11 // pred_region
          _
        $region24: #{simple_kws_forward.1} parent=11 // pred_fallthru
          _
        // Predicated region
        $region25: #{simple_kws_forward.1} parent=11 // pred_check
          %p330 = pneg %p133
        $region26: #{simple_kws_forward.1} parent=11 // pred_check_branch
          %332 = sbr.rel (%p330) target = $region28
        $region27: #{simple_kws_forward.1} parent=11 // pred_region
          _
        $region28: #{simple_kws_forward.1} parent=11 // pred_fallthru
          _
        // Predicated region
        $region29: #{simple_kws_forward.1} parent=11 // pred_check
          %p333 = pneg %p154
        $region30: #{simple_kws_forward.1} parent=11 // pred_check_branch
          %335 = sbr.rel (%p333) target = $region32
        $region31: #{simple_kws_forward.1} parent=11 // pred_region
          _
        $region32: #{simple_kws_forward.1} parent=11 // pred_fallthru
          _
        // Predicated region
        $region33: #{simple_kws_forward.1} parent=11 // pred_check
          %p336 = pneg %p175
        $region34: #{simple_kws_forward.1} parent=11 // pred_check_branch
          %338 = sbr.rel (%p336) target = $region36
        $region35: #{simple_kws_forward.1} parent=11 // pred_region
          _
        $region36: #{simple_kws_forward.1} parent=11 // pred_fallthru
          _
        // Predicated region
        $region37: #{simple_kws_forward.1} parent=11 // pred_check
          %p339 = pneg %p196
        $region38: #{simple_kws_forward.1} parent=11 // pred_check_branch
          %341 = sbr.rel (%p339) target = $region40
        $region39: #{simple_kws_forward.1} parent=11 // pred_region
          _
        $region40: #{simple_kws_forward.1} parent=11 // pred_fallthru
          _
        // Predicated region
        $region41: #{simple_kws_forward.1} parent=11 // pred_check
          %p342 = pneg %p217
        $region42: #{simple_kws_forward.1} parent=11 // pred_check_branch
          %344 = sbr.rel (%p342) target = $region44
        $region43: #{simple_kws_forward.1} parent=11 // pred_region
          _
        $region44: #{simple_kws_forward.1} parent=11 // pred_fallthru
          _
        // Predicated region
        $region45: #{simple_kws_forward.1} parent=11 // pred_check
          %p345 = pneg %p238
        $region46: #{simple_kws_forward.1} parent=11 // pred_check_branch
          %347 = sbr.rel (%p345) target = $region48
        $region47: #{simple_kws_forward.1} parent=11 // pred_region
          _
        $region48: #{simple_kws_forward.1} parent=11 // pred_fallthru
          _
        // Predicated region
        $region49: #{simple_kws_forward.1} parent=11 // pred_check
          %p348 = pneg %p259
        $region50: #{simple_kws_forward.1} parent=11 // pred_check_branch
          %350 = sbr.rel (%p348) target = $region52
        $region51: #{simple_kws_forward.1} parent=11 // pred_region
          _
        $region52: #{simple_kws_forward.1} parent=11 // pred_fallthru
          _
        // Predicated region
        $region53: #{simple_kws_forward.1} parent=11 // pred_check
          %p351 = pneg %p280
        $region54: #{simple_kws_forward.1} parent=11 // pred_check_branch
          %353 = sbr.rel (%p351) target = $region56
        $region55: #{simple_kws_forward.1} parent=11 // pred_region
          _
        $region56: #{simple_kws_forward.1} parent=11 // pred_fallthru
          _
      $region12: #{simple_kws_forward.1} parent=5 // pred_fallthru
        _
      %p354 = scmp.lt.s32.totalorder %s23, 2
      // Predicated region
      $region57: #{simple_kws_forward.1} parent=5 // pred_check
        %p355 = pneg %p354
      $region58: #{simple_kws_forward.1} parent=5 // pred_check_branch
        %357 = sbr.rel (%p355) target = $region60
      $region59: #{simple_kws_forward.1} parent=5 // pred_region
        // Predicated region
        $region61: #{simple_kws_forward.1} parent=59 // pred_check
          %p358 = pneg %p43
        $region62: #{simple_kws_forward.1} parent=59 // pred_check_branch
          %360 = sbr.rel (%p358) target = $region64
        $region63: #{simple_kws_forward.1} parent=59 // pred_region
          %p361 = scmp.lt.s32.totalorder %s23, 1
          %s362 = scalar_select %p361, %s23, 1
          %s363 = smul.addr %s362, 8
          %s364 = scalar_lea.vmem %s0, %s363
        $region64: #{simple_kws_forward.1} parent=59 // pred_fallthru
          _
      $region60: #{simple_kws_forward.1} parent=5 // pred_fallthru
        _
      %p365 = scmp.le.s32.totalorder 1, %s23
      %p366 = scmp.lt.s32.totalorder %s23, 3
      %p367 = pnand %p365, %p366
      %p368 = pneg %p367
      // Predicated region
      $region65: #{simple_kws_forward.1} parent=5 // pred_check
        _
      $region66: #{simple_kws_forward.1} parent=5 // pred_check_branch
        %370 = sbr.rel (%p367) target = $region68
      $region67: #{simple_kws_forward.1} parent=5 // pred_region
        %s371 = ssub.s32 %s23, 1
        %p372 = scmp.lt.s32.totalorder %s28, 1
        %s373 = scalar_select %p372, %s28, 1
        %s374 = smul.addr %s373, 8
        %s375 = scalar_lea.vmem %s0, %s374
        %p376 = pneg %p49
        %p377 = pneg %p46
        %p378 = pneg %p70
        %p379 = pneg %p67
        %p380 = pneg %p91
        %p381 = pneg %p88
        %p382 = pneg %p112
        %p383 = pneg %p109
        %p384 = pneg %p133
        %p385 = pneg %p130
        %p386 = pneg %p154
        %p387 = pneg %p151
        %p388 = pneg %p175
        %p389 = pneg %p172
        %p390 = pneg %p196
        %p391 = pneg %p193
        %p392 = pneg %p217
        %p393 = pneg %p214
        %p394 = pneg %p238
        %p395 = pneg %p235
        %p396 = pneg %p259
        %p397 = pneg %p256
        %p398 = pneg %p280
        %p399 = pneg %p277
        %p400 = pneg %p306
        %p401 = pneg %p303
        %s402 = sand.u32 %s293, 1
        %s403 = scalar_lea.sflag [#allocation4], %s402
        %s404 = sand.u32 %s293, 1
        %s405 = scalar_lea.vmem [#allocation3], %s404
        %p406 = scmp.lt.s32.totalorder %s28, 1
        %s407 = scalar_select %p406, %s28, 1
        %s408 = smul.addr %s407, 8
        %s409 = scalar_lea.vmem %s0, %s408
        %v411 = vld [vmem:[%s409] sm:$0xff]
        %v412 = vpack.c.bf16 %v411, %v411
        %v413 = vld [vmem:[%s2] sm:$0xf]
        %v414 = vld [vmem:[%s2 + $0x4] sm:$0xf]
        %v415 = vld [vmem:[%s2 + $0x8] sm:$0xf]
        %v416 = vld [vmem:[%s2 + $0xc] sm:$0xf]
        %v417 = vld [vmem:[%s1] sm:$0xff]
        %v422 = vunpack.c.l.b16 %v413
        %v423 = vunpack.c.l.b16 %v414
        %v424 = vunpack.c.l.b16 %v415
        %v425 = vunpack.c.l.b16 %v416
        %v426 = vpack.c.b16 %v423, %v422
        %v427 = vpack.c.b16 %v425, %v424
        %vm430 = vcmask 261120
        %v432 = vsel %vm430, %v412, 0
        %434 = vmatprep.subr.bf16.mxu0 0
        %435 = vmatpush1.bf16.msra.mxu0 0
        %436 = vmatprep.subr.bf16.mxu0 0
        %437 = vmatpush1.bf16.msra.mxu0 0
        %438 = vmatprep.subr.bf16.mxu0 0
        %439 = vmatpush1.bf16.msra.mxu0 0
        %440 = vmatprep.subr.bf16.mxu0 0
        %441 = vmatpush1.bf16.msra.mxu0 0
        %442 = vmatprep.subr.bf16.mxu0 0
        %443 = vmatpush1.bf16.msra.mxu0 0
        %444 = vmatprep.subr.bf16.mxu0 0
        %445 = vmatpush1.bf16.msra.mxu0 0
        %446 = vmatprep.subr.bf16.mxu0 0
        %447 = vmatpush1.bf16.msra.mxu0 %v427
        %448 = vmatprep.subr.bf16.mxu0 0
        %449 = vmatpush1.bf16.msra.mxu0 %v426
        %450 = vmatprep.subr.bf16.mxu0 0
        %451 = vmatpush2.bf16.msra.mxu0 0
        %452 = vmatprep.subr.bf16.mxu0 0
        %453 = vmatpush2.bf16.msra.mxu0 0
        %454 = vmatprep.subr.bf16.mxu0 0
        %455 = vmatpush2.bf16.msra.mxu0 0
        %456 = vmatprep.subr.bf16.mxu0 0
        %457 = vmatpush2.bf16.msra.mxu0 0
        %458 = vmatprep.subr.bf16.mxu0 0
        %459 = vmatpush2.bf16.msra.mxu0 0
        %460 = vmatprep.subr.bf16.mxu0 0
        %461 = vmatpush2.bf16.msra.mxu0 0
        %462 = vmatprep.subr.bf16.mxu0 0
        %463 = vmatpush2.bf16.msra.mxu0 0
        %464 = vmatprep.subr.bf16.mxu0 0
        %465 = vmatpush2.bf16.msra.mxu0 0
        %466 = vmatprep.mubr.bf16.mxu0 0
        %467 = vmatmul.mubr.bf16.gmra.mxu0 %v432
        %v468 = vpop.f32.mrf.mxu0
        %v469 = vadd.f32 %v417, %v468
        %v470 = vpop.f32.mrf.mxu0
        %v471 = vpop.f32.mrf.mxu0
        %v472 = vpop.f32.mrf.mxu0
        %473 = vdwg.mxu0
        %v474 = vpack.c.bf16 %v469, %v469
        %v475 = vld [vmem:[%s3] sm:$0xf]
        %v476 = vld [vmem:[%s3 + $0x4] sm:$0xf]
        %v477 = vld [vmem:[%s3 + $0x8] sm:$0xf]
        %v478 = vld [vmem:[%s3 + $0xc] sm:$0xf]
        %v479 = vld [vmem:[%s3 + $0x10] sm:$0xf]
        %v480 = vld [vmem:[%s3 + $0x14] sm:$0xf]
        %v481 = vld [vmem:[%s3 + $0x18] sm:$0xf]
        %v482 = vld [vmem:[%s3 + $0x1c] sm:$0xf]
        %v483 = vld [vmem:[%s3 + $0x20] sm:$0xf]
        %v484 = vld [vmem:[%s3 + $0x24] sm:$0xf]
        %v485 = vld [vmem:[%s3 + $0x28] sm:$0xf]
        %v486 = vld [vmem:[%s3 + $0x2c] sm:$0xf]
        %v487 = vld [vmem:[%s3 + $0x30] sm:$0xf]
        %v488 = vld [vmem:[%s3 + $0x34] sm:$0xf]
        %v489 = vld [vmem:[%s3 + $0x38] sm:$0xf]
        %v490 = vld [vmem:[%s3 + $0x3c] sm:$0xf]
        %v491 = vld [vmem:[%s4] sm:$0x1]
        %v492 = vld [vmem:[%s4 + $0x1] sm:$0x1]
        %v493 = vld [vmem:[%s4 + $0x2] sm:$0x1]
        %v494 = vld [vmem:[%s4 + $0x3] sm:$0x1]
        %v499 = vlaneseq
        %v500 = vshrl.u32 %v499, 7
        %v501 = vsub.s32 0, %v500
        %v502 = vrot.slane %v491, %v501
        %v503 = vlaneseq
        %v504 = vshrl.u32 %v503, 7
        %v505 = vsub.s32 0, %v504
        %v506 = vrot.slane %v492, %v505
        %v507 = vlaneseq
        %v508 = vshrl.u32 %v507, 7
        %v509 = vsub.s32 0, %v508
        %v510 = vrot.slane %v493, %v509
        %v511 = vlaneseq
        %v512 = vshrl.u32 %v511, 7
        %v513 = vsub.s32 0, %v512
        %v514 = vrot.slane %v494, %v513
        %v523 = vunpack.c.l.b16 %v475
        %v524 = vunpack.c.l.b16 %v476
        %v525 = vunpack.c.l.b16 %v477
        %v526 = vunpack.c.l.b16 %v478
        %v527 = vpack.c.b16 %v524, %v523
        %v528 = vpack.c.b16 %v526, %v525
        %v532 = vsel %vm430, %v474, 0
        %534 = vmatprep.subr.bf16.mxu0 0
        %535 = vmatpush1.bf16.msra.mxu0 0
        %536 = vmatprep.subr.bf16.mxu0 0
        %537 = vmatpush1.bf16.msra.mxu0 0
        %538 = vmatprep.subr.bf16.mxu0 0
        %539 = vmatpush1.bf16.msra.mxu0 0
        %540 = vmatprep.subr.bf16.mxu0 0
        %541 = vmatpush1.bf16.msra.mxu0 0
        %542 = vmatprep.subr.bf16.mxu0 0
        %543 = vmatpush1.bf16.msra.mxu0 0
        %544 = vmatprep.subr.bf16.mxu0 0
        %545 = vmatpush1.bf16.msra.mxu0 0
        %546 = vmatprep.subr.bf16.mxu0 0
        %547 = vmatpush1.bf16.msra.mxu0 %v528
        %548 = vmatprep.subr.bf16.mxu0 0
        %549 = vmatpush1.bf16.msra.mxu0 %v527
        %550 = vmatprep.subr.bf16.mxu0 0
        %551 = vmatpush2.bf16.msra.mxu0 0
        %552 = vmatprep.subr.bf16.mxu0 0
        %553 = vmatpush2.bf16.msra.mxu0 0
        %554 = vmatprep.subr.bf16.mxu0 0
        %555 = vmatpush2.bf16.msra.mxu0 0
        %556 = vmatprep.subr.bf16.mxu0 0
        %557 = vmatpush2.bf16.msra.mxu0 0
        %558 = vmatprep.subr.bf16.mxu0 0
        %559 = vmatpush2.bf16.msra.mxu0 0
        %560 = vmatprep.subr.bf16.mxu0 0
        %561 = vmatpush2.bf16.msra.mxu0 0
        %562 = vmatprep.subr.bf16.mxu0 0
        %563 = vmatpush2.bf16.msra.mxu0 0
        %564 = vmatprep.subr.bf16.mxu0 0
        %565 = vmatpush2.bf16.msra.mxu0 0
        %566 = vmatprep.mubr.bf16.mxu0 0
        %567 = vmatmul.mubr.bf16.gmra.mxu0 %v532
        %v568 = vpop.f32.mrf.mxu0
        %v569 = vadd.f32 %v502, %v568
        %v570 = vpop.f32.mrf.mxu0
        %v571 = vpop.f32.mrf.mxu0
        %v572 = vpop.f32.mrf.mxu0
        %573 = vdwg.mxu0
        %v578 = vunpack.c.l.b16 %v479
        %v579 = vunpack.c.l.b16 %v480
        %v580 = vunpack.c.l.b16 %v481
        %v581 = vunpack.c.l.b16 %v482
        %v582 = vpack.c.b16 %v579, %v578
        %v583 = vpack.c.b16 %v581, %v580
        %586 = vmatprep.subr.bf16.mxu0 0
        %587 = vmatpush1.bf16.msra.mxu0 0
        %588 = vmatprep.subr.bf16.mxu0 0
        %589 = vmatpush1.bf16.msra.mxu0 0
        %590 = vmatprep.subr.bf16.mxu0 0
        %591 = vmatpush1.bf16.msra.mxu0 0
        %592 = vmatprep.subr.bf16.mxu0 0
        %593 = vmatpush1.bf16.msra.mxu0 0
        %594 = vmatprep.subr.bf16.mxu0 0
        %595 = vmatpush1.bf16.msra.mxu0 0
        %596 = vmatprep.subr.bf16.mxu0 0
        %597 = vmatpush1.bf16.msra.mxu0 0
        %598 = vmatprep.subr.bf16.mxu0 0
        %599 = vmatpush1.bf16.msra.mxu0 %v583
        %600 = vmatprep.subr.bf16.mxu0 0
        %601 = vmatpush1.bf16.msra.mxu0 %v582
        %602 = vmatprep.subr.bf16.mxu0 0
        %603 = vmatpush2.bf16.msra.mxu0 0
        %604 = vmatprep.subr.bf16.mxu0 0
        %605 = vmatpush2.bf16.msra.mxu0 0
        %606 = vmatprep.subr.bf16.mxu0 0
        %607 = vmatpush2.bf16.msra.mxu0 0
        %608 = vmatprep.subr.bf16.mxu0 0
        %609 = vmatpush2.bf16.msra.mxu0 0
        %610 = vmatprep.subr.bf16.mxu0 0
        %611 = vmatpush2.bf16.msra.mxu0 0
        %612 = vmatprep.subr.bf16.mxu0 0
        %613 = vmatpush2.bf16.msra.mxu0 0
        %614 = vmatprep.subr.bf16.mxu0 0
        %615 = vmatpush2.bf16.msra.mxu0 0
        %616 = vmatprep.subr.bf16.mxu0 0
        %617 = vmatpush2.bf16.msra.mxu0 0
        %618 = vmatprep.mubr.bf16.mxu0 0
        %619 = vmatmul.mubr.bf16.gmra.mxu0 %v532
        %v620 = vpop.f32.mrf.mxu0
        %v621 = vadd.f32 %v506, %v620
        %v622 = vpop.f32.mrf.mxu0
        %v623 = vpop.f32.mrf.mxu0
        %v624 = vpop.f32.mrf.mxu0
        %625 = vdwg.mxu0
        %v630 = vunpack.c.l.b16 %v483
        %v631 = vunpack.c.l.b16 %v484
        %v632 = vunpack.c.l.b16 %v485
        %v633 = vunpack.c.l.b16 %v486
        %v634 = vpack.c.b16 %v631, %v630
        %v635 = vpack.c.b16 %v633, %v632
        %638 = vmatprep.subr.bf16.mxu0 0
        %639 = vmatpush1.bf16.msra.mxu0 0
        %640 = vmatprep.subr.bf16.mxu0 0
        %641 = vmatpush1.bf16.msra.mxu0 0
        %642 = vmatprep.subr.bf16.mxu0 0
        %643 = vmatpush1.bf16.msra.mxu0 0
        %644 = vmatprep.subr.bf16.mxu0 0
        %645 = vmatpush1.bf16.msra.mxu0 0
        %646 = vmatprep.subr.bf16.mxu0 0
        %647 = vmatpush1.bf16.msra.mxu0 0
        %648 = vmatprep.subr.bf16.mxu0 0
        %649 = vmatpush1.bf16.msra.mxu0 0
        %650 = vmatprep.subr.bf16.mxu0 0
        %651 = vmatpush1.bf16.msra.mxu0 %v635
        %652 = vmatprep.subr.bf16.mxu0 0
        %653 = vmatpush1.bf16.msra.mxu0 %v634
        %654 = vmatprep.subr.bf16.mxu0 0
        %655 = vmatpush2.bf16.msra.mxu0 0
        %656 = vmatprep.subr.bf16.mxu0 0
        %657 = vmatpush2.bf16.msra.mxu0 0
        %658 = vmatprep.subr.bf16.mxu0 0
        %659 = vmatpush2.bf16.msra.mxu0 0
        %660 = vmatprep.subr.bf16.mxu0 0
        %661 = vmatpush2.bf16.msra.mxu0 0
        %662 = vmatprep.subr.bf16.mxu0 0
        %663 = vmatpush2.bf16.msra.mxu0 0
        %664 = vmatprep.subr.bf16.mxu0 0
        %665 = vmatpush2.bf16.msra.mxu0 0
        %666 = vmatprep.subr.bf16.mxu0 0
        %667 = vmatpush2.bf16.msra.mxu0 0
        %668 = vmatprep.subr.bf16.mxu0 0
        %669 = vmatpush2.bf16.msra.mxu0 0
        %670 = vmatprep.mubr.bf16.mxu0 0
        %671 = vmatmul.mubr.bf16.gmra.mxu0 %v532
        %v672 = vpop.f32.mrf.mxu0
        %v673 = vadd.f32 %v510, %v672
        %v674 = vpop.f32.mrf.mxu0
        %v675 = vpop.f32.mrf.mxu0
        %v676 = vpop.f32.mrf.mxu0
        %677 = vdwg.mxu0
        %v682 = vunpack.c.l.b16 %v487
        %v683 = vunpack.c.l.b16 %v488
        %v684 = vunpack.c.l.b16 %v489
        %v685 = vunpack.c.l.b16 %v490
        %v686 = vpack.c.b16 %v683, %v682
        %v687 = vpack.c.b16 %v685, %v684
        %690 = vmatprep.subr.bf16.mxu0 0
        %691 = vmatpush1.bf16.msra.mxu0 0
        %692 = vmatprep.subr.bf16.mxu0 0
        %693 = vmatpush1.bf16.msra.mxu0 0
        %694 = vmatprep.subr.bf16.mxu0 0
        %695 = vmatpush1.bf16.msra.mxu0 0
        %696 = vmatprep.subr.bf16.mxu0 0
        %697 = vmatpush1.bf16.msra.mxu0 0
        %698 = vmatprep.subr.bf16.mxu0 0
        %699 = vmatpush1.bf16.msra.mxu0 0
        %700 = vmatprep.subr.bf16.mxu0 0
        %701 = vmatpush1.bf16.msra.mxu0 0
        %702 = vmatprep.subr.bf16.mxu0 0
        %703 = vmatpush1.bf16.msra.mxu0 %v687
        %704 = vmatprep.subr.bf16.mxu0 0
        %705 = vmatpush1.bf16.msra.mxu0 %v686
        %706 = vmatprep.subr.bf16.mxu0 0
        %707 = vmatpush2.bf16.msra.mxu0 0
        %708 = vmatprep.subr.bf16.mxu0 0
        %709 = vmatpush2.bf16.msra.mxu0 0
        %710 = vmatprep.subr.bf16.mxu0 0
        %711 = vmatpush2.bf16.msra.mxu0 0
        %712 = vmatprep.subr.bf16.mxu0 0
        %713 = vmatpush2.bf16.msra.mxu0 0
        %714 = vmatprep.subr.bf16.mxu0 0
        %715 = vmatpush2.bf16.msra.mxu0 0
        %716 = vmatprep.subr.bf16.mxu0 0
        %717 = vmatpush2.bf16.msra.mxu0 0
        %718 = vmatprep.subr.bf16.mxu0 0
        %719 = vmatpush2.bf16.msra.mxu0 0
        %720 = vmatprep.subr.bf16.mxu0 0
        %721 = vmatpush2.bf16.msra.mxu0 0
        %722 = vmatprep.mubr.bf16.mxu0 0
        %723 = vmatmul.mubr.bf16.gmra.mxu0 %v532
        %v724 = vpop.f32.mrf.mxu0
        %v725 = vadd.f32 %v514, %v724
        %v726 = vpop.f32.mrf.mxu0
        %v727 = vpop.f32.mrf.mxu0
        %v728 = vpop.f32.mrf.mxu0
        %729 = vdwg.mxu0
        %s730 = scalar_lea.vmem %s3, 64
        %v731 = vld [vmem:[%s730] sm:$0xf]
        %v732 = vld [vmem:[%s730 + $0x4] sm:$0xf]
        %v733 = vld [vmem:[%s730 + $0x8] sm:$0xf]
        %v734 = vld [vmem:[%s730 + $0xc] sm:$0xf]
        %v735 = vld [vmem:[%s730 + $0x10] sm:$0xf]
        %v736 = vld [vmem:[%s730 + $0x14] sm:$0xf]
        %v737 = vld [vmem:[%s730 + $0x18] sm:$0xf]
        %v738 = vld [vmem:[%s730 + $0x1c] sm:$0xf]
        %v739 = vld [vmem:[%s730 + $0x20] sm:$0xf]
        %v740 = vld [vmem:[%s730 + $0x24] sm:$0xf]
        %v741 = vld [vmem:[%s730 + $0x28] sm:$0xf]
        %v742 = vld [vmem:[%s730 + $0x2c] sm:$0xf]
        %v743 = vld [vmem:[%s730 + $0x30] sm:$0xf]
        %v744 = vld [vmem:[%s730 + $0x34] sm:$0xf]
        %v745 = vld [vmem:[%s730 + $0x38] sm:$0xf]
        %v746 = vld [vmem:[%s730 + $0x3c] sm:$0xf]
        %s747 = scalar_lea.vmem %s4, 4
        %v748 = vld [vmem:[%s747] sm:$0x1]
        %v749 = vld [vmem:[%s747 + $0x1] sm:$0x1]
        %v750 = vld [vmem:[%s747 + $0x2] sm:$0x1]
        %v751 = vld [vmem:[%s747 + $0x3] sm:$0x1]
        %v756 = vlaneseq
        %v757 = vshrl.u32 %v756, 7
        %v758 = vsub.s32 0, %v757
        %v759 = vrot.slane %v748, %v758
        %v760 = vlaneseq
        %v761 = vshrl.u32 %v760, 7
        %v762 = vsub.s32 0, %v761
        %v763 = vrot.slane %v749, %v762
        %v764 = vlaneseq
        %v765 = vshrl.u32 %v764, 7
        %v766 = vsub.s32 0, %v765
        %v767 = vrot.slane %v750, %v766
        %v768 = vlaneseq
        %v769 = vshrl.u32 %v768, 7
        %v770 = vsub.s32 0, %v769
        %v771 = vrot.slane %v751, %v770
        %v780 = vunpack.c.l.b16 %v731
        %v781 = vunpack.c.l.b16 %v732
        %v782 = vunpack.c.l.b16 %v733
        %v783 = vunpack.c.l.b16 %v734
        %v784 = vpack.c.b16 %v781, %v780
        %v785 = vpack.c.b16 %v783, %v782
        %788 = vmatprep.subr.bf16.mxu0 0
        %789 = vmatpush1.bf16.msra.mxu0 0
        %790 = vmatprep.subr.bf16.mxu0 0
        %791 = vmatpush1.bf16.msra.mxu0 0
        %792 = vmatprep.subr.bf16.mxu0 0
        %793 = vmatpush1.bf16.msra.mxu0 0
        %794 = vmatprep.subr.bf16.mxu0 0
        %795 = vmatpush1.bf16.msra.mxu0 0
        %796 = vmatprep.subr.bf16.mxu0 0
        %797 = vmatpush1.bf16.msra.mxu0 0
        %798 = vmatprep.subr.bf16.mxu0 0
        %799 = vmatpush1.bf16.msra.mxu0 0
        %800 = vmatprep.subr.bf16.mxu0 0
        %801 = vmatpush1.bf16.msra.mxu0 %v785
        %802 = vmatprep.subr.bf16.mxu0 0
        %803 = vmatpush1.bf16.msra.mxu0 %v784
        %804 = vmatprep.subr.bf16.mxu0 0
        %805 = vmatpush2.bf16.msra.mxu0 0
        %806 = vmatprep.subr.bf16.mxu0 0
        %807 = vmatpush2.bf16.msra.mxu0 0
        %808 = vmatprep.subr.bf16.mxu0 0
        %809 = vmatpush2.bf16.msra.mxu0 0
        %810 = vmatprep.subr.bf16.mxu0 0
        %811 = vmatpush2.bf16.msra.mxu0 0
        %812 = vmatprep.subr.bf16.mxu0 0
        %813 = vmatpush2.bf16.msra.mxu0 0
        %814 = vmatprep.subr.bf16.mxu0 0
        %815 = vmatpush2.bf16.msra.mxu0 0
        %816 = vmatprep.subr.bf16.mxu0 0
        %817 = vmatpush2.bf16.msra.mxu0 0
        %818 = vmatprep.subr.bf16.mxu0 0
        %819 = vmatpush2.bf16.msra.mxu0 0
        %820 = vmatprep.mubr.bf16.mxu0 0
        %821 = vmatmul.mubr.bf16.gmra.mxu0 %v532
        %v822 = vpop.f32.mrf.mxu0
        %v823 = vadd.f32 %v759, %v822
        %v824 = vpop.f32.mrf.mxu0
        %v825 = vpop.f32.mrf.mxu0
        %v826 = vpop.f32.mrf.mxu0
        %827 = vdwg.mxu0
        %v832 = vunpack.c.l.b16 %v735
        %v833 = vunpack.c.l.b16 %v736
        %v834 = vunpack.c.l.b16 %v737
        %v835 = vunpack.c.l.b16 %v738
        %v836 = vpack.c.b16 %v833, %v832
        %v837 = vpack.c.b16 %v835, %v834
        %840 = vmatprep.subr.bf16.mxu0 0
        %841 = vmatpush1.bf16.msra.mxu0 0
        %842 = vmatprep.subr.bf16.mxu0 0
        %843 = vmatpush1.bf16.msra.mxu0 0
        %844 = vmatprep.subr.bf16.mxu0 0
        %845 = vmatpush1.bf16.msra.mxu0 0
        %846 = vmatprep.subr.bf16.mxu0 0
        %847 = vmatpush1.bf16.msra.mxu0 0
        %848 = vmatprep.subr.bf16.mxu0 0
        %849 = vmatpush1.bf16.msra.mxu0 0
        %850 = vmatprep.subr.bf16.mxu0 0
        %851 = vmatpush1.bf16.msra.mxu0 0
        %852 = vmatprep.subr.bf16.mxu0 0
        %853 = vmatpush1.bf16.msra.mxu0 %v837
        %854 = vmatprep.subr.bf16.mxu0 0
        %855 = vmatpush1.bf16.msra.mxu0 %v836
        %856 = vmatprep.subr.bf16.mxu0 0
        %857 = vmatpush2.bf16.msra.mxu0 0
        %858 = vmatprep.subr.bf16.mxu0 0
        %859 = vmatpush2.bf16.msra.mxu0 0
        %860 = vmatprep.subr.bf16.mxu0 0
        %861 = vmatpush2.bf16.msra.mxu0 0
        %862 = vmatprep.subr.bf16.mxu0 0
        %863 = vmatpush2.bf16.msra.mxu0 0
        %864 = vmatprep.subr.bf16.mxu0 0
        %865 = vmatpush2.bf16.msra.mxu0 0
        %866 = vmatprep.subr.bf16.mxu0 0
        %867 = vmatpush2.bf16.msra.mxu0 0
        %868 = vmatprep.subr.bf16.mxu0 0
        %869 = vmatpush2.bf16.msra.mxu0 0
        %870 = vmatprep.subr.bf16.mxu0 0
        %871 = vmatpush2.bf16.msra.mxu0 0
        %872 = vmatprep.mubr.bf16.mxu0 0
        %873 = vmatmul.mubr.bf16.gmra.mxu0 %v532
        %v874 = vpop.f32.mrf.mxu0
        %v875 = vadd.f32 %v763, %v874
        %v876 = vpop.f32.mrf.mxu0
        %v877 = vpop.f32.mrf.mxu0
        %v878 = vpop.f32.mrf.mxu0
        %879 = vdwg.mxu0
        %v884 = vunpack.c.l.b16 %v739
        %v885 = vunpack.c.l.b16 %v740
        %v886 = vunpack.c.l.b16 %v741
        %v887 = vunpack.c.l.b16 %v742
        %v888 = vpack.c.b16 %v885, %v884
        %v889 = vpack.c.b16 %v887, %v886
        %892 = vmatprep.subr.bf16.mxu0 0
        %893 = vmatpush1.bf16.msra.mxu0 0
        %894 = vmatprep.subr.bf16.mxu0 0
        %895 = vmatpush1.bf16.msra.mxu0 0
        %896 = vmatprep.subr.bf16.mxu0 0
        %897 = vmatpush1.bf16.msra.mxu0 0
        %898 = vmatprep.subr.bf16.mxu0 0
        %899 = vmatpush1.bf16.msra.mxu0 0
        %900 = vmatprep.subr.bf16.mxu0 0
        %901 = vmatpush1.bf16.msra.mxu0 0
        %902 = vmatprep.subr.bf16.mxu0 0
        %903 = vmatpush1.bf16.msra.mxu0 0
        %904 = vmatprep.subr.bf16.mxu0 0
        %905 = vmatpush1.bf16.msra.mxu0 %v889
        %906 = vmatprep.subr.bf16.mxu0 0
        %907 = vmatpush1.bf16.msra.mxu0 %v888
        %908 = vmatprep.subr.bf16.mxu0 0
        %909 = vmatpush2.bf16.msra.mxu0 0
        %910 = vmatprep.subr.bf16.mxu0 0
        %911 = vmatpush2.bf16.msra.mxu0 0
        %912 = vmatprep.subr.bf16.mxu0 0
        %913 = vmatpush2.bf16.msra.mxu0 0
        %914 = vmatprep.subr.bf16.mxu0 0
        %915 = vmatpush2.bf16.msra.mxu0 0
        %916 = vmatprep.subr.bf16.mxu0 0
        %917 = vmatpush2.bf16.msra.mxu0 0
        %918 = vmatprep.subr.bf16.mxu0 0
        %919 = vmatpush2.bf16.msra.mxu0 0
        %920 = vmatprep.subr.bf16.mxu0 0
        %921 = vmatpush2.bf16.msra.mxu0 0
        %922 = vmatprep.subr.bf16.mxu0 0
        %923 = vmatpush2.bf16.msra.mxu0 0
        %924 = vmatprep.mubr.bf16.mxu0 0
        %925 = vmatmul.mubr.bf16.gmra.mxu0 %v532
        %v926 = vpop.f32.mrf.mxu0
        %v927 = vadd.f32 %v767, %v926
        %v928 = vpop.f32.mrf.mxu0
        %v929 = vpop.f32.mrf.mxu0
        %v930 = vpop.f32.mrf.mxu0
        %931 = vdwg.mxu0
        %v936 = vunpack.c.l.b16 %v743
        %v937 = vunpack.c.l.b16 %v744
        %v938 = vunpack.c.l.b16 %v745
        %v939 = vunpack.c.l.b16 %v746
        %v940 = vpack.c.b16 %v937, %v936
        %v941 = vpack.c.b16 %v939, %v938
        %944 = vmatprep.subr.bf16.mxu0 0
        %945 = vmatpush1.bf16.msra.mxu0 0
        %946 = vmatprep.subr.bf16.mxu0 0
        %947 = vmatpush1.bf16.msra.mxu0 0
        %948 = vmatprep.subr.bf16.mxu0 0
        %949 = vmatpush1.bf16.msra.mxu0 0
        %950 = vmatprep.subr.bf16.mxu0 0
        %951 = vmatpush1.bf16.msra.mxu0 0
        %952 = vmatprep.subr.bf16.mxu0 0
        %953 = vmatpush1.bf16.msra.mxu0 0
        %954 = vmatprep.subr.bf16.mxu0 0
        %955 = vmatpush1.bf16.msra.mxu0 0
        %956 = vmatprep.subr.bf16.mxu0 0
        %957 = vmatpush1.bf16.msra.mxu0 %v941
        %958 = vmatprep.subr.bf16.mxu0 0
        %959 = vmatpush1.bf16.msra.mxu0 %v940
        %960 = vmatprep.subr.bf16.mxu0 0
        %961 = vmatpush2.bf16.msra.mxu0 0
        %962 = vmatprep.subr.bf16.mxu0 0
        %963 = vmatpush2.bf16.msra.mxu0 0
        %964 = vmatprep.subr.bf16.mxu0 0
        %965 = vmatpush2.bf16.msra.mxu0 0
        %966 = vmatprep.subr.bf16.mxu0 0
        %967 = vmatpush2.bf16.msra.mxu0 0
        %968 = vmatprep.subr.bf16.mxu0 0
        %969 = vmatpush2.bf16.msra.mxu0 0
        %970 = vmatprep.subr.bf16.mxu0 0
        %971 = vmatpush2.bf16.msra.mxu0 0
        %972 = vmatprep.subr.bf16.mxu0 0
        %973 = vmatpush2.bf16.msra.mxu0 0
        %974 = vmatprep.subr.bf16.mxu0 0
        %975 = vmatpush2.bf16.msra.mxu0 0
        %976 = vmatprep.mubr.bf16.mxu0 0
        %977 = vmatmul.mubr.bf16.gmra.mxu0 %v532
        %v978 = vpop.f32.mrf.mxu0
        %v979 = vadd.f32 %v771, %v978
        %v980 = vpop.f32.mrf.mxu0
        %v981 = vpop.f32.mrf.mxu0
        %v982 = vpop.f32.mrf.mxu0
        %983 = vdwg.mxu0
        %s984 = scalar_lea.vmem %s3, 128
        %v985 = vld [vmem:[%s984] sm:$0xf]
        %v986 = vld [vmem:[%s984 + $0x4] sm:$0xf]
        %v987 = vld [vmem:[%s984 + $0x8] sm:$0xf]
        %v988 = vld [vmem:[%s984 + $0xc] sm:$0xf]
        %v989 = vld [vmem:[%s984 + $0x10] sm:$0xf]
        %v990 = vld [vmem:[%s984 + $0x14] sm:$0xf]
        %v991 = vld [vmem:[%s984 + $0x18] sm:$0xf]
        %v992 = vld [vmem:[%s984 + $0x1c] sm:$0xf]
        %v993 = vld [vmem:[%s984 + $0x20] sm:$0xf]
        %v994 = vld [vmem:[%s984 + $0x24] sm:$0xf]
        %v995 = vld [vmem:[%s984 + $0x28] sm:$0xf]
        %v996 = vld [vmem:[%s984 + $0x2c] sm:$0xf]
        %v997 = vld [vmem:[%s984 + $0x30] sm:$0xf]
        %v998 = vld [vmem:[%s984 + $0x34] sm:$0xf]
        %v999 = vld [vmem:[%s984 + $0x38] sm:$0xf]
        %v1000 = vld [vmem:[%s984 + $0x3c] sm:$0xf]
        %s1001 = scalar_lea.vmem %s4, 8
        %v1002 = vld [vmem:[%s1001] sm:$0x1]
        %v1003 = vld [vmem:[%s1001 + $0x1] sm:$0x1]
        %v1004 = vld [vmem:[%s1001 + $0x2] sm:$0x1]
        %v1005 = vld [vmem:[%s1001 + $0x3] sm:$0x1]
        %v1010 = vlaneseq
        %v1011 = vshrl.u32 %v1010, 7
        %v1012 = vsub.s32 0, %v1011
        %v1013 = vrot.slane %v1002, %v1012
        %v1014 = vlaneseq
        %v1015 = vshrl.u32 %v1014, 7
        %v1016 = vsub.s32 0, %v1015
        %v1017 = vrot.slane %v1003, %v1016
        %v1018 = vlaneseq
        %v1019 = vshrl.u32 %v1018, 7
        %v1020 = vsub.s32 0, %v1019
        %v1021 = vrot.slane %v1004, %v1020
        %v1022 = vlaneseq
        %v1023 = vshrl.u32 %v1022, 7
        %v1024 = vsub.s32 0, %v1023
        %v1025 = vrot.slane %v1005, %v1024
        %v1034 = vunpack.c.l.b16 %v985
        %v1035 = vunpack.c.l.b16 %v986
        %v1036 = vunpack.c.l.b16 %v987
        %v1037 = vunpack.c.l.b16 %v988
        %v1038 = vpack.c.b16 %v1035, %v1034
        %v1039 = vpack.c.b16 %v1037, %v1036
        %1042 = vmatprep.subr.bf16.mxu0 0
        %1043 = vmatpush1.bf16.msra.mxu0 0
        %1044 = vmatprep.subr.bf16.mxu0 0
        %1045 = vmatpush1.bf16.msra.mxu0 0
        %1046 = vmatprep.subr.bf16.mxu0 0
        %1047 = vmatpush1.bf16.msra.mxu0 0
        %1048 = vmatprep.subr.bf16.mxu0 0
        %1049 = vmatpush1.bf16.msra.mxu0 0
        %1050 = vmatprep.subr.bf16.mxu0 0
        %1051 = vmatpush1.bf16.msra.mxu0 0
        %1052 = vmatprep.subr.bf16.mxu0 0
        %1053 = vmatpush1.bf16.msra.mxu0 0
        %1054 = vmatprep.subr.bf16.mxu0 0
        %1055 = vmatpush1.bf16.msra.mxu0 %v1039
        %1056 = vmatprep.subr.bf16.mxu0 0
        %1057 = vmatpush1.bf16.msra.mxu0 %v1038
        %1058 = vmatprep.subr.bf16.mxu0 0
        %1059 = vmatpush2.bf16.msra.mxu0 0
        %1060 = vmatprep.subr.bf16.mxu0 0
        %1061 = vmatpush2.bf16.msra.mxu0 0
        %1062 = vmatprep.subr.bf16.mxu0 0
        %1063 = vmatpush2.bf16.msra.mxu0 0
        %1064 = vmatprep.subr.bf16.mxu0 0
        %1065 = vmatpush2.bf16.msra.mxu0 0
        %1066 = vmatprep.subr.bf16.mxu0 0
        %1067 = vmatpush2.bf16.msra.mxu0 0
        %1068 = vmatprep.subr.bf16.mxu0 0
        %1069 = vmatpush2.bf16.msra.mxu0 0
        %1070 = vmatprep.subr.bf16.mxu0 0
        %1071 = vmatpush2.bf16.msra.mxu0 0
        %1072 = vmatprep.subr.bf16.mxu0 0
        %1073 = vmatpush2.bf16.msra.mxu0 0
        %1074 = vmatprep.mubr.bf16.mxu0 0
        %1075 = vmatmul.mubr.bf16.gmra.mxu0 %v532
        %v1076 = vpop.f32.mrf.mxu0
        %v1077 = vadd.f32 %v1013, %v1076
        %v1078 = vpop.f32.mrf.mxu0
        %v1079 = vpop.f32.mrf.mxu0
        %v1080 = vpop.f32.mrf.mxu0
        %1081 = vdwg.mxu0
        %v1086 = vunpack.c.l.b16 %v989
        %v1087 = vunpack.c.l.b16 %v990
        %v1088 = vunpack.c.l.b16 %v991
        %v1089 = vunpack.c.l.b16 %v992
        %v1090 = vpack.c.b16 %v1087, %v1086
        %v1091 = vpack.c.b16 %v1089, %v1088
        %1094 = vmatprep.subr.bf16.mxu0 0
        %1095 = vmatpush1.bf16.msra.mxu0 0
        %1096 = vmatprep.subr.bf16.mxu0 0
        %1097 = vmatpush1.bf16.msra.mxu0 0
        %1098 = vmatprep.subr.bf16.mxu0 0
        %1099 = vmatpush1.bf16.msra.mxu0 0
        %1100 = vmatprep.subr.bf16.mxu0 0
        %1101 = vmatpush1.bf16.msra.mxu0 0
        %1102 = vmatprep.subr.bf16.mxu0 0
        %1103 = vmatpush1.bf16.msra.mxu0 0
        %1104 = vmatprep.subr.bf16.mxu0 0
        %1105 = vmatpush1.bf16.msra.mxu0 0
        %1106 = vmatprep.subr.bf16.mxu0 0
        %1107 = vmatpush1.bf16.msra.mxu0 %v1091
        %1108 = vmatprep.subr.bf16.mxu0 0
        %1109 = vmatpush1.bf16.msra.mxu0 %v1090
        %1110 = vmatprep.subr.bf16.mxu0 0
        %1111 = vmatpush2.bf16.msra.mxu0 0
        %1112 = vmatprep.subr.bf16.mxu0 0
        %1113 = vmatpush2.bf16.msra.mxu0 0
        %1114 = vmatprep.subr.bf16.mxu0 0
        %1115 = vmatpush2.bf16.msra.mxu0 0
        %1116 = vmatprep.subr.bf16.mxu0 0
        %1117 = vmatpush2.bf16.msra.mxu0 0
        %1118 = vmatprep.subr.bf16.mxu0 0
        %1119 = vmatpush2.bf16.msra.mxu0 0
        %1120 = vmatprep.subr.bf16.mxu0 0
        %1121 = vmatpush2.bf16.msra.mxu0 0
        %1122 = vmatprep.subr.bf16.mxu0 0
        %1123 = vmatpush2.bf16.msra.mxu0 0
        %1124 = vmatprep.subr.bf16.mxu0 0
        %1125 = vmatpush2.bf16.msra.mxu0 0
        %1126 = vmatprep.mubr.bf16.mxu0 0
        %1127 = vmatmul.mubr.bf16.gmra.mxu0 %v532
        %v1128 = vpop.f32.mrf.mxu0
        %v1129 = vadd.f32 %v1017, %v1128
        %v1130 = vpop.f32.mrf.mxu0
        %v1131 = vpop.f32.mrf.mxu0
        %v1132 = vpop.f32.mrf.mxu0
        %1133 = vdwg.mxu0
        %v1138 = vunpack.c.l.b16 %v993
        %v1139 = vunpack.c.l.b16 %v994
        %v1140 = vunpack.c.l.b16 %v995
        %v1141 = vunpack.c.l.b16 %v996
        %v1142 = vpack.c.b16 %v1139, %v1138
        %v1143 = vpack.c.b16 %v1141, %v1140
        %1146 = vmatprep.subr.bf16.mxu0 0
        %1147 = vmatpush1.bf16.msra.mxu0 0
        %1148 = vmatprep.subr.bf16.mxu0 0
        %1149 = vmatpush1.bf16.msra.mxu0 0
        %1150 = vmatprep.subr.bf16.mxu0 0
        %1151 = vmatpush1.bf16.msra.mxu0 0
        %1152 = vmatprep.subr.bf16.mxu0 0
        %1153 = vmatpush1.bf16.msra.mxu0 0
        %1154 = vmatprep.subr.bf16.mxu0 0
        %1155 = vmatpush1.bf16.msra.mxu0 0
        %1156 = vmatprep.subr.bf16.mxu0 0
        %1157 = vmatpush1.bf16.msra.mxu0 0
        %1158 = vmatprep.subr.bf16.mxu0 0
        %1159 = vmatpush1.bf16.msra.mxu0 %v1143
        %1160 = vmatprep.subr.bf16.mxu0 0
        %1161 = vmatpush1.bf16.msra.mxu0 %v1142
        %1162 = vmatprep.subr.bf16.mxu0 0
        %1163 = vmatpush2.bf16.msra.mxu0 0
        %1164 = vmatprep.subr.bf16.mxu0 0
        %1165 = vmatpush2.bf16.msra.mxu0 0
        %1166 = vmatprep.subr.bf16.mxu0 0
        %1167 = vmatpush2.bf16.msra.mxu0 0
        %1168 = vmatprep.subr.bf16.mxu0 0
        %1169 = vmatpush2.bf16.msra.mxu0 0
        %1170 = vmatprep.subr.bf16.mxu0 0
        %1171 = vmatpush2.bf16.msra.mxu0 0
        %1172 = vmatprep.subr.bf16.mxu0 0
        %1173 = vmatpush2.bf16.msra.mxu0 0
        %1174 = vmatprep.subr.bf16.mxu0 0
        %1175 = vmatpush2.bf16.msra.mxu0 0
        %1176 = vmatprep.subr.bf16.mxu0 0
        %1177 = vmatpush2.bf16.msra.mxu0 0
        %1178 = vmatprep.mubr.bf16.mxu0 0
        %1179 = vmatmul.mubr.bf16.gmra.mxu0 %v532
        %v1180 = vpop.f32.mrf.mxu0
        %v1181 = vadd.f32 %v1021, %v1180
        %v1182 = vpop.f32.mrf.mxu0
        %v1183 = vpop.f32.mrf.mxu0
        %v1184 = vpop.f32.mrf.mxu0
        %1185 = vdwg.mxu0
        %v1190 = vunpack.c.l.b16 %v997
        %v1191 = vunpack.c.l.b16 %v998
        %v1192 = vunpack.c.l.b16 %v999
        %v1193 = vunpack.c.l.b16 %v1000
        %v1194 = vpack.c.b16 %v1191, %v1190
        %v1195 = vpack.c.b16 %v1193, %v1192
        %1198 = vmatprep.subr.bf16.mxu0 0
        %1199 = vmatpush1.bf16.msra.mxu0 0
        %1200 = vmatprep.subr.bf16.mxu0 0
        %1201 = vmatpush1.bf16.msra.mxu0 0
        %1202 = vmatprep.subr.bf16.mxu0 0
        %1203 = vmatpush1.bf16.msra.mxu0 0
        %1204 = vmatprep.subr.bf16.mxu0 0
        %1205 = vmatpush1.bf16.msra.mxu0 0
        %1206 = vmatprep.subr.bf16.mxu0 0
        %1207 = vmatpush1.bf16.msra.mxu0 0
        %1208 = vmatprep.subr.bf16.mxu0 0
        %1209 = vmatpush1.bf16.msra.mxu0 0
        %1210 = vmatprep.subr.bf16.mxu0 0
        %1211 = vmatpush1.bf16.msra.mxu0 %v1195
        %1212 = vmatprep.subr.bf16.mxu0 0
        %1213 = vmatpush1.bf16.msra.mxu0 %v1194
        %1214 = vmatprep.subr.bf16.mxu0 0
        %1215 = vmatpush2.bf16.msra.mxu0 0
        %1216 = vmatprep.subr.bf16.mxu0 0
        %1217 = vmatpush2.bf16.msra.mxu0 0
        %1218 = vmatprep.subr.bf16.mxu0 0
        %1219 = vmatpush2.bf16.msra.mxu0 0
        %1220 = vmatprep.subr.bf16.mxu0 0
        %1221 = vmatpush2.bf16.msra.mxu0 0
        %1222 = vmatprep.subr.bf16.mxu0 0
        %1223 = vmatpush2.bf16.msra.mxu0 0
        %1224 = vmatprep.subr.bf16.mxu0 0
        %1225 = vmatpush2.bf16.msra.mxu0 0
        %1226 = vmatprep.subr.bf16.mxu0 0
        %1227 = vmatpush2.bf16.msra.mxu0 0
        %1228 = vmatprep.subr.bf16.mxu0 0
        %1229 = vmatpush2.bf16.msra.mxu0 0
        %1230 = vmatprep.mubr.bf16.mxu0 0
        %1231 = vmatmul.mubr.bf16.gmra.mxu0 %v532
        %v1232 = vpop.f32.mrf.mxu0
        %v1233 = vadd.f32 %v1025, %v1232
        %v1234 = vpop.f32.mrf.mxu0
        %v1235 = vpop.f32.mrf.mxu0
        %v1236 = vpop.f32.mrf.mxu0
        %1237 = vdwg.mxu0
        %v1238 = vpack.c.bf16 %v569, %v569
        %v1239 = vpack.c.bf16 %v621, %v621
        %v1240 = vpack.c.bf16 %v673, %v673
        %v1241 = vpack.c.bf16 %v725, %v725
        %v1242 = vpack.c.bf16 %v823, %v823
        %v1243 = vpack.c.bf16 %v875, %v875
        %v1244 = vpack.c.bf16 %v927, %v927
        %v1245 = vpack.c.bf16 %v979, %v979
        %vm1246 = vcmask 64512
        %v1248 = vsel %vm1246, %v1238, 0
        %v1251 = vsel %vm1246, %v1242, 0
        %1253 = vmatprep.subr.bf16.mxu0 0
        %1254 = vmatpush1.bf16.xpose.msra.mxu0 0
        %1255 = vmatprep.subr.bf16.mxu0 0
        %1256 = vmatpush1.bf16.xpose.msra.mxu0 0
        %1257 = vmatprep.subr.bf16.mxu0 0
        %1258 = vmatpush1.bf16.xpose.msra.mxu0 0
        %1259 = vmatprep.subr.bf16.mxu0 0
        %1260 = vmatpush1.bf16.xpose.msra.mxu0 0
        %1261 = vmatprep.subr.bf16.mxu0 0
        %1262 = vmatpush1.bf16.xpose.msra.mxu0 0
        %1263 = vmatprep.subr.bf16.mxu0 0
        %1264 = vmatpush1.bf16.xpose.msra.mxu0 0
        %1265 = vmatprep.subr.bf16.mxu0 0
        %1266 = vmatpush1.bf16.xpose.msra.mxu0 0
        %1267 = vmatprep.subr.bf16.mxu0 0
        %1268 = vmatpush1.bf16.xpose.msra.mxu0 %v1251
        %1269 = vmatprep.subr.bf16.mxu0 0
        %1270 = vmatpush2.bf16.xpose.msra.mxu0 0
        %1271 = vmatprep.subr.bf16.mxu0 0
        %1272 = vmatpush2.bf16.xpose.msra.mxu0 0
        %1273 = vmatprep.subr.bf16.mxu0 0
        %1274 = vmatpush2.bf16.xpose.msra.mxu0 0
        %1275 = vmatprep.subr.bf16.mxu0 0
        %1276 = vmatpush2.bf16.xpose.msra.mxu0 0
        %1277 = vmatprep.subr.bf16.mxu0 0
        %1278 = vmatpush2.bf16.xpose.msra.mxu0 0
        %1279 = vmatprep.subr.bf16.mxu0 0
        %1280 = vmatpush2.bf16.xpose.msra.mxu0 0
        %1281 = vmatprep.subr.bf16.mxu0 0
        %1282 = vmatpush2.bf16.xpose.msra.mxu0 0
        %1283 = vmatprep.subr.bf16.mxu0 0
        %1284 = vmatpush2.bf16.xpose.msra.mxu0 0
        %1285 = vmatprep.mubr.bf16.mxu0 0
        %1286 = vmatmul.mubr.bf16.gmra.mxu0 %v1248
        %v1287 = vpop.f32.mrf.mxu0
        %v1288 = vadd.f32 0.0, %v1287
        %v1289 = vpop.f32.mrf.mxu0
        %v1290 = vpop.f32.mrf.mxu0
        %v1291 = vpop.f32.mrf.mxu0
        %1292 = vdwg.mxu0
        %v1294 = vsel %vm1246, %v1239, 0
        %v1297 = vsel %vm1246, %v1243, 0
        %1299 = vmatprep.subr.bf16.mxu0 0
        %1300 = vmatpush1.bf16.xpose.msra.mxu0 0
        %1301 = vmatprep.subr.bf16.mxu0 0
        %1302 = vmatpush1.bf16.xpose.msra.mxu0 0
        %1303 = vmatprep.subr.bf16.mxu0 0
        %1304 = vmatpush1.bf16.xpose.msra.mxu0 0
        %1305 = vmatprep.subr.bf16.mxu0 0
        %1306 = vmatpush1.bf16.xpose.msra.mxu0 0
        %1307 = vmatprep.subr.bf16.mxu0 0
        %1308 = vmatpush1.bf16.xpose.msra.mxu0 0
        %1309 = vmatprep.subr.bf16.mxu0 0
        %1310 = vmatpush1.bf16.xpose.msra.mxu0 0
        %1311 = vmatprep.subr.bf16.mxu0 0
        %1312 = vmatpush1.bf16.xpose.msra.mxu0 0
        %1313 = vmatprep.subr.bf16.mxu0 0
        %1314 = vmatpush1.bf16.xpose.msra.mxu0 %v1297
        %1315 = vmatprep.subr.bf16.mxu0 0
        %1316 = vmatpush2.bf16.xpose.msra.mxu0 0
        %1317 = vmatprep.subr.bf16.mxu0 0
        %1318 = vmatpush2.bf16.xpose.msra.mxu0 0
        %1319 = vmatprep.subr.bf16.mxu0 0
        %1320 = vmatpush2.bf16.xpose.msra.mxu0 0
        %1321 = vmatprep.subr.bf16.mxu0 0
        %1322 = vmatpush2.bf16.xpose.msra.mxu0 0
        %1323 = vmatprep.subr.bf16.mxu0 0
        %1324 = vmatpush2.bf16.xpose.msra.mxu0 0
        %1325 = vmatprep.subr.bf16.mxu0 0
        %1326 = vmatpush2.bf16.xpose.msra.mxu0 0
        %1327 = vmatprep.subr.bf16.mxu0 0
        %1328 = vmatpush2.bf16.xpose.msra.mxu0 0
        %1329 = vmatprep.subr.bf16.mxu0 0
        %1330 = vmatpush2.bf16.xpose.msra.mxu0 0
        %1331 = vmatprep.mubr.bf16.mxu0 0
        %1332 = vmatmul.mubr.bf16.gmra.mxu0 %v1294
        %v1333 = vpop.f32.mrf.mxu0
        %v1334 = vadd.f32 0.0, %v1333
        %v1335 = vpop.f32.mrf.mxu0
        %v1336 = vpop.f32.mrf.mxu0
        %v1337 = vpop.f32.mrf.mxu0
        %1338 = vdwg.mxu0
        %v1340 = vsel %vm1246, %v1240, 0
        %v1343 = vsel %vm1246, %v1244, 0
        %1345 = vmatprep.subr.bf16.mxu0 0
        %1346 = vmatpush1.bf16.xpose.msra.mxu0 0
        %1347 = vmatprep.subr.bf16.mxu0 0
        %1348 = vmatpush1.bf16.xpose.msra.mxu0 0
        %1349 = vmatprep.subr.bf16.mxu0 0
        %1350 = vmatpush1.bf16.xpose.msra.mxu0 0
        %1351 = vmatprep.subr.bf16.mxu0 0
        %1352 = vmatpush1.bf16.xpose.msra.mxu0 0
        %1353 = vmatprep.subr.bf16.mxu0 0
        %1354 = vmatpush1.bf16.xpose.msra.mxu0 0
        %1355 = vmatprep.subr.bf16.mxu0 0
        %1356 = vmatpush1.bf16.xpose.msra.mxu0 0
        %1357 = vmatprep.subr.bf16.mxu0 0
        %1358 = vmatpush1.bf16.xpose.msra.mxu0 0
        %1359 = vmatprep.subr.bf16.mxu0 0
        %1360 = vmatpush1.bf16.xpose.msra.mxu0 %v1343
        %1361 = vmatprep.subr.bf16.mxu0 0
        %1362 = vmatpush2.bf16.xpose.msra.mxu0 0
        %1363 = vmatprep.subr.bf16.mxu0 0
        %1364 = vmatpush2.bf16.xpose.msra.mxu0 0
        %1365 = vmatprep.subr.bf16.mxu0 0
        %1366 = vmatpush2.bf16.xpose.msra.mxu0 0
        %1367 = vmatprep.subr.bf16.mxu0 0
        %1368 = vmatpush2.bf16.xpose.msra.mxu0 0
        %1369 = vmatprep.subr.bf16.mxu0 0
        %1370 = vmatpush2.bf16.xpose.msra.mxu0 0
        %1371 = vmatprep.subr.bf16.mxu0 0
        %1372 = vmatpush2.bf16.xpose.msra.mxu0 0
        %1373 = vmatprep.subr.bf16.mxu0 0
        %1374 = vmatpush2.bf16.xpose.msra.mxu0 0
        %1375 = vmatprep.subr.bf16.mxu0 0
        %1376 = vmatpush2.bf16.xpose.msra.mxu0 0
        %1377 = vmatprep.mubr.bf16.mxu0 0
        %1378 = vmatmul.mubr.bf16.gmra.mxu0 %v1340
        %v1379 = vpop.f32.mrf.mxu0
        %v1380 = vadd.f32 0.0, %v1379
        %v1381 = vpop.f32.mrf.mxu0
        %v1382 = vpop.f32.mrf.mxu0
        %v1383 = vpop.f32.mrf.mxu0
        %1384 = vdwg.mxu0
        %v1386 = vsel %vm1246, %v1241, 0
        %v1389 = vsel %vm1246, %v1245, 0
        %1391 = vmatprep.subr.bf16.mxu0 0
        %1392 = vmatpush1.bf16.xpose.msra.mxu0 0
        %1393 = vmatprep.subr.bf16.mxu0 0
        %1394 = vmatpush1.bf16.xpose.msra.mxu0 0
        %1395 = vmatprep.subr.bf16.mxu0 0
        %1396 = vmatpush1.bf16.xpose.msra.mxu0 0
        %1397 = vmatprep.subr.bf16.mxu0 0
        %1398 = vmatpush1.bf16.xpose.msra.mxu0 0
        %1399 = vmatprep.subr.bf16.mxu0 0
        %1400 = vmatpush1.bf16.xpose.msra.mxu0 0
        %1401 = vmatprep.subr.bf16.mxu0 0
        %1402 = vmatpush1.bf16.xpose.msra.mxu0 0
        %1403 = vmatprep.subr.bf16.mxu0 0
        %1404 = vmatpush1.bf16.xpose.msra.mxu0 0
        %1405 = vmatprep.subr.bf16.mxu0 0
        %1406 = vmatpush1.bf16.xpose.msra.mxu0 %v1389
        %1407 = vmatprep.subr.bf16.mxu0 0
        %1408 = vmatpush2.bf16.xpose.msra.mxu0 0
        %1409 = vmatprep.subr.bf16.mxu0 0
        %1410 = vmatpush2.bf16.xpose.msra.mxu0 0
        %1411 = vmatprep.subr.bf16.mxu0 0
        %1412 = vmatpush2.bf16.xpose.msra.mxu0 0
        %1413 = vmatprep.subr.bf16.mxu0 0
        %1414 = vmatpush2.bf16.xpose.msra.mxu0 0
        %1415 = vmatprep.subr.bf16.mxu0 0
        %1416 = vmatpush2.bf16.xpose.msra.mxu0 0
        %1417 = vmatprep.subr.bf16.mxu0 0
        %1418 = vmatpush2.bf16.xpose.msra.mxu0 0
        %1419 = vmatprep.subr.bf16.mxu0 0
        %1420 = vmatpush2.bf16.xpose.msra.mxu0 0
        %1421 = vmatprep.subr.bf16.mxu0 0
        %1422 = vmatpush2.bf16.xpose.msra.mxu0 0
        %1423 = vmatprep.mubr.bf16.mxu0 0
        %1424 = vmatmul.mubr.bf16.gmra.mxu0 %v1386
        %v1425 = vpop.f32.mrf.mxu0
        %v1426 = vadd.f32 0.0, %v1425
        %v1427 = vpop.f32.mrf.mxu0
        %v1428 = vpop.f32.mrf.mxu0
        %v1429 = vpop.f32.mrf.mxu0
        %1430 = vdwg.mxu0
        %v1431 = vsel %vm1246, %v1288, -inf
        %1432 = vmax.xlane.f32.xlu0 %v1431
        %v1433 = vpop.xlane.xlu0 %1432
        %v1434 = vsel %vm1246, %v1334, -inf
        %1435 = vmax.xlane.f32.xlu0 %v1434
        %v1436 = vpop.xlane.xlu0 %1435
        %v1437 = vsel %vm1246, %v1380, -inf
        %1438 = vmax.xlane.f32.xlu0 %v1437
        %v1439 = vpop.xlane.xlu0 %1438
        %v1440 = vsel %vm1246, %v1426, -inf
        %1441 = vmax.xlane.f32.xlu0 %v1440
        %v1442 = vpop.xlane.xlu0 %1441
        %v1443 = vsub.f32 %v1288, %v1433
        %v1444 = vsub.f32 %v1334, %v1436
        %v1445 = vsub.f32 %v1380, %v1439
        %v1446 = vsub.f32 %v1426, %v1442
        %v1447 = vmul.f32 %v1443, 1.442695
        %v1448 = vpow.pop %v1447
        %v1449 = vmul.f32 %v1444, 1.442695
        %v1450 = vpow.pop %v1449
        %v1451 = vmul.f32 %v1445, 1.442695
        %v1452 = vpow.pop %v1451
        %v1453 = vmul.f32 %v1446, 1.442695
        %v1454 = vpow.pop %v1453
        %v1455 = vsel %vm1246, %v1448, 0.0
        %1456 = vadd.xlane.f32.xlu0 %v1455
        %v1457 = vpop.xlane.xlu0 %1456
        %v1458 = vsel %vm1246, %v1450, 0.0
        %1459 = vadd.xlane.f32.xlu0 %v1458
        %v1460 = vpop.xlane.xlu0 %1459
        %v1461 = vsel %vm1246, %v1452, 0.0
        %1462 = vadd.xlane.f32.xlu0 %v1461
        %v1463 = vpop.xlane.xlu0 %1462
        %v1464 = vsel %vm1246, %v1454, 0.0
        %1465 = vadd.xlane.f32.xlu0 %v1464
        %v1466 = vpop.xlane.xlu0 %1465
        %v1467 = vrcp.pop %v1457
        %v1468 = vrcp.pop %v1460
        %v1469 = vrcp.pop %v1463
        %v1470 = vrcp.pop %v1466
        %v1471 = vmul.f32 %v1448, %v1467
        %v1472 = vmul.f32 %v1450, %v1468
        %v1473 = vmul.f32 %v1452, %v1469
        %v1474 = vmul.f32 %v1454, %v1470
        %v1475 = vpack.c.bf16 %v1471, %v1471
        %v1476 = vpack.c.bf16 %v1472, %v1472
        %v1477 = vpack.c.bf16 %v1473, %v1473
        %v1478 = vpack.c.bf16 %v1474, %v1474
        %v1479 = vpack.c.bf16 %v1077, %v1077
        %v1480 = vpack.c.bf16 %v1129, %v1129
        %v1481 = vpack.c.bf16 %v1181, %v1181
        %v1482 = vpack.c.bf16 %v1233, %v1233
        %v1484 = vsel %vm1246, %v1475, 0
        %vm1486 = vcmask 1043456
        %v1488 = vsel %vm1486, %v1479, 0
        %1490 = vmatprep.subr.bf16.mxu0 0
        %1491 = vmatpush1.bf16.msra.mxu0 0
        %1492 = vmatprep.subr.bf16.mxu0 0
        %1493 = vmatpush1.bf16.msra.mxu0 0
        %1494 = vmatprep.subr.bf16.mxu0 0
        %1495 = vmatpush1.bf16.msra.mxu0 0
        %1496 = vmatprep.subr.bf16.mxu0 0
        %1497 = vmatpush1.bf16.msra.mxu0 0
        %1498 = vmatprep.subr.bf16.mxu0 0
        %1499 = vmatpush1.bf16.msra.mxu0 0
        %1500 = vmatprep.subr.bf16.mxu0 0
        %1501 = vmatpush1.bf16.msra.mxu0 0
        %1502 = vmatprep.subr.bf16.mxu0 0
        %1503 = vmatpush1.bf16.msra.mxu0 0
        %1504 = vmatprep.subr.bf16.mxu0 0
        %1505 = vmatpush1.bf16.msra.mxu0 %v1488
        %1506 = vmatprep.subr.bf16.mxu0 0
        %1507 = vmatpush2.bf16.msra.mxu0 0
        %1508 = vmatprep.subr.bf16.mxu0 0
        %1509 = vmatpush2.bf16.msra.mxu0 0
        %1510 = vmatprep.subr.bf16.mxu0 0
        %1511 = vmatpush2.bf16.msra.mxu0 0
        %1512 = vmatprep.subr.bf16.mxu0 0
        %1513 = vmatpush2.bf16.msra.mxu0 0
        %1514 = vmatprep.subr.bf16.mxu0 0
        %1515 = vmatpush2.bf16.msra.mxu0 0
        %1516 = vmatprep.subr.bf16.mxu0 0
        %1517 = vmatpush2.bf16.msra.mxu0 0
        %1518 = vmatprep.subr.bf16.mxu0 0
        %1519 = vmatpush2.bf16.msra.mxu0 0
        %1520 = vmatprep.subr.bf16.mxu0 0
        %1521 = vmatpush2.bf16.msra.mxu0 0
        %1522 = vmatprep.mubr.bf16.mxu0 0
        %1523 = vmatmul.mubr.bf16.gmra.mxu0 %v1484
        %v1524 = vpop.f32.mrf.mxu0
        %v1525 = vadd.f32 0.0, %v1524
        %v1526 = vpop.f32.mrf.mxu0
        %v1527 = vpop.f32.mrf.mxu0
        %v1528 = vpop.f32.mrf.mxu0
        %1529 = vdwg.mxu0
        %v1531 = vsel %vm1246, %v1476, 0
        %v1534 = vsel %vm1486, %v1480, 0
        %1536 = vmatprep.subr.bf16.mxu0 0
        %1537 = vmatpush1.bf16.msra.mxu0 0
        %1538 = vmatprep.subr.bf16.mxu0 0
        %1539 = vmatpush1.bf16.msra.mxu0 0
        %1540 = vmatprep.subr.bf16.mxu0 0
        %1541 = vmatpush1.bf16.msra.mxu0 0
        %1542 = vmatprep.subr.bf16.mxu0 0
        %1543 = vmatpush1.bf16.msra.mxu0 0
        %1544 = vmatprep.subr.bf16.mxu0 0
        %1545 = vmatpush1.bf16.msra.mxu0 0
        %1546 = vmatprep.subr.bf16.mxu0 0
        %1547 = vmatpush1.bf16.msra.mxu0 0
        %1548 = vmatprep.subr.bf16.mxu0 0
        %1549 = vmatpush1.bf16.msra.mxu0 0
        %1550 = vmatprep.subr.bf16.mxu0 0
        %1551 = vmatpush1.bf16.msra.mxu0 %v1534
        %1552 = vmatprep.subr.bf16.mxu0 0
        %1553 = vmatpush2.bf16.msra.mxu0 0
        %1554 = vmatprep.subr.bf16.mxu0 0
        %1555 = vmatpush2.bf16.msra.mxu0 0
        %1556 = vmatprep.subr.bf16.mxu0 0
        %1557 = vmatpush2.bf16.msra.mxu0 0
        %1558 = vmatprep.subr.bf16.mxu0 0
        %1559 = vmatpush2.bf16.msra.mxu0 0
        %1560 = vmatprep.subr.bf16.mxu0 0
        %1561 = vmatpush2.bf16.msra.mxu0 0
        %1562 = vmatprep.subr.bf16.mxu0 0
        %1563 = vmatpush2.bf16.msra.mxu0 0
        %1564 = vmatprep.subr.bf16.mxu0 0
        %1565 = vmatpush2.bf16.msra.mxu0 0
        %1566 = vmatprep.subr.bf16.mxu0 0
        %1567 = vmatpush2.bf16.msra.mxu0 0
        %1568 = vmatprep.mubr.bf16.mxu0 0
        %1569 = vmatmul.mubr.bf16.gmra.mxu0 %v1531
        %v1570 = vpop.f32.mrf.mxu0
        %v1571 = vadd.f32 0.0, %v1570
        %v1572 = vpop.f32.mrf.mxu0
        %v1573 = vpop.f32.mrf.mxu0
        %v1574 = vpop.f32.mrf.mxu0
        %1575 = vdwg.mxu0
        %v1577 = vsel %vm1246, %v1477, 0
        %v1580 = vsel %vm1486, %v1481, 0
        %1582 = vmatprep.subr.bf16.mxu0 0
        %1583 = vmatpush1.bf16.msra.mxu0 0
        %1584 = vmatprep.subr.bf16.mxu0 0
        %1585 = vmatpush1.bf16.msra.mxu0 0
        %1586 = vmatprep.subr.bf16.mxu0 0
        %1587 = vmatpush1.bf16.msra.mxu0 0
        %1588 = vmatprep.subr.bf16.mxu0 0
        %1589 = vmatpush1.bf16.msra.mxu0 0
        %1590 = vmatprep.subr.bf16.mxu0 0
        %1591 = vmatpush1.bf16.msra.mxu0 0
        %1592 = vmatprep.subr.bf16.mxu0 0
        %1593 = vmatpush1.bf16.msra.mxu0 0
        %1594 = vmatprep.subr.bf16.mxu0 0
        %1595 = vmatpush1.bf16.msra.mxu0 0
        %1596 = vmatprep.subr.bf16.mxu0 0
        %1597 = vmatpush1.bf16.msra.mxu0 %v1580
        %1598 = vmatprep.subr.bf16.mxu0 0
        %1599 = vmatpush2.bf16.msra.mxu0 0
        %1600 = vmatprep.subr.bf16.mxu0 0
        %1601 = vmatpush2.bf16.msra.mxu0 0
        %1602 = vmatprep.subr.bf16.mxu0 0
        %1603 = vmatpush2.bf16.msra.mxu0 0
        %1604 = vmatprep.subr.bf16.mxu0 0
        %1605 = vmatpush2.bf16.msra.mxu0 0
        %1606 = vmatprep.subr.bf16.mxu0 0
        %1607 = vmatpush2.bf16.msra.mxu0 0
        %1608 = vmatprep.subr.bf16.mxu0 0
        %1609 = vmatpush2.bf16.msra.mxu0 0
        %1610 = vmatprep.subr.bf16.mxu0 0
        %1611 = vmatpush2.bf16.msra.mxu0 0
        %1612 = vmatprep.subr.bf16.mxu0 0
        %1613 = vmatpush2.bf16.msra.mxu0 0
        %1614 = vmatprep.mubr.bf16.mxu0 0
        %1615 = vmatmul.mubr.bf16.gmra.mxu0 %v1577
        %v1616 = vpop.f32.mrf.mxu0
        %v1617 = vadd.f32 0.0, %v1616
        %v1618 = vpop.f32.mrf.mxu0
        %v1619 = vpop.f32.mrf.mxu0
        %v1620 = vpop.f32.mrf.mxu0
        %1621 = vdwg.mxu0
        %v1623 = vsel %vm1246, %v1478, 0
        %v1626 = vsel %vm1486, %v1482, 0
        %1628 = vmatprep.subr.bf16.mxu0 0
        %1629 = vmatpush1.bf16.msra.mxu0 0
        %1630 = vmatprep.subr.bf16.mxu0 0
        %1631 = vmatpush1.bf16.msra.mxu0 0
        %1632 = vmatprep.subr.bf16.mxu0 0
        %1633 = vmatpush1.bf16.msra.mxu0 0
        %1634 = vmatprep.subr.bf16.mxu0 0
        %1635 = vmatpush1.bf16.msra.mxu0 0
        %1636 = vmatprep.subr.bf16.mxu0 0
        %1637 = vmatpush1.bf16.msra.mxu0 0
        %1638 = vmatprep.subr.bf16.mxu0 0
        %1639 = vmatpush1.bf16.msra.mxu0 0
        %1640 = vmatprep.subr.bf16.mxu0 0
        %1641 = vmatpush1.bf16.msra.mxu0 0
        %1642 = vmatprep.subr.bf16.mxu0 0
        %1643 = vmatpush1.bf16.msra.mxu0 %v1626
        %1644 = vmatprep.subr.bf16.mxu0 0
        %1645 = vmatpush2.bf16.msra.mxu0 0
        %1646 = vmatprep.subr.bf16.mxu0 0
        %1647 = vmatpush2.bf16.msra.mxu0 0
        %1648 = vmatprep.subr.bf16.mxu0 0
        %1649 = vmatpush2.bf16.msra.mxu0 0
        %1650 = vmatprep.subr.bf16.mxu0 0
        %1651 = vmatpush2.bf16.msra.mxu0 0
        %1652 = vmatprep.subr.bf16.mxu0 0
        %1653 = vmatpush2.bf16.msra.mxu0 0
        %1654 = vmatprep.subr.bf16.mxu0 0
        %1655 = vmatpush2.bf16.msra.mxu0 0
        %1656 = vmatprep.subr.bf16.mxu0 0
        %1657 = vmatpush2.bf16.msra.mxu0 0
        %1658 = vmatprep.subr.bf16.mxu0 0
        %1659 = vmatpush2.bf16.msra.mxu0 0
        %1660 = vmatprep.mubr.bf16.mxu0 0
        %1661 = vmatmul.mubr.bf16.gmra.mxu0 %v1623
        %v1662 = vpop.f32.mrf.mxu0
        %v1663 = vadd.f32 0.0, %v1662
        %v1664 = vpop.f32.mrf.mxu0
        %v1665 = vpop.f32.mrf.mxu0
        %v1666 = vpop.f32.mrf.mxu0
        %1667 = vdwg.mxu0
        %v1668 = vpack.c.bf16 %v1525, %v1525
        %v1669 = vpack.c.bf16 %v1571, %v1571
        %v1670 = vpack.c.bf16 %v1617, %v1617
        %v1671 = vpack.c.bf16 %v1663, %v1663
        %v1672 = vld [vmem:[%s5] sm:$0xf]
        %v1673 = vld [vmem:[%s5 + $0x4] sm:$0xf]
        %v1674 = vld [vmem:[%s5 + $0x8] sm:$0xf]
        %v1675 = vld [vmem:[%s5 + $0xc] sm:$0xf]
        %v1677 = vsel %vm1246, %v1668, 0
        %v1680 = vsel %vm1486, %v1672, 0
        %1682 = vmatprep.subr.bf16.mxu0 0
        %1683 = vmatpush1.bf16.msra.mxu0 0
        %1684 = vmatprep.subr.bf16.mxu0 0
        %1685 = vmatpush1.bf16.msra.mxu0 0
        %1686 = vmatprep.subr.bf16.mxu0 0
        %1687 = vmatpush1.bf16.msra.mxu0 0
        %1688 = vmatprep.subr.bf16.mxu0 0
        %1689 = vmatpush1.bf16.msra.mxu0 0
        %1690 = vmatprep.subr.bf16.mxu0 0
        %1691 = vmatpush1.bf16.msra.mxu0 0
        %1692 = vmatprep.subr.bf16.mxu0 0
        %1693 = vmatpush1.bf16.msra.mxu0 0
        %1694 = vmatprep.subr.bf16.mxu0 0
        %1695 = vmatpush1.bf16.msra.mxu0 0
        %1696 = vmatprep.subr.bf16.mxu0 0
        %1697 = vmatpush1.bf16.msra.mxu0 %v1680
        %1698 = vmatprep.subr.bf16.mxu0 0
        %1699 = vmatpush2.bf16.msra.mxu0 0
        %1700 = vmatprep.subr.bf16.mxu0 0
        %1701 = vmatpush2.bf16.msra.mxu0 0
        %1702 = vmatprep.subr.bf16.mxu0 0
        %1703 = vmatpush2.bf16.msra.mxu0 0
        %1704 = vmatprep.subr.bf16.mxu0 0
        %1705 = vmatpush2.bf16.msra.mxu0 0
        %1706 = vmatprep.subr.bf16.mxu0 0
        %1707 = vmatpush2.bf16.msra.mxu0 0
        %1708 = vmatprep.subr.bf16.mxu0 0
        %1709 = vmatpush2.bf16.msra.mxu0 0
        %1710 = vmatprep.subr.bf16.mxu0 0
        %1711 = vmatpush2.bf16.msra.mxu0 0
        %1712 = vmatprep.subr.bf16.mxu0 0
        %1713 = vmatpush2.bf16.msra.mxu0 0
        %1714 = vmatprep.mubr.bf16.mxu0 0
        %1715 = vmatmul.mubr.bf16.gmra.mxu0 %v1677
        %v1716 = vpop.f32.mrf.mxu0
        %v1717 = vadd.f32 0.0, %v1716
        %v1718 = vpop.f32.mrf.mxu0
        %v1719 = vpop.f32.mrf.mxu0
        %v1720 = vpop.f32.mrf.mxu0
        %1721 = vdwg.mxu0
        %v1723 = vsel %vm1246, %v1669, 0
        %v1726 = vsel %vm1486, %v1673, 0
        %1728 = vmatprep.subr.bf16.mxu0 0
        %1729 = vmatpush1.bf16.msra.mxu0 0
        %1730 = vmatprep.subr.bf16.mxu0 0
        %1731 = vmatpush1.bf16.msra.mxu0 0
        %1732 = vmatprep.subr.bf16.mxu0 0
        %1733 = vmatpush1.bf16.msra.mxu0 0
        %1734 = vmatprep.subr.bf16.mxu0 0
        %1735 = vmatpush1.bf16.msra.mxu0 0
        %1736 = vmatprep.subr.bf16.mxu0 0
        %1737 = vmatpush1.bf16.msra.mxu0 0
        %1738 = vmatprep.subr.bf16.mxu0 0
        %1739 = vmatpush1.bf16.msra.mxu0 0
        %1740 = vmatprep.subr.bf16.mxu0 0
        %1741 = vmatpush1.bf16.msra.mxu0 0
        %1742 = vmatprep.subr.bf16.mxu0 0
        %1743 = vmatpush1.bf16.msra.mxu0 %v1726
        %1744 = vmatprep.subr.bf16.mxu0 0
        %1745 = vmatpush2.bf16.msra.mxu0 0
        %1746 = vmatprep.subr.bf16.mxu0 0
        %1747 = vmatpush2.bf16.msra.mxu0 0
        %1748 = vmatprep.subr.bf16.mxu0 0
        %1749 = vmatpush2.bf16.msra.mxu0 0
        %1750 = vmatprep.subr.bf16.mxu0 0
        %1751 = vmatpush2.bf16.msra.mxu0 0
        %1752 = vmatprep.subr.bf16.mxu0 0
        %1753 = vmatpush2.bf16.msra.mxu0 0
        %1754 = vmatprep.subr.bf16.mxu0 0
        %1755 = vmatpush2.bf16.msra.mxu0 0
        %1756 = vmatprep.subr.bf16.mxu0 0
        %1757 = vmatpush2.bf16.msra.mxu0 0
        %1758 = vmatprep.subr.bf16.mxu0 0
        %1759 = vmatpush2.bf16.msra.mxu0 0
        %1760 = vmatprep.mubr.bf16.mxu0 0
        %1761 = vmatmul.mubr.bf16.gmra.mxu0 %v1723
        %v1762 = vpop.f32.mrf.mxu0
        %v1763 = vadd.f32 0.0, %v1762
        %v1764 = vpop.f32.mrf.mxu0
        %v1765 = vpop.f32.mrf.mxu0
        %v1766 = vpop.f32.mrf.mxu0
        %1767 = vdwg.mxu0
        %v1769 = vsel %vm1246, %v1670, 0
        %v1772 = vsel %vm1486, %v1674, 0
        %1774 = vmatprep.subr.bf16.mxu0 0
        %1775 = vmatpush1.bf16.msra.mxu0 0
        %1776 = vmatprep.subr.bf16.mxu0 0
        %1777 = vmatpush1.bf16.msra.mxu0 0
        %1778 = vmatprep.subr.bf16.mxu0 0
        %1779 = vmatpush1.bf16.msra.mxu0 0
        %1780 = vmatprep.subr.bf16.mxu0 0
        %1781 = vmatpush1.bf16.msra.mxu0 0
        %1782 = vmatprep.subr.bf16.mxu0 0
        %1783 = vmatpush1.bf16.msra.mxu0 0
        %1784 = vmatprep.subr.bf16.mxu0 0
        %1785 = vmatpush1.bf16.msra.mxu0 0
        %1786 = vmatprep.subr.bf16.mxu0 0
        %1787 = vmatpush1.bf16.msra.mxu0 0
        %1788 = vmatprep.subr.bf16.mxu0 0
        %1789 = vmatpush1.bf16.msra.mxu0 %v1772
        %1790 = vmatprep.subr.bf16.mxu0 0
        %1791 = vmatpush2.bf16.msra.mxu0 0
        %1792 = vmatprep.subr.bf16.mxu0 0
        %1793 = vmatpush2.bf16.msra.mxu0 0
        %1794 = vmatprep.subr.bf16.mxu0 0
        %1795 = vmatpush2.bf16.msra.mxu0 0
        %1796 = vmatprep.subr.bf16.mxu0 0
        %1797 = vmatpush2.bf16.msra.mxu0 0
        %1798 = vmatprep.subr.bf16.mxu0 0
        %1799 = vmatpush2.bf16.msra.mxu0 0
        %1800 = vmatprep.subr.bf16.mxu0 0
        %1801 = vmatpush2.bf16.msra.mxu0 0
        %1802 = vmatprep.subr.bf16.mxu0 0
        %1803 = vmatpush2.bf16.msra.mxu0 0
        %1804 = vmatprep.subr.bf16.mxu0 0
        %1805 = vmatpush2.bf16.msra.mxu0 0
        %1806 = vmatprep.mubr.bf16.mxu0 0
        %1807 = vmatmul.mubr.bf16.gmra.mxu0 %v1769
        %v1808 = vpop.f32.mrf.mxu0
        %v1809 = vadd.f32 0.0, %v1808
        %v1810 = vpop.f32.mrf.mxu0
        %v1811 = vpop.f32.mrf.mxu0
        %v1812 = vpop.f32.mrf.mxu0
        %1813 = vdwg.mxu0
        %v1815 = vsel %vm1246, %v1671, 0
        %v1818 = vsel %vm1486, %v1675, 0
        %1820 = vmatprep.subr.bf16.mxu0 0
        %1821 = vmatpush1.bf16.msra.mxu0 0
        %1822 = vmatprep.subr.bf16.mxu0 0
        %1823 = vmatpush1.bf16.msra.mxu0 0
        %1824 = vmatprep.subr.bf16.mxu0 0
        %1825 = vmatpush1.bf16.msra.mxu0 0
        %1826 = vmatprep.subr.bf16.mxu0 0
        %1827 = vmatpush1.bf16.msra.mxu0 0
        %1828 = vmatprep.subr.bf16.mxu0 0
        %1829 = vmatpush1.bf16.msra.mxu0 0
        %1830 = vmatprep.subr.bf16.mxu0 0
        %1831 = vmatpush1.bf16.msra.mxu0 0
        %1832 = vmatprep.subr.bf16.mxu0 0
        %1833 = vmatpush1.bf16.msra.mxu0 0
        %1834 = vmatprep.subr.bf16.mxu0 0
        %1835 = vmatpush1.bf16.msra.mxu0 %v1818
        %1836 = vmatprep.subr.bf16.mxu0 0
        %1837 = vmatpush2.bf16.msra.mxu0 0
        %1838 = vmatprep.subr.bf16.mxu0 0
        %1839 = vmatpush2.bf16.msra.mxu0 0
        %1840 = vmatprep.subr.bf16.mxu0 0
        %1841 = vmatpush2.bf16.msra.mxu0 0
        %1842 = vmatprep.subr.bf16.mxu0 0
        %1843 = vmatpush2.bf16.msra.mxu0 0
        %1844 = vmatprep.subr.bf16.mxu0 0
        %1845 = vmatpush2.bf16.msra.mxu0 0
        %1846 = vmatprep.subr.bf16.mxu0 0
        %1847 = vmatpush2.bf16.msra.mxu0 0
        %1848 = vmatprep.subr.bf16.mxu0 0
        %1849 = vmatpush2.bf16.msra.mxu0 0
        %1850 = vmatprep.subr.bf16.mxu0 0
        %1851 = vmatpush2.bf16.msra.mxu0 0
        %1852 = vmatprep.mubr.bf16.mxu0 0
        %1853 = vmatmul.mubr.bf16.gmra.mxu0 %v1815
        %v1854 = vpop.f32.mrf.mxu0
        %v1855 = vadd.f32 0.0, %v1854
        %v1856 = vpop.f32.mrf.mxu0
        %v1857 = vpop.f32.mrf.mxu0
        %v1858 = vpop.f32.mrf.mxu0
        %1859 = vdwg.mxu0
        %v1860 = vsel %vm430, %v1717, 0.0
        %v1861 = vsel %vm430, %v1763, 0.0
        %v1862 = vadd.f32 %v1860, %v1861
        %v1863 = vsel %vm430, %v1809, 0.0
        %v1864 = vadd.f32 %v1862, %v1863
        %v1865 = vsel %vm430, %v1855, 0.0
        %v1866 = vadd.f32 %v1864, %v1865
        %v1867 = vld [vmem:[%s6] sm:$0x1]
        %v1868 = vlaneseq
        %v1869 = vshrl.u32 %v1868, 7
        %v1870 = vsub.s32 0, %v1869
        %v1871 = vrot.slane %v1867, %v1870
        %v1872 = vadd.f32 %v1866, %v1871
        %v1873 = vadd.f32 %v469, %v1872
        %v1874 = vld [vmem:[%s6 + $0x1] sm:$0x1]
        %v1875 = vld [vmem:[%s6 + $0x2] sm:$0x1]
        %v1876 = vsel %vm430, %v1873, 0.0
        %1877 = vadd.xlane.f32.xlu0 %v1876
        %v1878 = vpop.xlane.xlu0 %1877
        %v1879 = vrcp.pop 32.0
        %v1880 = vmul.f32 %v1878, %v1879
        %v1881 = vsub.f32 %v1873, %v1880
        %v1882 = vmul.f32 %v1881, %v1881
        %v1883 = vsel %vm430, %v1882, 0.0
        %1884 = vadd.xlane.f32.xlu0 %v1883
        %v1885 = vpop.xlane.xlu0 %1884
        %v1886 = vmul.f32 %v1885, %v1879
        %v1887 = vadd.f32 %v1886, 1e-05
        %v1888 = vrsqrt.pop %v1887
        %v1889 = vmul.f32 %v1881, %v1888
        %v1890 = vlaneseq
        %v1891 = vshrl.u32 %v1890, 7
        %v1892 = vsub.s32 0, %v1891
        %v1893 = vrot.slane %v1874, %v1892
        %v1894 = vmul.f32 %v1889, %v1893
        %v1895 = vlaneseq
        %v1896 = vshrl.u32 %v1895, 7
        %v1897 = vsub.s32 0, %v1896
        %v1898 = vrot.slane %v1875, %v1897
        %v1899 = vadd.f32 %v1894, %v1898
        %v1900 = vpack.c.bf16 %v1899, %v1899
        %v1901 = vld [vmem:[%s7] sm:$0xf]
        %v1902 = vld [vmem:[%s7 + $0x4] sm:$0xf]
        %v1903 = vld [vmem:[%s7 + $0x8] sm:$0xf]
        %v1904 = vld [vmem:[%s7 + $0xc] sm:$0xf]
        %v1905 = vld [vmem:[%s8] sm:$0x1]
        %v1907 = vlaneseq
        %v1908 = vshrl.u32 %v1907, 7
        %v1909 = vsub.s32 0, %v1908
        %v1910 = vrot.slane %v1905, %v1909
        %v1916 = vunpack.c.l.b16 %v1901
        %v1917 = vunpack.c.l.b16 %v1902
        %v1918 = vunpack.c.l.b16 %v1903
        %v1919 = vunpack.c.l.b16 %v1904
        %v1920 = vpack.c.b16 %v1917, %v1916
        %v1921 = vpack.c.b16 %v1919, %v1918
        %v1925 = vsel %vm430, %v1900, 0
        %1927 = vmatprep.subr.bf16.mxu0 0
        %1928 = vmatpush1.bf16.msra.mxu0 0
        %1929 = vmatprep.subr.bf16.mxu0 0
        %1930 = vmatpush1.bf16.msra.mxu0 0
        %1931 = vmatprep.subr.bf16.mxu0 0
        %1932 = vmatpush1.bf16.msra.mxu0 0
        %1933 = vmatprep.subr.bf16.mxu0 0
        %1934 = vmatpush1.bf16.msra.mxu0 0
        %1935 = vmatprep.subr.bf16.mxu0 0
        %1936 = vmatpush1.bf16.msra.mxu0 0
        %1937 = vmatprep.subr.bf16.mxu0 0
        %1938 = vmatpush1.bf16.msra.mxu0 0
        %1939 = vmatprep.subr.bf16.mxu0 0
        %1940 = vmatpush1.bf16.msra.mxu0 %v1921
        %1941 = vmatprep.subr.bf16.mxu0 0
        %1942 = vmatpush1.bf16.msra.mxu0 %v1920
        %1943 = vmatprep.subr.bf16.mxu0 0
        %1944 = vmatpush2.bf16.msra.mxu0 0
        %1945 = vmatprep.subr.bf16.mxu0 0
        %1946 = vmatpush2.bf16.msra.mxu0 0
        %1947 = vmatprep.subr.bf16.mxu0 0
        %1948 = vmatpush2.bf16.msra.mxu0 0
        %1949 = vmatprep.subr.bf16.mxu0 0
        %1950 = vmatpush2.bf16.msra.mxu0 0
        %1951 = vmatprep.subr.bf16.mxu0 0
        %1952 = vmatpush2.bf16.msra.mxu0 0
        %1953 = vmatprep.subr.bf16.mxu0 0
        %1954 = vmatpush2.bf16.msra.mxu0 0
        %1955 = vmatprep.subr.bf16.mxu0 0
        %1956 = vmatpush2.bf16.msra.mxu0 0
        %1957 = vmatprep.subr.bf16.mxu0 0
        %1958 = vmatpush2.bf16.msra.mxu0 0
        %1959 = vmatprep.mubr.bf16.mxu0 0
        %1960 = vmatmul.mubr.bf16.gmra.mxu0 %v1925
        %v1961 = vpop.f32.mrf.mxu0
        %v1962 = vadd.f32 %v1910, %v1961
        %v1963 = vpop.f32.mrf.mxu0
        %v1964 = vpop.f32.mrf.mxu0
        %v1965 = vpop.f32.mrf.mxu0
        %1966 = vdwg.mxu0
        %v1967 = vmax.f32 %v1962, 0.0
        %v1968 = vpack.c.bf16 %v1967, %v1967
        %v1969 = vld [vmem:[%s9] sm:$0xf]
        %v1970 = vld [vmem:[%s9 + $0x4] sm:$0xf]
        %v1971 = vld [vmem:[%s9 + $0x8] sm:$0xf]
        %v1972 = vld [vmem:[%s9 + $0xc] sm:$0xf]
        %v1973 = vld [vmem:[%s9 + $0x10] sm:$0xf]
        %v1974 = vld [vmem:[%s9 + $0x14] sm:$0xf]
        %v1975 = vld [vmem:[%s9 + $0x18] sm:$0xf]
        %v1976 = vld [vmem:[%s9 + $0x1c] sm:$0xf]
        %v1977 = vld [vmem:[%s9 + $0x20] sm:$0xf]
        %v1978 = vld [vmem:[%s9 + $0x24] sm:$0xf]
        %v1979 = vld [vmem:[%s9 + $0x28] sm:$0xf]
        %v1980 = vld [vmem:[%s9 + $0x2c] sm:$0xf]
        %v1981 = vld [vmem:[%s9 + $0x30] sm:$0xf]
        %v1982 = vld [vmem:[%s9 + $0x34] sm:$0xf]
        %v1983 = vld [vmem:[%s9 + $0x38] sm:$0xf]
        %v1984 = vld [vmem:[%s9 + $0x3c] sm:$0xf]
        %v1985 = vld [vmem:[%s6 + $0x3] sm:$0x1]
        %v1986 = vlaneseq
        %v1987 = vshrl.u32 %v1986, 7
        %v1988 = vsub.s32 0, %v1987
        %v1989 = vrot.slane %v1985, %v1988
        %v2006 = vunpack.c.l.b16 %v1969
        %v2007 = vunpack.c.l.b16 %v1970
        %v2008 = vunpack.c.l.b16 %v1971
        %v2009 = vunpack.c.l.b16 %v1972
        %v2010 = vunpack.c.l.b16 %v1973
        %v2011 = vunpack.c.l.b16 %v1974
        %v2012 = vunpack.c.l.b16 %v1975
        %v2013 = vunpack.c.l.b16 %v1976
        %v2014 = vunpack.c.l.b16 %v1977
        %v2015 = vunpack.c.l.b16 %v1978
        %v2016 = vunpack.c.l.b16 %v1979
        %v2017 = vunpack.c.l.b16 %v1980
        %v2018 = vunpack.c.l.b16 %v1981
        %v2019 = vunpack.c.l.b16 %v1982
        %v2020 = vunpack.c.l.b16 %v1983
        %v2021 = vunpack.c.l.b16 %v1984
        %v2022 = vpack.c.b16 %v2007, %v2006
        %v2023 = vpack.c.b16 %v2009, %v2008
        %v2024 = vpack.c.b16 %v2011, %v2010
        %v2025 = vpack.c.b16 %v2013, %v2012
        %v2026 = vpack.c.b16 %v2015, %v2014
        %v2027 = vpack.c.b16 %v2017, %v2016
        %v2028 = vpack.c.b16 %v2019, %v2018
        %v2029 = vpack.c.b16 %v2021, %v2020
        %2038 = vmatprep.subr.bf16.mxu0 0
        %2039 = vmatpush1.bf16.msra.mxu0 %v2029
        %2040 = vmatprep.subr.bf16.mxu0 0
        %2041 = vmatpush1.bf16.msra.mxu0 %v2028
        %2042 = vmatprep.subr.bf16.mxu0 0
        %2043 = vmatpush1.bf16.msra.mxu0 %v2027
        %2044 = vmatprep.subr.bf16.mxu0 0
        %2045 = vmatpush1.bf16.msra.mxu0 %v2026
        %2046 = vmatprep.subr.bf16.mxu0 0
        %2047 = vmatpush1.bf16.msra.mxu0 %v2025
        %2048 = vmatprep.subr.bf16.mxu0 0
        %2049 = vmatpush1.bf16.msra.mxu0 %v2024
        %2050 = vmatprep.subr.bf16.mxu0 0
        %2051 = vmatpush1.bf16.msra.mxu0 %v2023
        %2052 = vmatprep.subr.bf16.mxu0 0
        %2053 = vmatpush1.bf16.msra.mxu0 %v2022
        %2054 = vmatprep.subr.bf16.mxu0 0
        %2055 = vmatpush2.bf16.msra.mxu0 0
        %2056 = vmatprep.subr.bf16.mxu0 0
        %2057 = vmatpush2.bf16.msra.mxu0 0
        %2058 = vmatprep.subr.bf16.mxu0 0
        %2059 = vmatpush2.bf16.msra.mxu0 0
        %2060 = vmatprep.subr.bf16.mxu0 0
        %2061 = vmatpush2.bf16.msra.mxu0 0
        %2062 = vmatprep.subr.bf16.mxu0 0
        %2063 = vmatpush2.bf16.msra.mxu0 0
        %2064 = vmatprep.subr.bf16.mxu0 0
        %2065 = vmatpush2.bf16.msra.mxu0 0
        %2066 = vmatprep.subr.bf16.mxu0 0
        %2067 = vmatpush2.bf16.msra.mxu0 0
        %2068 = vmatprep.subr.bf16.mxu0 0
        %2069 = vmatpush2.bf16.msra.mxu0 0
        %2070 = vmatprep.mubr.bf16.mxu0 0
        %2071 = vmatmul.mubr.bf16.gmra.mxu0 %v1968
        %v2072 = vpop.f32.mrf.mxu0
        %v2073 = vadd.f32 %v1989, %v2072
        %v2074 = vpop.f32.mrf.mxu0
        %v2075 = vpop.f32.mrf.mxu0
        %v2076 = vpop.f32.mrf.mxu0
        %2077 = vdwg.mxu0
        %v2078 = vadd.f32 %v1899, %v2073
        %v2079 = vld [vmem:[%s6 + $0x4] sm:$0x1]
        %v2080 = vld [vmem:[%s6 + $0x5] sm:$0x1]
        %v2081 = vsel %vm430, %v2078, 0.0
        %2082 = vadd.xlane.f32.xlu0 %v2081
        %v2083 = vpop.xlane.xlu0 %2082
        %v2084 = vmul.f32 %v2083, %v1879
        %v2085 = vsub.f32 %v2078, %v2084
        %v2086 = vmul.f32 %v2085, %v2085
        %v2087 = vsel %vm430, %v2086, 0.0
        %2088 = vadd.xlane.f32.xlu0 %v2087
        %v2089 = vpop.xlane.xlu0 %2088
        %v2090 = vmul.f32 %v2089, %v1879
        %v2091 = vadd.f32 %v2090, 1e-05
        %v2092 = vrsqrt.pop %v2091
        %v2093 = vmul.f32 %v2085, %v2092
        %v2094 = vlaneseq
        %v2095 = vshrl.u32 %v2094, 7
        %v2096 = vsub.s32 0, %v2095
        %v2097 = vrot.slane %v2079, %v2096
        %v2098 = vmul.f32 %v2093, %v2097
        %v2099 = vlaneseq
        %v2100 = vshrl.u32 %v2099, 7
        %v2101 = vsub.s32 0, %v2100
        %v2102 = vrot.slane %v2080, %v2101
        %v2103 = vadd.f32 %v2098, %v2102
        %v2104 = vpack.c.bf16 %v2103, %v2103
        %s2105 = scalar_lea.vmem %s3, 192
        %v2106 = vld [vmem:[%s2105] sm:$0xf]
        %v2107 = vld [vmem:[%s2105 + $0x4] sm:$0xf]
        %v2108 = vld [vmem:[%s2105 + $0x8] sm:$0xf]
        %v2109 = vld [vmem:[%s2105 + $0xc] sm:$0xf]
        %v2110 = vld [vmem:[%s2105 + $0x10] sm:$0xf]
        %v2111 = vld [vmem:[%s2105 + $0x14] sm:$0xf]
        %v2112 = vld [vmem:[%s2105 + $0x18] sm:$0xf]
        %v2113 = vld [vmem:[%s2105 + $0x1c] sm:$0xf]
        %v2114 = vld [vmem:[%s2105 + $0x20] sm:$0xf]
        %v2115 = vld [vmem:[%s2105 + $0x24] sm:$0xf]
        %v2116 = vld [vmem:[%s2105 + $0x28] sm:$0xf]
        %v2117 = vld [vmem:[%s2105 + $0x2c] sm:$0xf]
        %v2118 = vld [vmem:[%s2105 + $0x30] sm:$0xf]
        %v2119 = vld [vmem:[%s2105 + $0x34] sm:$0xf]
        %v2120 = vld [vmem:[%s2105 + $0x38] sm:$0xf]
        %v2121 = vld [vmem:[%s2105 + $0x3c] sm:$0xf]
        %s2122 = scalar_lea.vmem %s4, 12
        %v2123 = vld [vmem:[%s2122] sm:$0x1]
        %v2124 = vld [vmem:[%s2122 + $0x1] sm:$0x1]
        %v2125 = vld [vmem:[%s2122 + $0x2] sm:$0x1]
        %v2126 = vld [vmem:[%s2122 + $0x3] sm:$0x1]
        %v2131 = vlaneseq
        %v2132 = vshrl.u32 %v2131, 7
        %v2133 = vsub.s32 0, %v2132
        %v2134 = vrot.slane %v2123, %v2133
        %v2135 = vlaneseq
        %v2136 = vshrl.u32 %v2135, 7
        %v2137 = vsub.s32 0, %v2136
        %v2138 = vrot.slane %v2124, %v2137
        %v2139 = vlaneseq
        %v2140 = vshrl.u32 %v2139, 7
        %v2141 = vsub.s32 0, %v2140
        %v2142 = vrot.slane %v2125, %v2141
        %v2143 = vlaneseq
        %v2144 = vshrl.u32 %v2143, 7
        %v2145 = vsub.s32 0, %v2144
        %v2146 = vrot.slane %v2126, %v2145
        %v2155 = vunpack.c.l.b16 %v2106
        %v2156 = vunpack.c.l.b16 %v2107
        %v2157 = vunpack.c.l.b16 %v2108
        %v2158 = vunpack.c.l.b16 %v2109
        %v2159 = vpack.c.b16 %v2156, %v2155
        %v2160 = vpack.c.b16 %v2158, %v2157
        %v2164 = vsel %vm430, %v2104, 0
        %2166 = vmatprep.subr.bf16.mxu0 0
        %2167 = vmatpush1.bf16.msra.mxu0 0
        %2168 = vmatprep.subr.bf16.mxu0 0
        %2169 = vmatpush1.bf16.msra.mxu0 0
        %2170 = vmatprep.subr.bf16.mxu0 0
        %2171 = vmatpush1.bf16.msra.mxu0 0
        %2172 = vmatprep.subr.bf16.mxu0 0
        %2173 = vmatpush1.bf16.msra.mxu0 0
        %2174 = vmatprep.subr.bf16.mxu0 0
        %2175 = vmatpush1.bf16.msra.mxu0 0
        %2176 = vmatprep.subr.bf16.mxu0 0
        %2177 = vmatpush1.bf16.msra.mxu0 0
        %2178 = vmatprep.subr.bf16.mxu0 0
        %2179 = vmatpush1.bf16.msra.mxu0 %v2160
        %2180 = vmatprep.subr.bf16.mxu0 0
        %2181 = vmatpush1.bf16.msra.mxu0 %v2159
        %2182 = vmatprep.subr.bf16.mxu0 0
        %2183 = vmatpush2.bf16.msra.mxu0 0
        %2184 = vmatprep.subr.bf16.mxu0 0
        %2185 = vmatpush2.bf16.msra.mxu0 0
        %2186 = vmatprep.subr.bf16.mxu0 0
        %2187 = vmatpush2.bf16.msra.mxu0 0
        %2188 = vmatprep.subr.bf16.mxu0 0
        %2189 = vmatpush2.bf16.msra.mxu0 0
        %2190 = vmatprep.subr.bf16.mxu0 0
        %2191 = vmatpush2.bf16.msra.mxu0 0
        %2192 = vmatprep.subr.bf16.mxu0 0
        %2193 = vmatpush2.bf16.msra.mxu0 0
        %2194 = vmatprep.subr.bf16.mxu0 0
        %2195 = vmatpush2.bf16.msra.mxu0 0
        %2196 = vmatprep.subr.bf16.mxu0 0
        %2197 = vmatpush2.bf16.msra.mxu0 0
        %2198 = vmatprep.mubr.bf16.mxu0 0
        %2199 = vmatmul.mubr.bf16.gmra.mxu0 %v2164
        %v2200 = vpop.f32.mrf.mxu0
        %v2201 = vadd.f32 %v2134, %v2200
        %v2202 = vpop.f32.mrf.mxu0
        %v2203 = vpop.f32.mrf.mxu0
        %v2204 = vpop.f32.mrf.mxu0
        %2205 = vdwg.mxu0
        %v2210 = vunpack.c.l.b16 %v2110
        %v2211 = vunpack.c.l.b16 %v2111
        %v2212 = vunpack.c.l.b16 %v2112
        %v2213 = vunpack.c.l.b16 %v2113
        %v2214 = vpack.c.b16 %v2211, %v2210
        %v2215 = vpack.c.b16 %v2213, %v2212
        %2218 = vmatprep.subr.bf16.mxu0 0
        %2219 = vmatpush1.bf16.msra.mxu0 0
        %2220 = vmatprep.subr.bf16.mxu0 0
        %2221 = vmatpush1.bf16.msra.mxu0 0
        %2222 = vmatprep.subr.bf16.mxu0 0
        %2223 = vmatpush1.bf16.msra.mxu0 0
        %2224 = vmatprep.subr.bf16.mxu0 0
        %2225 = vmatpush1.bf16.msra.mxu0 0
        %2226 = vmatprep.subr.bf16.mxu0 0
        %2227 = vmatpush1.bf16.msra.mxu0 0
        %2228 = vmatprep.subr.bf16.mxu0 0
        %2229 = vmatpush1.bf16.msra.mxu0 0
        %2230 = vmatprep.subr.bf16.mxu0 0
        %2231 = vmatpush1.bf16.msra.mxu0 %v2215
        %2232 = vmatprep.subr.bf16.mxu0 0
        %2233 = vmatpush1.bf16.msra.mxu0 %v2214
        %2234 = vmatprep.subr.bf16.mxu0 0
        %2235 = vmatpush2.bf16.msra.mxu0 0
        %2236 = vmatprep.subr.bf16.mxu0 0
        %2237 = vmatpush2.bf16.msra.mxu0 0
        %2238 = vmatprep.subr.bf16.mxu0 0
        %2239 = vmatpush2.bf16.msra.mxu0 0
        %2240 = vmatprep.subr.bf16.mxu0 0
        %2241 = vmatpush2.bf16.msra.mxu0 0
        %2242 = vmatprep.subr.bf16.mxu0 0
        %2243 = vmatpush2.bf16.msra.mxu0 0
        %2244 = vmatprep.subr.bf16.mxu0 0
        %2245 = vmatpush2.bf16.msra.mxu0 0
        %2246 = vmatprep.subr.bf16.mxu0 0
        %2247 = vmatpush2.bf16.msra.mxu0 0
        %2248 = vmatprep.subr.bf16.mxu0 0
        %2249 = vmatpush2.bf16.msra.mxu0 0
        %2250 = vmatprep.mubr.bf16.mxu0 0
        %2251 = vmatmul.mubr.bf16.gmra.mxu0 %v2164
        %v2252 = vpop.f32.mrf.mxu0
        %v2253 = vadd.f32 %v2138, %v2252
        %v2254 = vpop.f32.mrf.mxu0
        %v2255 = vpop.f32.mrf.mxu0
        %v2256 = vpop.f32.mrf.mxu0
        %2257 = vdwg.mxu0
        %v2262 = vunpack.c.l.b16 %v2114
        %v2263 = vunpack.c.l.b16 %v2115
        %v2264 = vunpack.c.l.b16 %v2116
        %v2265 = vunpack.c.l.b16 %v2117
        %v2266 = vpack.c.b16 %v2263, %v2262
        %v2267 = vpack.c.b16 %v2265, %v2264
        %2270 = vmatprep.subr.bf16.mxu0 0
        %2271 = vmatpush1.bf16.msra.mxu0 0
        %2272 = vmatprep.subr.bf16.mxu0 0
        %2273 = vmatpush1.bf16.msra.mxu0 0
        %2274 = vmatprep.subr.bf16.mxu0 0
        %2275 = vmatpush1.bf16.msra.mxu0 0
        %2276 = vmatprep.subr.bf16.mxu0 0
        %2277 = vmatpush1.bf16.msra.mxu0 0
        %2278 = vmatprep.subr.bf16.mxu0 0
        %2279 = vmatpush1.bf16.msra.mxu0 0
        %2280 = vmatprep.subr.bf16.mxu0 0
        %2281 = vmatpush1.bf16.msra.mxu0 0
        %2282 = vmatprep.subr.bf16.mxu0 0
        %2283 = vmatpush1.bf16.msra.mxu0 %v2267
        %2284 = vmatprep.subr.bf16.mxu0 0
        %2285 = vmatpush1.bf16.msra.mxu0 %v2266
        %2286 = vmatprep.subr.bf16.mxu0 0
        %2287 = vmatpush2.bf16.msra.mxu0 0
        %2288 = vmatprep.subr.bf16.mxu0 0
        %2289 = vmatpush2.bf16.msra.mxu0 0
        %2290 = vmatprep.subr.bf16.mxu0 0
        %2291 = vmatpush2.bf16.msra.mxu0 0
        %2292 = vmatprep.subr.bf16.mxu0 0
        %2293 = vmatpush2.bf16.msra.mxu0 0
        %2294 = vmatprep.subr.bf16.mxu0 0
        %2295 = vmatpush2.bf16.msra.mxu0 0
        %2296 = vmatprep.subr.bf16.mxu0 0
        %2297 = vmatpush2.bf16.msra.mxu0 0
        %2298 = vmatprep.subr.bf16.mxu0 0
        %2299 = vmatpush2.bf16.msra.mxu0 0
        %2300 = vmatprep.subr.bf16.mxu0 0
        %2301 = vmatpush2.bf16.msra.mxu0 0
        %2302 = vmatprep.mubr.bf16.mxu0 0
        %2303 = vmatmul.mubr.bf16.gmra.mxu0 %v2164
        %v2304 = vpop.f32.mrf.mxu0
        %v2305 = vadd.f32 %v2142, %v2304
        %v2306 = vpop.f32.mrf.mxu0
        %v2307 = vpop.f32.mrf.mxu0
        %v2308 = vpop.f32.mrf.mxu0
        %2309 = vdwg.mxu0
        %v2314 = vunpack.c.l.b16 %v2118
        %v2315 = vunpack.c.l.b16 %v2119
        %v2316 = vunpack.c.l.b16 %v2120
        %v2317 = vunpack.c.l.b16 %v2121
        %v2318 = vpack.c.b16 %v2315, %v2314
        %v2319 = vpack.c.b16 %v2317, %v2316
        %2322 = vmatprep.subr.bf16.mxu0 0
        %2323 = vmatpush1.bf16.msra.mxu0 0
        %2324 = vmatprep.subr.bf16.mxu0 0
        %2325 = vmatpush1.bf16.msra.mxu0 0
        %2326 = vmatprep.subr.bf16.mxu0 0
        %2327 = vmatpush1.bf16.msra.mxu0 0
        %2328 = vmatprep.subr.bf16.mxu0 0
        %2329 = vmatpush1.bf16.msra.mxu0 0
        %2330 = vmatprep.subr.bf16.mxu0 0
        %2331 = vmatpush1.bf16.msra.mxu0 0
        %2332 = vmatprep.subr.bf16.mxu0 0
        %2333 = vmatpush1.bf16.msra.mxu0 0
        %2334 = vmatprep.subr.bf16.mxu0 0
        %2335 = vmatpush1.bf16.msra.mxu0 %v2319
        %2336 = vmatprep.subr.bf16.mxu0 0
        %2337 = vmatpush1.bf16.msra.mxu0 %v2318
        %2338 = vmatprep.subr.bf16.mxu0 0
        %2339 = vmatpush2.bf16.msra.mxu0 0
        %2340 = vmatprep.subr.bf16.mxu0 0
        %2341 = vmatpush2.bf16.msra.mxu0 0
        %2342 = vmatprep.subr.bf16.mxu0 0
        %2343 = vmatpush2.bf16.msra.mxu0 0
        %2344 = vmatprep.subr.bf16.mxu0 0
        %2345 = vmatpush2.bf16.msra.mxu0 0
        %2346 = vmatprep.subr.bf16.mxu0 0
        %2347 = vmatpush2.bf16.msra.mxu0 0
        %2348 = vmatprep.subr.bf16.mxu0 0
        %2349 = vmatpush2.bf16.msra.mxu0 0
        %2350 = vmatprep.subr.bf16.mxu0 0
        %2351 = vmatpush2.bf16.msra.mxu0 0
        %2352 = vmatprep.subr.bf16.mxu0 0
        %2353 = vmatpush2.bf16.msra.mxu0 0
        %2354 = vmatprep.mubr.bf16.mxu0 0
        %2355 = vmatmul.mubr.bf16.gmra.mxu0 %v2164
        %v2356 = vpop.f32.mrf.mxu0
        %v2357 = vadd.f32 %v2146, %v2356
        %v2358 = vpop.f32.mrf.mxu0
        %v2359 = vpop.f32.mrf.mxu0
        %v2360 = vpop.f32.mrf.mxu0
        %2361 = vdwg.mxu0
        %s2362 = scalar_lea.vmem %s3, 256
        %v2363 = vld [vmem:[%s2362] sm:$0xf]
        %v2364 = vld [vmem:[%s2362 + $0x4] sm:$0xf]
        %v2365 = vld [vmem:[%s2362 + $0x8] sm:$0xf]
        %v2366 = vld [vmem:[%s2362 + $0xc] sm:$0xf]
        %v2367 = vld [vmem:[%s2362 + $0x10] sm:$0xf]
        %v2368 = vld [vmem:[%s2362 + $0x14] sm:$0xf]
        %v2369 = vld [vmem:[%s2362 + $0x18] sm:$0xf]
        %v2370 = vld [vmem:[%s2362 + $0x1c] sm:$0xf]
        %v2371 = vld [vmem:[%s2362 + $0x20] sm:$0xf]
        %v2372 = vld [vmem:[%s2362 + $0x24] sm:$0xf]
        %v2373 = vld [vmem:[%s2362 + $0x28] sm:$0xf]
        %v2374 = vld [vmem:[%s2362 + $0x2c] sm:$0xf]
        %v2375 = vld [vmem:[%s2362 + $0x30] sm:$0xf]
        %v2376 = vld [vmem:[%s2362 + $0x34] sm:$0xf]
        %v2377 = vld [vmem:[%s2362 + $0x38] sm:$0xf]
        %v2378 = vld [vmem:[%s2362 + $0x3c] sm:$0xf]
        %s2379 = scalar_lea.vmem %s4, 16
        %v2380 = vld [vmem:[%s2379] sm:$0x1]
        %v2381 = vld [vmem:[%s2379 + $0x1] sm:$0x1]
        %v2382 = vld [vmem:[%s2379 + $0x2] sm:$0x1]
        %v2383 = vld [vmem:[%s2379 + $0x3] sm:$0x1]
        %v2388 = vlaneseq
        %v2389 = vshrl.u32 %v2388, 7
        %v2390 = vsub.s32 0, %v2389
        %v2391 = vrot.slane %v2380, %v2390
        %v2392 = vlaneseq
        %v2393 = vshrl.u32 %v2392, 7
        %v2394 = vsub.s32 0, %v2393
        %v2395 = vrot.slane %v2381, %v2394
        %v2396 = vlaneseq
        %v2397 = vshrl.u32 %v2396, 7
        %v2398 = vsub.s32 0, %v2397
        %v2399 = vrot.slane %v2382, %v2398
        %v2400 = vlaneseq
        %v2401 = vshrl.u32 %v2400, 7
        %v2402 = vsub.s32 0, %v2401
        %v2403 = vrot.slane %v2383, %v2402
        %v2412 = vunpack.c.l.b16 %v2363
        %v2413 = vunpack.c.l.b16 %v2364
        %v2414 = vunpack.c.l.b16 %v2365
        %v2415 = vunpack.c.l.b16 %v2366
        %v2416 = vpack.c.b16 %v2413, %v2412
        %v2417 = vpack.c.b16 %v2415, %v2414
        %2420 = vmatprep.subr.bf16.mxu0 0
        %2421 = vmatpush1.bf16.msra.mxu0 0
        %2422 = vmatprep.subr.bf16.mxu0 0
        %2423 = vmatpush1.bf16.msra.mxu0 0
        %2424 = vmatprep.subr.bf16.mxu0 0
        %2425 = vmatpush1.bf16.msra.mxu0 0
        %2426 = vmatprep.subr.bf16.mxu0 0
        %2427 = vmatpush1.bf16.msra.mxu0 0
        %2428 = vmatprep.subr.bf16.mxu0 0
        %2429 = vmatpush1.bf16.msra.mxu0 0
        %2430 = vmatprep.subr.bf16.mxu0 0
        %2431 = vmatpush1.bf16.msra.mxu0 0
        %2432 = vmatprep.subr.bf16.mxu0 0
        %2433 = vmatpush1.bf16.msra.mxu0 %v2417
        %2434 = vmatprep.subr.bf16.mxu0 0
        %2435 = vmatpush1.bf16.msra.mxu0 %v2416
        %2436 = vmatprep.subr.bf16.mxu0 0
        %2437 = vmatpush2.bf16.msra.mxu0 0
        %2438 = vmatprep.subr.bf16.mxu0 0
        %2439 = vmatpush2.bf16.msra.mxu0 0
        %2440 = vmatprep.subr.bf16.mxu0 0
        %2441 = vmatpush2.bf16.msra.mxu0 0
        %2442 = vmatprep.subr.bf16.mxu0 0
        %2443 = vmatpush2.bf16.msra.mxu0 0
        %2444 = vmatprep.subr.bf16.mxu0 0
        %2445 = vmatpush2.bf16.msra.mxu0 0
        %2446 = vmatprep.subr.bf16.mxu0 0
        %2447 = vmatpush2.bf16.msra.mxu0 0
        %2448 = vmatprep.subr.bf16.mxu0 0
        %2449 = vmatpush2.bf16.msra.mxu0 0
        %2450 = vmatprep.subr.bf16.mxu0 0
        %2451 = vmatpush2.bf16.msra.mxu0 0
        %2452 = vmatprep.mubr.bf16.mxu0 0
        %2453 = vmatmul.mubr.bf16.gmra.mxu0 %v2164
        %v2454 = vpop.f32.mrf.mxu0
        %v2455 = vadd.f32 %v2391, %v2454
        %v2456 = vpop.f32.mrf.mxu0
        %v2457 = vpop.f32.mrf.mxu0
        %v2458 = vpop.f32.mrf.mxu0
        %2459 = vdwg.mxu0
        %v2464 = vunpack.c.l.b16 %v2367
        %v2465 = vunpack.c.l.b16 %v2368
        %v2466 = vunpack.c.l.b16 %v2369
        %v2467 = vunpack.c.l.b16 %v2370
        %v2468 = vpack.c.b16 %v2465, %v2464
        %v2469 = vpack.c.b16 %v2467, %v2466
        %2472 = vmatprep.subr.bf16.mxu0 0
        %2473 = vmatpush1.bf16.msra.mxu0 0
        %2474 = vmatprep.subr.bf16.mxu0 0
        %2475 = vmatpush1.bf16.msra.mxu0 0
        %2476 = vmatprep.subr.bf16.mxu0 0
        %2477 = vmatpush1.bf16.msra.mxu0 0
        %2478 = vmatprep.subr.bf16.mxu0 0
        %2479 = vmatpush1.bf16.msra.mxu0 0
        %2480 = vmatprep.subr.bf16.mxu0 0
        %2481 = vmatpush1.bf16.msra.mxu0 0
        %2482 = vmatprep.subr.bf16.mxu0 0
        %2483 = vmatpush1.bf16.msra.mxu0 0
        %2484 = vmatprep.subr.bf16.mxu0 0
        %2485 = vmatpush1.bf16.msra.mxu0 %v2469
        %2486 = vmatprep.subr.bf16.mxu0 0
        %2487 = vmatpush1.bf16.msra.mxu0 %v2468
        %2488 = vmatprep.subr.bf16.mxu0 0
        %2489 = vmatpush2.bf16.msra.mxu0 0
        %2490 = vmatprep.subr.bf16.mxu0 0
        %2491 = vmatpush2.bf16.msra.mxu0 0
        %2492 = vmatprep.subr.bf16.mxu0 0
        %2493 = vmatpush2.bf16.msra.mxu0 0
        %2494 = vmatprep.subr.bf16.mxu0 0
        %2495 = vmatpush2.bf16.msra.mxu0 0
        %2496 = vmatprep.subr.bf16.mxu0 0
        %2497 = vmatpush2.bf16.msra.mxu0 0
        %2498 = vmatprep.subr.bf16.mxu0 0
        %2499 = vmatpush2.bf16.msra.mxu0 0
        %2500 = vmatprep.subr.bf16.mxu0 0
        %2501 = vmatpush2.bf16.msra.mxu0 0
        %2502 = vmatprep.subr.bf16.mxu0 0
        %2503 = vmatpush2.bf16.msra.mxu0 0
        %2504 = vmatprep.mubr.bf16.mxu0 0
        %2505 = vmatmul.mubr.bf16.gmra.mxu0 %v2164
        %v2506 = vpop.f32.mrf.mxu0
        %v2507 = vadd.f32 %v2395, %v2506
        %v2508 = vpop.f32.mrf.mxu0
        %v2509 = vpop.f32.mrf.mxu0
        %v2510 = vpop.f32.mrf.mxu0
        %2511 = vdwg.mxu0
        %v2516 = vunpack.c.l.b16 %v2371
        %v2517 = vunpack.c.l.b16 %v2372
        %v2518 = vunpack.c.l.b16 %v2373
        %v2519 = vunpack.c.l.b16 %v2374
        %v2520 = vpack.c.b16 %v2517, %v2516
        %v2521 = vpack.c.b16 %v2519, %v2518
        %2524 = vmatprep.subr.bf16.mxu0 0
        %2525 = vmatpush1.bf16.msra.mxu0 0
        %2526 = vmatprep.subr.bf16.mxu0 0
        %2527 = vmatpush1.bf16.msra.mxu0 0
        %2528 = vmatprep.subr.bf16.mxu0 0
        %2529 = vmatpush1.bf16.msra.mxu0 0
        %2530 = vmatprep.subr.bf16.mxu0 0
        %2531 = vmatpush1.bf16.msra.mxu0 0
        %2532 = vmatprep.subr.bf16.mxu0 0
        %2533 = vmatpush1.bf16.msra.mxu0 0
        %2534 = vmatprep.subr.bf16.mxu0 0
        %2535 = vmatpush1.bf16.msra.mxu0 0
        %2536 = vmatprep.subr.bf16.mxu0 0
        %2537 = vmatpush1.bf16.msra.mxu0 %v2521
        %2538 = vmatprep.subr.bf16.mxu0 0
        %2539 = vmatpush1.bf16.msra.mxu0 %v2520
        %2540 = vmatprep.subr.bf16.mxu0 0
        %2541 = vmatpush2.bf16.msra.mxu0 0
        %2542 = vmatprep.subr.bf16.mxu0 0
        %2543 = vmatpush2.bf16.msra.mxu0 0
        %2544 = vmatprep.subr.bf16.mxu0 0
        %2545 = vmatpush2.bf16.msra.mxu0 0
        %2546 = vmatprep.subr.bf16.mxu0 0
        %2547 = vmatpush2.bf16.msra.mxu0 0
        %2548 = vmatprep.subr.bf16.mxu0 0
        %2549 = vmatpush2.bf16.msra.mxu0 0
        %2550 = vmatprep.subr.bf16.mxu0 0
        %2551 = vmatpush2.bf16.msra.mxu0 0
        %2552 = vmatprep.subr.bf16.mxu0 0
        %2553 = vmatpush2.bf16.msra.mxu0 0
        %2554 = vmatprep.subr.bf16.mxu0 0
        %2555 = vmatpush2.bf16.msra.mxu0 0
        %2556 = vmatprep.mubr.bf16.mxu0 0
        %2557 = vmatmul.mubr.bf16.gmra.mxu0 %v2164
        %v2558 = vpop.f32.mrf.mxu0
        %v2559 = vadd.f32 %v2399, %v2558
        %v2560 = vpop.f32.mrf.mxu0
        %v2561 = vpop.f32.mrf.mxu0
        %v2562 = vpop.f32.mrf.mxu0
        %2563 = vdwg.mxu0
        %v2568 = vunpack.c.l.b16 %v2375
        %v2569 = vunpack.c.l.b16 %v2376
        %v2570 = vunpack.c.l.b16 %v2377
        %v2571 = vunpack.c.l.b16 %v2378
        %v2572 = vpack.c.b16 %v2569, %v2568
        %v2573 = vpack.c.b16 %v2571, %v2570
        %2576 = vmatprep.subr.bf16.mxu0 0
        %2577 = vmatpush1.bf16.msra.mxu0 0
        %2578 = vmatprep.subr.bf16.mxu0 0
        %2579 = vmatpush1.bf16.msra.mxu0 0
        %2580 = vmatprep.subr.bf16.mxu0 0
        %2581 = vmatpush1.bf16.msra.mxu0 0
        %2582 = vmatprep.subr.bf16.mxu0 0
        %2583 = vmatpush1.bf16.msra.mxu0 0
        %2584 = vmatprep.subr.bf16.mxu0 0
        %2585 = vmatpush1.bf16.msra.mxu0 0
        %2586 = vmatprep.subr.bf16.mxu0 0
        %2587 = vmatpush1.bf16.msra.mxu0 0
        %2588 = vmatprep.subr.bf16.mxu0 0
        %2589 = vmatpush1.bf16.msra.mxu0 %v2573
        %2590 = vmatprep.subr.bf16.mxu0 0
        %2591 = vmatpush1.bf16.msra.mxu0 %v2572
        %2592 = vmatprep.subr.bf16.mxu0 0
        %2593 = vmatpush2.bf16.msra.mxu0 0
        %2594 = vmatprep.subr.bf16.mxu0 0
        %2595 = vmatpush2.bf16.msra.mxu0 0
        %2596 = vmatprep.subr.bf16.mxu0 0
        %2597 = vmatpush2.bf16.msra.mxu0 0
        %2598 = vmatprep.subr.bf16.mxu0 0
        %2599 = vmatpush2.bf16.msra.mxu0 0
        %2600 = vmatprep.subr.bf16.mxu0 0
        %2601 = vmatpush2.bf16.msra.mxu0 0
        %2602 = vmatprep.subr.bf16.mxu0 0
        %2603 = vmatpush2.bf16.msra.mxu0 0
        %2604 = vmatprep.subr.bf16.mxu0 0
        %2605 = vmatpush2.bf16.msra.mxu0 0
        %2606 = vmatprep.subr.bf16.mxu0 0
        %2607 = vmatpush2.bf16.msra.mxu0 0
        %2608 = vmatprep.mubr.bf16.mxu0 0
        %2609 = vmatmul.mubr.bf16.gmra.mxu0 %v2164
        %v2610 = vpop.f32.mrf.mxu0
        %v2611 = vadd.f32 %v2403, %v2610
        %v2612 = vpop.f32.mrf.mxu0
        %v2613 = vpop.f32.mrf.mxu0
        %v2614 = vpop.f32.mrf.mxu0
        %2615 = vdwg.mxu0
        %s2616 = scalar_lea.vmem %s3, 320
        %v2617 = vld [vmem:[%s2616] sm:$0xf]
        %v2618 = vld [vmem:[%s2616 + $0x4] sm:$0xf]
        %v2619 = vld [vmem:[%s2616 + $0x8] sm:$0xf]
        %v2620 = vld [vmem:[%s2616 + $0xc] sm:$0xf]
        %v2621 = vld [vmem:[%s2616 + $0x10] sm:$0xf]
        %v2622 = vld [vmem:[%s2616 + $0x14] sm:$0xf]
        %v2623 = vld [vmem:[%s2616 + $0x18] sm:$0xf]
        %v2624 = vld [vmem:[%s2616 + $0x1c] sm:$0xf]
        %v2625 = vld [vmem:[%s2616 + $0x20] sm:$0xf]
        %v2626 = vld [vmem:[%s2616 + $0x24] sm:$0xf]
        %v2627 = vld [vmem:[%s2616 + $0x28] sm:$0xf]
        %v2628 = vld [vmem:[%s2616 + $0x2c] sm:$0xf]
        %v2629 = vld [vmem:[%s2616 + $0x30] sm:$0xf]
        %v2630 = vld [vmem:[%s2616 + $0x34] sm:$0xf]
        %v2631 = vld [vmem:[%s2616 + $0x38] sm:$0xf]
        %v2632 = vld [vmem:[%s2616 + $0x3c] sm:$0xf]
        %s2633 = scalar_lea.vmem %s4, 20
        %v2634 = vld [vmem:[%s2633] sm:$0x1]
        %v2635 = vld [vmem:[%s2633 + $0x1] sm:$0x1]
        %v2636 = vld [vmem:[%s2633 + $0x2] sm:$0x1]
        %v2637 = vld [vmem:[%s2633 + $0x3] sm:$0x1]
        %v2642 = vlaneseq
        %v2643 = vshrl.u32 %v2642, 7
        %v2644 = vsub.s32 0, %v2643
        %v2645 = vrot.slane %v2634, %v2644
        %v2646 = vlaneseq
        %v2647 = vshrl.u32 %v2646, 7
        %v2648 = vsub.s32 0, %v2647
        %v2649 = vrot.slane %v2635, %v2648
        %v2650 = vlaneseq
        %v2651 = vshrl.u32 %v2650, 7
        %v2652 = vsub.s32 0, %v2651
        %v2653 = vrot.slane %v2636, %v2652
        %v2654 = vlaneseq
        %v2655 = vshrl.u32 %v2654, 7
        %v2656 = vsub.s32 0, %v2655
        %v2657 = vrot.slane %v2637, %v2656
        %v2666 = vunpack.c.l.b16 %v2617
        %v2667 = vunpack.c.l.b16 %v2618
        %v2668 = vunpack.c.l.b16 %v2619
        %v2669 = vunpack.c.l.b16 %v2620
        %v2670 = vpack.c.b16 %v2667, %v2666
        %v2671 = vpack.c.b16 %v2669, %v2668
        %2674 = vmatprep.subr.bf16.mxu0 0
        %2675 = vmatpush1.bf16.msra.mxu0 0
        %2676 = vmatprep.subr.bf16.mxu0 0
        %2677 = vmatpush1.bf16.msra.mxu0 0
        %2678 = vmatprep.subr.bf16.mxu0 0
        %2679 = vmatpush1.bf16.msra.mxu0 0
        %2680 = vmatprep.subr.bf16.mxu0 0
        %2681 = vmatpush1.bf16.msra.mxu0 0
        %2682 = vmatprep.subr.bf16.mxu0 0
        %2683 = vmatpush1.bf16.msra.mxu0 0
        %2684 = vmatprep.subr.bf16.mxu0 0
        %2685 = vmatpush1.bf16.msra.mxu0 0
        %2686 = vmatprep.subr.bf16.mxu0 0
        %2687 = vmatpush1.bf16.msra.mxu0 %v2671
        %2688 = vmatprep.subr.bf16.mxu0 0
        %2689 = vmatpush1.bf16.msra.mxu0 %v2670
        %2690 = vmatprep.subr.bf16.mxu0 0
        %2691 = vmatpush2.bf16.msra.mxu0 0
        %2692 = vmatprep.subr.bf16.mxu0 0
        %2693 = vmatpush2.bf16.msra.mxu0 0
        %2694 = vmatprep.subr.bf16.mxu0 0
        %2695 = vmatpush2.bf16.msra.mxu0 0
        %2696 = vmatprep.subr.bf16.mxu0 0
        %2697 = vmatpush2.bf16.msra.mxu0 0
        %2698 = vmatprep.subr.bf16.mxu0 0
        %2699 = vmatpush2.bf16.msra.mxu0 0
        %2700 = vmatprep.subr.bf16.mxu0 0
        %2701 = vmatpush2.bf16.msra.mxu0 0
        %2702 = vmatprep.subr.bf16.mxu0 0
        %2703 = vmatpush2.bf16.msra.mxu0 0
        %2704 = vmatprep.subr.bf16.mxu0 0
        %2705 = vmatpush2.bf16.msra.mxu0 0
        %2706 = vmatprep.mubr.bf16.mxu0 0
        %2707 = vmatmul.mubr.bf16.gmra.mxu0 %v2164
        %v2708 = vpop.f32.mrf.mxu0
        %v2709 = vadd.f32 %v2645, %v2708
        %v2710 = vpop.f32.mrf.mxu0
        %v2711 = vpop.f32.mrf.mxu0
        %v2712 = vpop.f32.mrf.mxu0
        %2713 = vdwg.mxu0
        %v2718 = vunpack.c.l.b16 %v2621
        %v2719 = vunpack.c.l.b16 %v2622
        %v2720 = vunpack.c.l.b16 %v2623
        %v2721 = vunpack.c.l.b16 %v2624
        %v2722 = vpack.c.b16 %v2719, %v2718
        %v2723 = vpack.c.b16 %v2721, %v2720
        %2726 = vmatprep.subr.bf16.mxu0 0
        %2727 = vmatpush1.bf16.msra.mxu0 0
        %2728 = vmatprep.subr.bf16.mxu0 0
        %2729 = vmatpush1.bf16.msra.mxu0 0
        %2730 = vmatprep.subr.bf16.mxu0 0
        %2731 = vmatpush1.bf16.msra.mxu0 0
        %2732 = vmatprep.subr.bf16.mxu0 0
        %2733 = vmatpush1.bf16.msra.mxu0 0
        %2734 = vmatprep.subr.bf16.mxu0 0
        %2735 = vmatpush1.bf16.msra.mxu0 0
        %2736 = vmatprep.subr.bf16.mxu0 0
        %2737 = vmatpush1.bf16.msra.mxu0 0
        %2738 = vmatprep.subr.bf16.mxu0 0
        %2739 = vmatpush1.bf16.msra.mxu0 %v2723
        %2740 = vmatprep.subr.bf16.mxu0 0
        %2741 = vmatpush1.bf16.msra.mxu0 %v2722
        %2742 = vmatprep.subr.bf16.mxu0 0
        %2743 = vmatpush2.bf16.msra.mxu0 0
        %2744 = vmatprep.subr.bf16.mxu0 0
        %2745 = vmatpush2.bf16.msra.mxu0 0
        %2746 = vmatprep.subr.bf16.mxu0 0
        %2747 = vmatpush2.bf16.msra.mxu0 0
        %2748 = vmatprep.subr.bf16.mxu0 0
        %2749 = vmatpush2.bf16.msra.mxu0 0
        %2750 = vmatprep.subr.bf16.mxu0 0
        %2751 = vmatpush2.bf16.msra.mxu0 0
        %2752 = vmatprep.subr.bf16.mxu0 0
        %2753 = vmatpush2.bf16.msra.mxu0 0
        %2754 = vmatprep.subr.bf16.mxu0 0
        %2755 = vmatpush2.bf16.msra.mxu0 0
        %2756 = vmatprep.subr.bf16.mxu0 0
        %2757 = vmatpush2.bf16.msra.mxu0 0
        %2758 = vmatprep.mubr.bf16.mxu0 0
        %2759 = vmatmul.mubr.bf16.gmra.mxu0 %v2164
        %v2760 = vpop.f32.mrf.mxu0
        %v2761 = vadd.f32 %v2649, %v2760
        %v2762 = vpop.f32.mrf.mxu0
        %v2763 = vpop.f32.mrf.mxu0
        %v2764 = vpop.f32.mrf.mxu0
        %2765 = vdwg.mxu0
        %v2770 = vunpack.c.l.b16 %v2625
        %v2771 = vunpack.c.l.b16 %v2626
        %v2772 = vunpack.c.l.b16 %v2627
        %v2773 = vunpack.c.l.b16 %v2628
        %v2774 = vpack.c.b16 %v2771, %v2770
        %v2775 = vpack.c.b16 %v2773, %v2772
        %2778 = vmatprep.subr.bf16.mxu0 0
        %2779 = vmatpush1.bf16.msra.mxu0 0
        %2780 = vmatprep.subr.bf16.mxu0 0
        %2781 = vmatpush1.bf16.msra.mxu0 0
        %2782 = vmatprep.subr.bf16.mxu0 0
        %2783 = vmatpush1.bf16.msra.mxu0 0
        %2784 = vmatprep.subr.bf16.mxu0 0
        %2785 = vmatpush1.bf16.msra.mxu0 0
        %2786 = vmatprep.subr.bf16.mxu0 0
        %2787 = vmatpush1.bf16.msra.mxu0 0
        %2788 = vmatprep.subr.bf16.mxu0 0
        %2789 = vmatpush1.bf16.msra.mxu0 0
        %2790 = vmatprep.subr.bf16.mxu0 0
        %2791 = vmatpush1.bf16.msra.mxu0 %v2775
        %2792 = vmatprep.subr.bf16.mxu0 0
        %2793 = vmatpush1.bf16.msra.mxu0 %v2774
        %2794 = vmatprep.subr.bf16.mxu0 0
        %2795 = vmatpush2.bf16.msra.mxu0 0
        %2796 = vmatprep.subr.bf16.mxu0 0
        %2797 = vmatpush2.bf16.msra.mxu0 0
        %2798 = vmatprep.subr.bf16.mxu0 0
        %2799 = vmatpush2.bf16.msra.mxu0 0
        %2800 = vmatprep.subr.bf16.mxu0 0
        %2801 = vmatpush2.bf16.msra.mxu0 0
        %2802 = vmatprep.subr.bf16.mxu0 0
        %2803 = vmatpush2.bf16.msra.mxu0 0
        %2804 = vmatprep.subr.bf16.mxu0 0
        %2805 = vmatpush2.bf16.msra.mxu0 0
        %2806 = vmatprep.subr.bf16.mxu0 0
        %2807 = vmatpush2.bf16.msra.mxu0 0
        %2808 = vmatprep.subr.bf16.mxu0 0
        %2809 = vmatpush2.bf16.msra.mxu0 0
        %2810 = vmatprep.mubr.bf16.mxu0 0
        %2811 = vmatmul.mubr.bf16.gmra.mxu0 %v2164
        %v2812 = vpop.f32.mrf.mxu0
        %v2813 = vadd.f32 %v2653, %v2812
        %v2814 = vpop.f32.mrf.mxu0
        %v2815 = vpop.f32.mrf.mxu0
        %v2816 = vpop.f32.mrf.mxu0
        %2817 = vdwg.mxu0
        %v2822 = vunpack.c.l.b16 %v2629
        %v2823 = vunpack.c.l.b16 %v2630
        %v2824 = vunpack.c.l.b16 %v2631
        %v2825 = vunpack.c.l.b16 %v2632
        %v2826 = vpack.c.b16 %v2823, %v2822
        %v2827 = vpack.c.b16 %v2825, %v2824
        %2830 = vmatprep.subr.bf16.mxu0 0
        %2831 = vmatpush1.bf16.msra.mxu0 0
        %2832 = vmatprep.subr.bf16.mxu0 0
        %2833 = vmatpush1.bf16.msra.mxu0 0
        %2834 = vmatprep.subr.bf16.mxu0 0
        %2835 = vmatpush1.bf16.msra.mxu0 0
        %2836 = vmatprep.subr.bf16.mxu0 0
        %2837 = vmatpush1.bf16.msra.mxu0 0
        %2838 = vmatprep.subr.bf16.mxu0 0
        %2839 = vmatpush1.bf16.msra.mxu0 0
        %2840 = vmatprep.subr.bf16.mxu0 0
        %2841 = vmatpush1.bf16.msra.mxu0 0
        %2842 = vmatprep.subr.bf16.mxu0 0
        %2843 = vmatpush1.bf16.msra.mxu0 %v2827
        %2844 = vmatprep.subr.bf16.mxu0 0
        %2845 = vmatpush1.bf16.msra.mxu0 %v2826
        %2846 = vmatprep.subr.bf16.mxu0 0
        %2847 = vmatpush2.bf16.msra.mxu0 0
        %2848 = vmatprep.subr.bf16.mxu0 0
        %2849 = vmatpush2.bf16.msra.mxu0 0
        %2850 = vmatprep.subr.bf16.mxu0 0
        %2851 = vmatpush2.bf16.msra.mxu0 0
        %2852 = vmatprep.subr.bf16.mxu0 0
        %2853 = vmatpush2.bf16.msra.mxu0 0
        %2854 = vmatprep.subr.bf16.mxu0 0
        %2855 = vmatpush2.bf16.msra.mxu0 0
        %2856 = vmatprep.subr.bf16.mxu0 0
        %2857 = vmatpush2.bf16.msra.mxu0 0
        %2858 = vmatprep.subr.bf16.mxu0 0
        %2859 = vmatpush2.bf16.msra.mxu0 0
        %2860 = vmatprep.subr.bf16.mxu0 0
        %2861 = vmatpush2.bf16.msra.mxu0 0
        %2862 = vmatprep.mubr.bf16.mxu0 0
        %2863 = vmatmul.mubr.bf16.gmra.mxu0 %v2164
        %v2864 = vpop.f32.mrf.mxu0
        %v2865 = vadd.f32 %v2657, %v2864
        %v2866 = vpop.f32.mrf.mxu0
        %v2867 = vpop.f32.mrf.mxu0
        %v2868 = vpop.f32.mrf.mxu0
        %2869 = vdwg.mxu0
        %v2870 = vpack.c.bf16 %v2201, %v2201
        %v2871 = vpack.c.bf16 %v2253, %v2253
        %v2872 = vpack.c.bf16 %v2305, %v2305
        %v2873 = vpack.c.bf16 %v2357, %v2357
        %v2874 = vpack.c.bf16 %v2455, %v2455
        %v2875 = vpack.c.bf16 %v2507, %v2507
        %v2876 = vpack.c.bf16 %v2559, %v2559
        %v2877 = vpack.c.bf16 %v2611, %v2611
        %v2879 = vsel %vm1246, %v2870, 0
        %v2882 = vsel %vm1246, %v2874, 0
        %2884 = vmatprep.subr.bf16.mxu0 0
        %2885 = vmatpush1.bf16.xpose.msra.mxu0 0
        %2886 = vmatprep.subr.bf16.mxu0 0
        %2887 = vmatpush1.bf16.xpose.msra.mxu0 0
        %2888 = vmatprep.subr.bf16.mxu0 0
        %2889 = vmatpush1.bf16.xpose.msra.mxu0 0
        %2890 = vmatprep.subr.bf16.mxu0 0
        %2891 = vmatpush1.bf16.xpose.msra.mxu0 0
        %2892 = vmatprep.subr.bf16.mxu0 0
        %2893 = vmatpush1.bf16.xpose.msra.mxu0 0
        %2894 = vmatprep.subr.bf16.mxu0 0
        %2895 = vmatpush1.bf16.xpose.msra.mxu0 0
        %2896 = vmatprep.subr.bf16.mxu0 0
        %2897 = vmatpush1.bf16.xpose.msra.mxu0 0
        %2898 = vmatprep.subr.bf16.mxu0 0
        %2899 = vmatpush1.bf16.xpose.msra.mxu0 %v2882
        %2900 = vmatprep.subr.bf16.mxu0 0
        %2901 = vmatpush2.bf16.xpose.msra.mxu0 0
        %2902 = vmatprep.subr.bf16.mxu0 0
        %2903 = vmatpush2.bf16.xpose.msra.mxu0 0
        %2904 = vmatprep.subr.bf16.mxu0 0
        %2905 = vmatpush2.bf16.xpose.msra.mxu0 0
        %2906 = vmatprep.subr.bf16.mxu0 0
        %2907 = vmatpush2.bf16.xpose.msra.mxu0 0
        %2908 = vmatprep.subr.bf16.mxu0 0
        %2909 = vmatpush2.bf16.xpose.msra.mxu0 0
        %2910 = vmatprep.subr.bf16.mxu0 0
        %2911 = vmatpush2.bf16.xpose.msra.mxu0 0
        %2912 = vmatprep.subr.bf16.mxu0 0
        %2913 = vmatpush2.bf16.xpose.msra.mxu0 0
        %2914 = vmatprep.subr.bf16.mxu0 0
        %2915 = vmatpush2.bf16.xpose.msra.mxu0 0
        %2916 = vmatprep.mubr.bf16.mxu0 0
        %2917 = vmatmul.mubr.bf16.gmra.mxu0 %v2879
        %v2918 = vpop.f32.mrf.mxu0
        %v2919 = vadd.f32 0.0, %v2918
        %v2920 = vpop.f32.mrf.mxu0
        %v2921 = vpop.f32.mrf.mxu0
        %v2922 = vpop.f32.mrf.mxu0
        %2923 = vdwg.mxu0
        %v2925 = vsel %vm1246, %v2871, 0
        %v2928 = vsel %vm1246, %v2875, 0
        %2930 = vmatprep.subr.bf16.mxu0 0
        %2931 = vmatpush1.bf16.xpose.msra.mxu0 0
        %2932 = vmatprep.subr.bf16.mxu0 0
        %2933 = vmatpush1.bf16.xpose.msra.mxu0 0
        %2934 = vmatprep.subr.bf16.mxu0 0
        %2935 = vmatpush1.bf16.xpose.msra.mxu0 0
        %2936 = vmatprep.subr.bf16.mxu0 0
        %2937 = vmatpush1.bf16.xpose.msra.mxu0 0
        %2938 = vmatprep.subr.bf16.mxu0 0
        %2939 = vmatpush1.bf16.xpose.msra.mxu0 0
        %2940 = vmatprep.subr.bf16.mxu0 0
        %2941 = vmatpush1.bf16.xpose.msra.mxu0 0
        %2942 = vmatprep.subr.bf16.mxu0 0
        %2943 = vmatpush1.bf16.xpose.msra.mxu0 0
        %2944 = vmatprep.subr.bf16.mxu0 0
        %2945 = vmatpush1.bf16.xpose.msra.mxu0 %v2928
        %2946 = vmatprep.subr.bf16.mxu0 0
        %2947 = vmatpush2.bf16.xpose.msra.mxu0 0
        %2948 = vmatprep.subr.bf16.mxu0 0
        %2949 = vmatpush2.bf16.xpose.msra.mxu0 0
        %2950 = vmatprep.subr.bf16.mxu0 0
        %2951 = vmatpush2.bf16.xpose.msra.mxu0 0
        %2952 = vmatprep.subr.bf16.mxu0 0
        %2953 = vmatpush2.bf16.xpose.msra.mxu0 0
        %2954 = vmatprep.subr.bf16.mxu0 0
        %2955 = vmatpush2.bf16.xpose.msra.mxu0 0
        %2956 = vmatprep.subr.bf16.mxu0 0
        %2957 = vmatpush2.bf16.xpose.msra.mxu0 0
        %2958 = vmatprep.subr.bf16.mxu0 0
        %2959 = vmatpush2.bf16.xpose.msra.mxu0 0
        %2960 = vmatprep.subr.bf16.mxu0 0
        %2961 = vmatpush2.bf16.xpose.msra.mxu0 0
        %2962 = vmatprep.mubr.bf16.mxu0 0
        %2963 = vmatmul.mubr.bf16.gmra.mxu0 %v2925
        %v2964 = vpop.f32.mrf.mxu0
        %v2965 = vadd.f32 0.0, %v2964
        %v2966 = vpop.f32.mrf.mxu0
        %v2967 = vpop.f32.mrf.mxu0
        %v2968 = vpop.f32.mrf.mxu0
        %2969 = vdwg.mxu0
        %v2971 = vsel %vm1246, %v2872, 0
        %v2974 = vsel %vm1246, %v2876, 0
        %2976 = vmatprep.subr.bf16.mxu0 0
        %2977 = vmatpush1.bf16.xpose.msra.mxu0 0
        %2978 = vmatprep.subr.bf16.mxu0 0
        %2979 = vmatpush1.bf16.xpose.msra.mxu0 0
        %2980 = vmatprep.subr.bf16.mxu0 0
        %2981 = vmatpush1.bf16.xpose.msra.mxu0 0
        %2982 = vmatprep.subr.bf16.mxu0 0
        %2983 = vmatpush1.bf16.xpose.msra.mxu0 0
        %2984 = vmatprep.subr.bf16.mxu0 0
        %2985 = vmatpush1.bf16.xpose.msra.mxu0 0
        %2986 = vmatprep.subr.bf16.mxu0 0
        %2987 = vmatpush1.bf16.xpose.msra.mxu0 0
        %2988 = vmatprep.subr.bf16.mxu0 0
        %2989 = vmatpush1.bf16.xpose.msra.mxu0 0
        %2990 = vmatprep.subr.bf16.mxu0 0
        %2991 = vmatpush1.bf16.xpose.msra.mxu0 %v2974
        %2992 = vmatprep.subr.bf16.mxu0 0
        %2993 = vmatpush2.bf16.xpose.msra.mxu0 0
        %2994 = vmatprep.subr.bf16.mxu0 0
        %2995 = vmatpush2.bf16.xpose.msra.mxu0 0
        %2996 = vmatprep.subr.bf16.mxu0 0
        %2997 = vmatpush2.bf16.xpose.msra.mxu0 0
        %2998 = vmatprep.subr.bf16.mxu0 0
        %2999 = vmatpush2.bf16.xpose.msra.mxu0 0
        %3000 = vmatprep.subr.bf16.mxu0 0
        %3001 = vmatpush2.bf16.xpose.msra.mxu0 0
        %3002 = vmatprep.subr.bf16.mxu0 0
        %3003 = vmatpush2.bf16.xpose.msra.mxu0 0
        %3004 = vmatprep.subr.bf16.mxu0 0
        %3005 = vmatpush2.bf16.xpose.msra.mxu0 0
        %3006 = vmatprep.subr.bf16.mxu0 0
        %3007 = vmatpush2.bf16.xpose.msra.mxu0 0
        %3008 = vmatprep.mubr.bf16.mxu0 0
        %3009 = vmatmul.mubr.bf16.gmra.mxu0 %v2971
        %v3010 = vpop.f32.mrf.mxu0
        %v3011 = vadd.f32 0.0, %v3010
        %v3012 = vpop.f32.mrf.mxu0
        %v3013 = vpop.f32.mrf.mxu0
        %v3014 = vpop.f32.mrf.mxu0
        %3015 = vdwg.mxu0
        %v3017 = vsel %vm1246, %v2873, 0
        %v3020 = vsel %vm1246, %v2877, 0
        %3022 = vmatprep.subr.bf16.mxu0 0
        %3023 = vmatpush1.bf16.xpose.msra.mxu0 0
        %3024 = vmatprep.subr.bf16.mxu0 0
        %3025 = vmatpush1.bf16.xpose.msra.mxu0 0
        %3026 = vmatprep.subr.bf16.mxu0 0
        %3027 = vmatpush1.bf16.xpose.msra.mxu0 0
        %3028 = vmatprep.subr.bf16.mxu0 0
        %3029 = vmatpush1.bf16.xpose.msra.mxu0 0
        %3030 = vmatprep.subr.bf16.mxu0 0
        %3031 = vmatpush1.bf16.xpose.msra.mxu0 0
        %3032 = vmatprep.subr.bf16.mxu0 0
        %3033 = vmatpush1.bf16.xpose.msra.mxu0 0
        %3034 = vmatprep.subr.bf16.mxu0 0
        %3035 = vmatpush1.bf16.xpose.msra.mxu0 0
        %3036 = vmatprep.subr.bf16.mxu0 0
        %3037 = vmatpush1.bf16.xpose.msra.mxu0 %v3020
        %3038 = vmatprep.subr.bf16.mxu0 0
        %3039 = vmatpush2.bf16.xpose.msra.mxu0 0
        %3040 = vmatprep.subr.bf16.mxu0 0
        %3041 = vmatpush2.bf16.xpose.msra.mxu0 0
        %3042 = vmatprep.subr.bf16.mxu0 0
        %3043 = vmatpush2.bf16.xpose.msra.mxu0 0
        %3044 = vmatprep.subr.bf16.mxu0 0
        %3045 = vmatpush2.bf16.xpose.msra.mxu0 0
        %3046 = vmatprep.subr.bf16.mxu0 0
        %3047 = vmatpush2.bf16.xpose.msra.mxu0 0
        %3048 = vmatprep.subr.bf16.mxu0 0
        %3049 = vmatpush2.bf16.xpose.msra.mxu0 0
        %3050 = vmatprep.subr.bf16.mxu0 0
        %3051 = vmatpush2.bf16.xpose.msra.mxu0 0
        %3052 = vmatprep.subr.bf16.mxu0 0
        %3053 = vmatpush2.bf16.xpose.msra.mxu0 0
        %3054 = vmatprep.mubr.bf16.mxu0 0
        %3055 = vmatmul.mubr.bf16.gmra.mxu0 %v3017
        %v3056 = vpop.f32.mrf.mxu0
        %v3057 = vadd.f32 0.0, %v3056
        %v3058 = vpop.f32.mrf.mxu0
        %v3059 = vpop.f32.mrf.mxu0
        %v3060 = vpop.f32.mrf.mxu0
        %3061 = vdwg.mxu0
        %v3062 = vsel %vm1246, %v2919, -inf
        %3063 = vmax.xlane.f32.xlu0 %v3062
        %v3064 = vpop.xlane.xlu0 %3063
        %v3065 = vsel %vm1246, %v2965, -inf
        %3066 = vmax.xlane.f32.xlu0 %v3065
        %v3067 = vpop.xlane.xlu0 %3066
        %v3068 = vsel %vm1246, %v3011, -inf
        %3069 = vmax.xlane.f32.xlu0 %v3068
        %v3070 = vpop.xlane.xlu0 %3069
        %v3071 = vsel %vm1246, %v3057, -inf
        %3072 = vmax.xlane.f32.xlu0 %v3071
        %v3073 = vpop.xlane.xlu0 %3072
        %v3074 = vsub.f32 %v2919, %v3064
        %v3075 = vsub.f32 %v2965, %v3067
        %v3076 = vsub.f32 %v3011, %v3070
        %v3077 = vsub.f32 %v3057, %v3073
        %v3078 = vmul.f32 %v3074, 1.442695
        %v3079 = vpow.pop %v3078
        %v3080 = vmul.f32 %v3075, 1.442695
        %v3081 = vpow.pop %v3080
        %v3082 = vmul.f32 %v3076, 1.442695
        %v3083 = vpow.pop %v3082
        %v3084 = vmul.f32 %v3077, 1.442695
        %v3085 = vpow.pop %v3084
        %v3086 = vsel %vm1246, %v3079, 0.0
        %3087 = vadd.xlane.f32.xlu0 %v3086
        %v3088 = vpop.xlane.xlu0 %3087
        %v3089 = vsel %vm1246, %v3081, 0.0
        %3090 = vadd.xlane.f32.xlu0 %v3089
        %v3091 = vpop.xlane.xlu0 %3090
        %v3092 = vsel %vm1246, %v3083, 0.0
        %3093 = vadd.xlane.f32.xlu0 %v3092
        %v3094 = vpop.xlane.xlu0 %3093
        %v3095 = vsel %vm1246, %v3085, 0.0
        %3096 = vadd.xlane.f32.xlu0 %v3095
        %v3097 = vpop.xlane.xlu0 %3096
        %v3098 = vrcp.pop %v3088
        %v3099 = vrcp.pop %v3091
        %v3100 = vrcp.pop %v3094
        %v3101 = vrcp.pop %v3097
        %v3102 = vmul.f32 %v3079, %v3098
        %v3103 = vmul.f32 %v3081, %v3099
        %v3104 = vmul.f32 %v3083, %v3100
        %v3105 = vmul.f32 %v3085, %v3101
        %v3106 = vpack.c.bf16 %v3102, %v3102
        %v3107 = vpack.c.bf16 %v3103, %v3103
        %v3108 = vpack.c.bf16 %v3104, %v3104
        %v3109 = vpack.c.bf16 %v3105, %v3105
        %v3110 = vpack.c.bf16 %v2709, %v2709
        %v3111 = vpack.c.bf16 %v2761, %v2761
        %v3112 = vpack.c.bf16 %v2813, %v2813
        %v3113 = vpack.c.bf16 %v2865, %v2865
        %v3115 = vsel %vm1246, %v3106, 0
        %v3118 = vsel %vm1486, %v3110, 0
        %3120 = vmatprep.subr.bf16.mxu0 0
        %3121 = vmatpush1.bf16.msra.mxu0 0
        %3122 = vmatprep.subr.bf16.mxu0 0
        %3123 = vmatpush1.bf16.msra.mxu0 0
        %3124 = vmatprep.subr.bf16.mxu0 0
        %3125 = vmatpush1.bf16.msra.mxu0 0
        %3126 = vmatprep.subr.bf16.mxu0 0
        %3127 = vmatpush1.bf16.msra.mxu0 0
        %3128 = vmatprep.subr.bf16.mxu0 0
        %3129 = vmatpush1.bf16.msra.mxu0 0
        %3130 = vmatprep.subr.bf16.mxu0 0
        %3131 = vmatpush1.bf16.msra.mxu0 0
        %3132 = vmatprep.subr.bf16.mxu0 0
        %3133 = vmatpush1.bf16.msra.mxu0 0
        %3134 = vmatprep.subr.bf16.mxu0 0
        %3135 = vmatpush1.bf16.msra.mxu0 %v3118
        %3136 = vmatprep.subr.bf16.mxu0 0
        %3137 = vmatpush2.bf16.msra.mxu0 0
        %3138 = vmatprep.subr.bf16.mxu0 0
        %3139 = vmatpush2.bf16.msra.mxu0 0
        %3140 = vmatprep.subr.bf16.mxu0 0
        %3141 = vmatpush2.bf16.msra.mxu0 0
        %3142 = vmatprep.subr.bf16.mxu0 0
        %3143 = vmatpush2.bf16.msra.mxu0 0
        %3144 = vmatprep.subr.bf16.mxu0 0
        %3145 = vmatpush2.bf16.msra.mxu0 0
        %3146 = vmatprep.subr.bf16.mxu0 0
        %3147 = vmatpush2.bf16.msra.mxu0 0
        %3148 = vmatprep.subr.bf16.mxu0 0
        %3149 = vmatpush2.bf16.msra.mxu0 0
        %3150 = vmatprep.subr.bf16.mxu0 0
        %3151 = vmatpush2.bf16.msra.mxu0 0
        %3152 = vmatprep.mubr.bf16.mxu0 0
        %3153 = vmatmul.mubr.bf16.gmra.mxu0 %v3115
        %v3154 = vpop.f32.mrf.mxu0
        %v3155 = vadd.f32 0.0, %v3154
        %v3156 = vpop.f32.mrf.mxu0
        %v3157 = vpop.f32.mrf.mxu0
        %v3158 = vpop.f32.mrf.mxu0
        %3159 = vdwg.mxu0
        %v3161 = vsel %vm1246, %v3107, 0
        %v3164 = vsel %vm1486, %v3111, 0
        %3166 = vmatprep.subr.bf16.mxu0 0
        %3167 = vmatpush1.bf16.msra.mxu0 0
        %3168 = vmatprep.subr.bf16.mxu0 0
        %3169 = vmatpush1.bf16.msra.mxu0 0
        %3170 = vmatprep.subr.bf16.mxu0 0
        %3171 = vmatpush1.bf16.msra.mxu0 0
        %3172 = vmatprep.subr.bf16.mxu0 0
        %3173 = vmatpush1.bf16.msra.mxu0 0
        %3174 = vmatprep.subr.bf16.mxu0 0
        %3175 = vmatpush1.bf16.msra.mxu0 0
        %3176 = vmatprep.subr.bf16.mxu0 0
        %3177 = vmatpush1.bf16.msra.mxu0 0
        %3178 = vmatprep.subr.bf16.mxu0 0
        %3179 = vmatpush1.bf16.msra.mxu0 0
        %3180 = vmatprep.subr.bf16.mxu0 0
        %3181 = vmatpush1.bf16.msra.mxu0 %v3164
        %3182 = vmatprep.subr.bf16.mxu0 0
        %3183 = vmatpush2.bf16.msra.mxu0 0
        %3184 = vmatprep.subr.bf16.mxu0 0
        %3185 = vmatpush2.bf16.msra.mxu0 0
        %3186 = vmatprep.subr.bf16.mxu0 0
        %3187 = vmatpush2.bf16.msra.mxu0 0
        %3188 = vmatprep.subr.bf16.mxu0 0
        %3189 = vmatpush2.bf16.msra.mxu0 0
        %3190 = vmatprep.subr.bf16.mxu0 0
        %3191 = vmatpush2.bf16.msra.mxu0 0
        %3192 = vmatprep.subr.bf16.mxu0 0
        %3193 = vmatpush2.bf16.msra.mxu0 0
        %3194 = vmatprep.subr.bf16.mxu0 0
        %3195 = vmatpush2.bf16.msra.mxu0 0
        %3196 = vmatprep.subr.bf16.mxu0 0
        %3197 = vmatpush2.bf16.msra.mxu0 0
        %3198 = vmatprep.mubr.bf16.mxu0 0
        %3199 = vmatmul.mubr.bf16.gmra.mxu0 %v3161
        %v3200 = vpop.f32.mrf.mxu0
        %v3201 = vadd.f32 0.0, %v3200
        %v3202 = vpop.f32.mrf.mxu0
        %v3203 = vpop.f32.mrf.mxu0
        %v3204 = vpop.f32.mrf.mxu0
        %3205 = vdwg.mxu0
        %v3207 = vsel %vm1246, %v3108, 0
        %v3210 = vsel %vm1486, %v3112, 0
        %3212 = vmatprep.subr.bf16.mxu0 0
        %3213 = vmatpush1.bf16.msra.mxu0 0
        %3214 = vmatprep.subr.bf16.mxu0 0
        %3215 = vmatpush1.bf16.msra.mxu0 0
        %3216 = vmatprep.subr.bf16.mxu0 0
        %3217 = vmatpush1.bf16.msra.mxu0 0
        %3218 = vmatprep.subr.bf16.mxu0 0
        %3219 = vmatpush1.bf16.msra.mxu0 0
        %3220 = vmatprep.subr.bf16.mxu0 0
        %3221 = vmatpush1.bf16.msra.mxu0 0
        %3222 = vmatprep.subr.bf16.mxu0 0
        %3223 = vmatpush1.bf16.msra.mxu0 0
        %3224 = vmatprep.subr.bf16.mxu0 0
        %3225 = vmatpush1.bf16.msra.mxu0 0
        %3226 = vmatprep.subr.bf16.mxu0 0
        %3227 = vmatpush1.bf16.msra.mxu0 %v3210
        %3228 = vmatprep.subr.bf16.mxu0 0
        %3229 = vmatpush2.bf16.msra.mxu0 0
        %3230 = vmatprep.subr.bf16.mxu0 0
        %3231 = vmatpush2.bf16.msra.mxu0 0
        %3232 = vmatprep.subr.bf16.mxu0 0
        %3233 = vmatpush2.bf16.msra.mxu0 0
        %3234 = vmatprep.subr.bf16.mxu0 0
        %3235 = vmatpush2.bf16.msra.mxu0 0
        %3236 = vmatprep.subr.bf16.mxu0 0
        %3237 = vmatpush2.bf16.msra.mxu0 0
        %3238 = vmatprep.subr.bf16.mxu0 0
        %3239 = vmatpush2.bf16.msra.mxu0 0
        %3240 = vmatprep.subr.bf16.mxu0 0
        %3241 = vmatpush2.bf16.msra.mxu0 0
        %3242 = vmatprep.subr.bf16.mxu0 0
        %3243 = vmatpush2.bf16.msra.mxu0 0
        %3244 = vmatprep.mubr.bf16.mxu0 0
        %3245 = vmatmul.mubr.bf16.gmra.mxu0 %v3207
        %v3246 = vpop.f32.mrf.mxu0
        %v3247 = vadd.f32 0.0, %v3246
        %v3248 = vpop.f32.mrf.mxu0
        %v3249 = vpop.f32.mrf.mxu0
        %v3250 = vpop.f32.mrf.mxu0
        %3251 = vdwg.mxu0
        %v3253 = vsel %vm1246, %v3109, 0
        %v3256 = vsel %vm1486, %v3113, 0
        %3258 = vmatprep.subr.bf16.mxu0 0
        %3259 = vmatpush1.bf16.msra.mxu0 0
        %3260 = vmatprep.subr.bf16.mxu0 0
        %3261 = vmatpush1.bf16.msra.mxu0 0
        %3262 = vmatprep.subr.bf16.mxu0 0
        %3263 = vmatpush1.bf16.msra.mxu0 0
        %3264 = vmatprep.subr.bf16.mxu0 0
        %3265 = vmatpush1.bf16.msra.mxu0 0
        %3266 = vmatprep.subr.bf16.mxu0 0
        %3267 = vmatpush1.bf16.msra.mxu0 0
        %3268 = vmatprep.subr.bf16.mxu0 0
        %3269 = vmatpush1.bf16.msra.mxu0 0
        %3270 = vmatprep.subr.bf16.mxu0 0
        %3271 = vmatpush1.bf16.msra.mxu0 0
        %3272 = vmatprep.subr.bf16.mxu0 0
        %3273 = vmatpush1.bf16.msra.mxu0 %v3256
        %3274 = vmatprep.subr.bf16.mxu0 0
        %3275 = vmatpush2.bf16.msra.mxu0 0
        %3276 = vmatprep.subr.bf16.mxu0 0
        %3277 = vmatpush2.bf16.msra.mxu0 0
        %3278 = vmatprep.subr.bf16.mxu0 0
        %3279 = vmatpush2.bf16.msra.mxu0 0
        %3280 = vmatprep.subr.bf16.mxu0 0
        %3281 = vmatpush2.bf16.msra.mxu0 0
        %3282 = vmatprep.subr.bf16.mxu0 0
        %3283 = vmatpush2.bf16.msra.mxu0 0
        %3284 = vmatprep.subr.bf16.mxu0 0
        %3285 = vmatpush2.bf16.msra.mxu0 0
        %3286 = vmatprep.subr.bf16.mxu0 0
        %3287 = vmatpush2.bf16.msra.mxu0 0
        %3288 = vmatprep.subr.bf16.mxu0 0
        %3289 = vmatpush2.bf16.msra.mxu0 0
        %3290 = vmatprep.mubr.bf16.mxu0 0
        %3291 = vmatmul.mubr.bf16.gmra.mxu0 %v3253
        %v3292 = vpop.f32.mrf.mxu0
        %v3293 = vadd.f32 0.0, %v3292
        %v3294 = vpop.f32.mrf.mxu0
        %v3295 = vpop.f32.mrf.mxu0
        %v3296 = vpop.f32.mrf.mxu0
        %3297 = vdwg.mxu0
        %v3298 = vpack.c.bf16 %v3155, %v3155
        %v3299 = vpack.c.bf16 %v3201, %v3201
        %v3300 = vpack.c.bf16 %v3247, %v3247
        %v3301 = vpack.c.bf16 %v3293, %v3293
        %s3302 = scalar_lea.vmem %s5, 16
        %v3303 = vld [vmem:[%s3302] sm:$0xf]
        %v3304 = vld [vmem:[%s3302 + $0x4] sm:$0xf]
        %v3305 = vld [vmem:[%s3302 + $0x8] sm:$0xf]
        %v3306 = vld [vmem:[%s3302 + $0xc] sm:$0xf]
        %v3308 = vsel %vm1246, %v3298, 0
        %v3311 = vsel %vm1486, %v3303, 0
        %3313 = vmatprep.subr.bf16.mxu0 0
        %3314 = vmatpush1.bf16.msra.mxu0 0
        %3315 = vmatprep.subr.bf16.mxu0 0
        %3316 = vmatpush1.bf16.msra.mxu0 0
        %3317 = vmatprep.subr.bf16.mxu0 0
        %3318 = vmatpush1.bf16.msra.mxu0 0
        %3319 = vmatprep.subr.bf16.mxu0 0
        %3320 = vmatpush1.bf16.msra.mxu0 0
        %3321 = vmatprep.subr.bf16.mxu0 0
        %3322 = vmatpush1.bf16.msra.mxu0 0
        %3323 = vmatprep.subr.bf16.mxu0 0
        %3324 = vmatpush1.bf16.msra.mxu0 0
        %3325 = vmatprep.subr.bf16.mxu0 0
        %3326 = vmatpush1.bf16.msra.mxu0 0
        %3327 = vmatprep.subr.bf16.mxu0 0
        %3328 = vmatpush1.bf16.msra.mxu0 %v3311
        %3329 = vmatprep.subr.bf16.mxu0 0
        %3330 = vmatpush2.bf16.msra.mxu0 0
        %3331 = vmatprep.subr.bf16.mxu0 0
        %3332 = vmatpush2.bf16.msra.mxu0 0
        %3333 = vmatprep.subr.bf16.mxu0 0
        %3334 = vmatpush2.bf16.msra.mxu0 0
        %3335 = vmatprep.subr.bf16.mxu0 0
        %3336 = vmatpush2.bf16.msra.mxu0 0
        %3337 = vmatprep.subr.bf16.mxu0 0
        %3338 = vmatpush2.bf16.msra.mxu0 0
        %3339 = vmatprep.subr.bf16.mxu0 0
        %3340 = vmatpush2.bf16.msra.mxu0 0
        %3341 = vmatprep.subr.bf16.mxu0 0
        %3342 = vmatpush2.bf16.msra.mxu0 0
        %3343 = vmatprep.subr.bf16.mxu0 0
        %3344 = vmatpush2.bf16.msra.mxu0 0
        %3345 = vmatprep.mubr.bf16.mxu0 0
        %3346 = vmatmul.mubr.bf16.gmra.mxu0 %v3308
        %v3347 = vpop.f32.mrf.mxu0
        %v3348 = vadd.f32 0.0, %v3347
        %v3349 = vpop.f32.mrf.mxu0
        %v3350 = vpop.f32.mrf.mxu0
        %v3351 = vpop.f32.mrf.mxu0
        %3352 = vdwg.mxu0
        %v3354 = vsel %vm1246, %v3299, 0
        %v3357 = vsel %vm1486, %v3304, 0
        %3359 = vmatprep.subr.bf16.mxu0 0
        %3360 = vmatpush1.bf16.msra.mxu0 0
        %3361 = vmatprep.subr.bf16.mxu0 0
        %3362 = vmatpush1.bf16.msra.mxu0 0
        %3363 = vmatprep.subr.bf16.mxu0 0
        %3364 = vmatpush1.bf16.msra.mxu0 0
        %3365 = vmatprep.subr.bf16.mxu0 0
        %3366 = vmatpush1.bf16.msra.mxu0 0
        %3367 = vmatprep.subr.bf16.mxu0 0
        %3368 = vmatpush1.bf16.msra.mxu0 0
        %3369 = vmatprep.subr.bf16.mxu0 0
        %3370 = vmatpush1.bf16.msra.mxu0 0
        %3371 = vmatprep.subr.bf16.mxu0 0
        %3372 = vmatpush1.bf16.msra.mxu0 0
        %3373 = vmatprep.subr.bf16.mxu0 0
        %3374 = vmatpush1.bf16.msra.mxu0 %v3357
        %3375 = vmatprep.subr.bf16.mxu0 0
        %3376 = vmatpush2.bf16.msra.mxu0 0
        %3377 = vmatprep.subr.bf16.mxu0 0
        %3378 = vmatpush2.bf16.msra.mxu0 0
        %3379 = vmatprep.subr.bf16.mxu0 0
        %3380 = vmatpush2.bf16.msra.mxu0 0
        %3381 = vmatprep.subr.bf16.mxu0 0
        %3382 = vmatpush2.bf16.msra.mxu0 0
        %3383 = vmatprep.subr.bf16.mxu0 0
        %3384 = vmatpush2.bf16.msra.mxu0 0
        %3385 = vmatprep.subr.bf16.mxu0 0
        %3386 = vmatpush2.bf16.msra.mxu0 0
        %3387 = vmatprep.subr.bf16.mxu0 0
        %3388 = vmatpush2.bf16.msra.mxu0 0
        %3389 = vmatprep.subr.bf16.mxu0 0
        %3390 = vmatpush2.bf16.msra.mxu0 0
        %3391 = vmatprep.mubr.bf16.mxu0 0
        %3392 = vmatmul.mubr.bf16.gmra.mxu0 %v3354
        %v3393 = vpop.f32.mrf.mxu0
        %v3394 = vadd.f32 0.0, %v3393
        %v3395 = vpop.f32.mrf.mxu0
        %v3396 = vpop.f32.mrf.mxu0
        %v3397 = vpop.f32.mrf.mxu0
        %3398 = vdwg.mxu0
        %v3400 = vsel %vm1246, %v3300, 0
        %v3403 = vsel %vm1486, %v3305, 0
        %3405 = vmatprep.subr.bf16.mxu0 0
        %3406 = vmatpush1.bf16.msra.mxu0 0
        %3407 = vmatprep.subr.bf16.mxu0 0
        %3408 = vmatpush1.bf16.msra.mxu0 0
        %3409 = vmatprep.subr.bf16.mxu0 0
        %3410 = vmatpush1.bf16.msra.mxu0 0
        %3411 = vmatprep.subr.bf16.mxu0 0
        %3412 = vmatpush1.bf16.msra.mxu0 0
        %3413 = vmatprep.subr.bf16.mxu0 0
        %3414 = vmatpush1.bf16.msra.mxu0 0
        %3415 = vmatprep.subr.bf16.mxu0 0
        %3416 = vmatpush1.bf16.msra.mxu0 0
        %3417 = vmatprep.subr.bf16.mxu0 0
        %3418 = vmatpush1.bf16.msra.mxu0 0
        %3419 = vmatprep.subr.bf16.mxu0 0
        %3420 = vmatpush1.bf16.msra.mxu0 %v3403
        %3421 = vmatprep.subr.bf16.mxu0 0
        %3422 = vmatpush2.bf16.msra.mxu0 0
        %3423 = vmatprep.subr.bf16.mxu0 0
        %3424 = vmatpush2.bf16.msra.mxu0 0
        %3425 = vmatprep.subr.bf16.mxu0 0
        %3426 = vmatpush2.bf16.msra.mxu0 0
        %3427 = vmatprep.subr.bf16.mxu0 0
        %3428 = vmatpush2.bf16.msra.mxu0 0
        %3429 = vmatprep.subr.bf16.mxu0 0
        %3430 = vmatpush2.bf16.msra.mxu0 0
        %3431 = vmatprep.subr.bf16.mxu0 0
        %3432 = vmatpush2.bf16.msra.mxu0 0
        %3433 = vmatprep.subr.bf16.mxu0 0
        %3434 = vmatpush2.bf16.msra.mxu0 0
        %3435 = vmatprep.subr.bf16.mxu0 0
        %3436 = vmatpush2.bf16.msra.mxu0 0
        %3437 = vmatprep.mubr.bf16.mxu0 0
        %3438 = vmatmul.mubr.bf16.gmra.mxu0 %v3400
        %v3439 = vpop.f32.mrf.mxu0
        %v3440 = vadd.f32 0.0, %v3439
        %v3441 = vpop.f32.mrf.mxu0
        %v3442 = vpop.f32.mrf.mxu0
        %v3443 = vpop.f32.mrf.mxu0
        %3444 = vdwg.mxu0
        %v3446 = vsel %vm1246, %v3301, 0
        %v3449 = vsel %vm1486, %v3306, 0
        %3451 = vmatprep.subr.bf16.mxu0 0
        %3452 = vmatpush1.bf16.msra.mxu0 0
        %3453 = vmatprep.subr.bf16.mxu0 0
        %3454 = vmatpush1.bf16.msra.mxu0 0
        %3455 = vmatprep.subr.bf16.mxu0 0
        %3456 = vmatpush1.bf16.msra.mxu0 0
        %3457 = vmatprep.subr.bf16.mxu0 0
        %3458 = vmatpush1.bf16.msra.mxu0 0
        %3459 = vmatprep.subr.bf16.mxu0 0
        %3460 = vmatpush1.bf16.msra.mxu0 0
        %3461 = vmatprep.subr.bf16.mxu0 0
        %3462 = vmatpush1.bf16.msra.mxu0 0
        %3463 = vmatprep.subr.bf16.mxu0 0
        %3464 = vmatpush1.bf16.msra.mxu0 0
        %3465 = vmatprep.subr.bf16.mxu0 0
        %3466 = vmatpush1.bf16.msra.mxu0 %v3449
        %3467 = vmatprep.subr.bf16.mxu0 0
        %3468 = vmatpush2.bf16.msra.mxu0 0
        %3469 = vmatprep.subr.bf16.mxu0 0
        %3470 = vmatpush2.bf16.msra.mxu0 0
        %3471 = vmatprep.subr.bf16.mxu0 0
        %3472 = vmatpush2.bf16.msra.mxu0 0
        %3473 = vmatprep.subr.bf16.mxu0 0
        %3474 = vmatpush2.bf16.msra.mxu0 0
        %3475 = vmatprep.subr.bf16.mxu0 0
        %3476 = vmatpush2.bf16.msra.mxu0 0
        %3477 = vmatprep.subr.bf16.mxu0 0
        %3478 = vmatpush2.bf16.msra.mxu0 0
        %3479 = vmatprep.subr.bf16.mxu0 0
        %3480 = vmatpush2.bf16.msra.mxu0 0
        %3481 = vmatprep.subr.bf16.mxu0 0
        %3482 = vmatpush2.bf16.msra.mxu0 0
        %3483 = vmatprep.mubr.bf16.mxu0 0
        %3484 = vmatmul.mubr.bf16.gmra.mxu0 %v3446
        %v3485 = vpop.f32.mrf.mxu0
        %v3486 = vadd.f32 0.0, %v3485
        %v3487 = vpop.f32.mrf.mxu0
        %v3488 = vpop.f32.mrf.mxu0
        %v3489 = vpop.f32.mrf.mxu0
        %3490 = vdwg.mxu0
        %v3491 = vsel %vm430, %v3348, 0.0
        %v3492 = vsel %vm430, %v3394, 0.0
        %v3493 = vadd.f32 %v3491, %v3492
        %v3494 = vsel %vm430, %v3440, 0.0
        %v3495 = vadd.f32 %v3493, %v3494
        %v3496 = vsel %vm430, %v3486, 0.0
        %v3497 = vadd.f32 %v3495, %v3496
        %s3498 = scalar_lea.vmem %s6, 8
        %v3499 = vld [vmem:[%s3498] sm:$0x1]
        %v3500 = vlaneseq
        %v3501 = vshrl.u32 %v3500, 7
        %v3502 = vsub.s32 0, %v3501
        %v3503 = vrot.slane %v3499, %v3502
        %v3504 = vadd.f32 %v3497, %v3503
        %v3505 = vadd.f32 %v2103, %v3504
        %v3506 = vld [vmem:[%s3498 + $0x1] sm:$0x1]
        %v3507 = vld [vmem:[%s3498 + $0x2] sm:$0x1]
        %v3508 = vsel %vm430, %v3505, 0.0
        %3509 = vadd.xlane.f32.xlu0 %v3508
        %v3510 = vpop.xlane.xlu0 %3509
        %v3511 = vmul.f32 %v3510, %v1879
        %v3512 = vsub.f32 %v3505, %v3511
        %v3513 = vmul.f32 %v3512, %v3512
        %v3514 = vsel %vm430, %v3513, 0.0
        %3515 = vadd.xlane.f32.xlu0 %v3514
        %v3516 = vpop.xlane.xlu0 %3515
        %v3517 = vmul.f32 %v3516, %v1879
        %v3518 = vadd.f32 %v3517, 1e-05
        %v3519 = vrsqrt.pop %v3518
        %v3520 = vmul.f32 %v3512, %v3519
        %v3521 = vlaneseq
        %v3522 = vshrl.u32 %v3521, 7
        %v3523 = vsub.s32 0, %v3522
        %v3524 = vrot.slane %v3506, %v3523
        %v3525 = vmul.f32 %v3520, %v3524
        %v3526 = vlaneseq
        %v3527 = vshrl.u32 %v3526, 7
        %v3528 = vsub.s32 0, %v3527
        %v3529 = vrot.slane %v3507, %v3528
        %v3530 = vadd.f32 %v3525, %v3529
        %v3531 = vpack.c.bf16 %v3530, %v3530
        %s3532 = scalar_lea.vmem %s7, 16
        %v3533 = vld [vmem:[%s3532] sm:$0xf]
        %v3534 = vld [vmem:[%s3532 + $0x4] sm:$0xf]
        %v3535 = vld [vmem:[%s3532 + $0x8] sm:$0xf]
        %v3536 = vld [vmem:[%s3532 + $0xc] sm:$0xf]
        %s3537 = scalar_lea.vmem %s8, 1
        %v3538 = vld [vmem:[%s3537] sm:$0x1]
        %v3540 = vlaneseq
        %v3541 = vshrl.u32 %v3540, 7
        %v3542 = vsub.s32 0, %v3541
        %v3543 = vrot.slane %v3538, %v3542
        %v3549 = vunpack.c.l.b16 %v3533
        %v3550 = vunpack.c.l.b16 %v3534
        %v3551 = vunpack.c.l.b16 %v3535
        %v3552 = vunpack.c.l.b16 %v3536
        %v3553 = vpack.c.b16 %v3550, %v3549
        %v3554 = vpack.c.b16 %v3552, %v3551
        %v3558 = vsel %vm430, %v3531, 0
        %3560 = vmatprep.subr.bf16.mxu0 0
        %3561 = vmatpush1.bf16.msra.mxu0 0
        %3562 = vmatprep.subr.bf16.mxu0 0
        %3563 = vmatpush1.bf16.msra.mxu0 0
        %3564 = vmatprep.subr.bf16.mxu0 0
        %3565 = vmatpush1.bf16.msra.mxu0 0
        %3566 = vmatprep.subr.bf16.mxu0 0
        %3567 = vmatpush1.bf16.msra.mxu0 0
        %3568 = vmatprep.subr.bf16.mxu0 0
        %3569 = vmatpush1.bf16.msra.mxu0 0
        %3570 = vmatprep.subr.bf16.mxu0 0
        %3571 = vmatpush1.bf16.msra.mxu0 0
        %3572 = vmatprep.subr.bf16.mxu0 0
        %3573 = vmatpush1.bf16.msra.mxu0 %v3554
        %3574 = vmatprep.subr.bf16.mxu0 0
        %3575 = vmatpush1.bf16.msra.mxu0 %v3553
        %3576 = vmatprep.subr.bf16.mxu0 0
        %3577 = vmatpush2.bf16.msra.mxu0 0
        %3578 = vmatprep.subr.bf16.mxu0 0
        %3579 = vmatpush2.bf16.msra.mxu0 0
        %3580 = vmatprep.subr.bf16.mxu0 0
        %3581 = vmatpush2.bf16.msra.mxu0 0
        %3582 = vmatprep.subr.bf16.mxu0 0
        %3583 = vmatpush2.bf16.msra.mxu0 0
        %3584 = vmatprep.subr.bf16.mxu0 0
        %3585 = vmatpush2.bf16.msra.mxu0 0
        %3586 = vmatprep.subr.bf16.mxu0 0
        %3587 = vmatpush2.bf16.msra.mxu0 0
        %3588 = vmatprep.subr.bf16.mxu0 0
        %3589 = vmatpush2.bf16.msra.mxu0 0
        %3590 = vmatprep.subr.bf16.mxu0 0
        %3591 = vmatpush2.bf16.msra.mxu0 0
        %3592 = vmatprep.mubr.bf16.mxu0 0
        %3593 = vmatmul.mubr.bf16.gmra.mxu0 %v3558
        %v3594 = vpop.f32.mrf.mxu0
        %v3595 = vadd.f32 %v3543, %v3594
        %v3596 = vpop.f32.mrf.mxu0
        %v3597 = vpop.f32.mrf.mxu0
        %v3598 = vpop.f32.mrf.mxu0
        %3599 = vdwg.mxu0
        %v3600 = vmax.f32 %v3595, 0.0
        %v3601 = vpack.c.bf16 %v3600, %v3600
        %s3602 = scalar_lea.vmem %s9, 64
        %v3603 = vld [vmem:[%s3602] sm:$0xf]
        %v3604 = vld [vmem:[%s3602 + $0x4] sm:$0xf]
        %v3605 = vld [vmem:[%s3602 + $0x8] sm:$0xf]
        %v3606 = vld [vmem:[%s3602 + $0xc] sm:$0xf]
        %v3607 = vld [vmem:[%s3602 + $0x10] sm:$0xf]
        %v3608 = vld [vmem:[%s3602 + $0x14] sm:$0xf]
        %v3609 = vld [vmem:[%s3602 + $0x18] sm:$0xf]
        %v3610 = vld [vmem:[%s3602 + $0x1c] sm:$0xf]
        %v3611 = vld [vmem:[%s3602 + $0x20] sm:$0xf]
        %v3612 = vld [vmem:[%s3602 + $0x24] sm:$0xf]
        %v3613 = vld [vmem:[%s3602 + $0x28] sm:$0xf]
        %v3614 = vld [vmem:[%s3602 + $0x2c] sm:$0xf]
        %v3615 = vld [vmem:[%s3602 + $0x30] sm:$0xf]
        %v3616 = vld [vmem:[%s3602 + $0x34] sm:$0xf]
        %v3617 = vld [vmem:[%s3602 + $0x38] sm:$0xf]
        %v3618 = vld [vmem:[%s3602 + $0x3c] sm:$0xf]
        %v3619 = vld [vmem:[%s3498 + $0x3] sm:$0x1]
        %v3620 = vlaneseq
        %v3621 = vshrl.u32 %v3620, 7
        %v3622 = vsub.s32 0, %v3621
        %v3623 = vrot.slane %v3619, %v3622
        %v3640 = vunpack.c.l.b16 %v3603
        %v3641 = vunpack.c.l.b16 %v3604
        %v3642 = vunpack.c.l.b16 %v3605
        %v3643 = vunpack.c.l.b16 %v3606
        %v3644 = vunpack.c.l.b16 %v3607
        %v3645 = vunpack.c.l.b16 %v3608
        %v3646 = vunpack.c.l.b16 %v3609
        %v3647 = vunpack.c.l.b16 %v3610
        %v3648 = vunpack.c.l.b16 %v3611
        %v3649 = vunpack.c.l.b16 %v3612
        %v3650 = vunpack.c.l.b16 %v3613
        %v3651 = vunpack.c.l.b16 %v3614
        %v3652 = vunpack.c.l.b16 %v3615
        %v3653 = vunpack.c.l.b16 %v3616
        %v3654 = vunpack.c.l.b16 %v3617
        %v3655 = vunpack.c.l.b16 %v3618
        %v3656 = vpack.c.b16 %v3641, %v3640
        %v3657 = vpack.c.b16 %v3643, %v3642
        %v3658 = vpack.c.b16 %v3645, %v3644
        %v3659 = vpack.c.b16 %v3647, %v3646
        %v3660 = vpack.c.b16 %v3649, %v3648
        %v3661 = vpack.c.b16 %v3651, %v3650
        %v3662 = vpack.c.b16 %v3653, %v3652
        %v3663 = vpack.c.b16 %v3655, %v3654
        %3672 = vmatprep.subr.bf16.mxu0 0
        %3673 = vmatpush1.bf16.msra.mxu0 %v3663
        %3674 = vmatprep.subr.bf16.mxu0 0
        %3675 = vmatpush1.bf16.msra.mxu0 %v3662
        %3676 = vmatprep.subr.bf16.mxu0 0
        %3677 = vmatpush1.bf16.msra.mxu0 %v3661
        %3678 = vmatprep.subr.bf16.mxu0 0
        %3679 = vmatpush1.bf16.msra.mxu0 %v3660
        %3680 = vmatprep.subr.bf16.mxu0 0
        %3681 = vmatpush1.bf16.msra.mxu0 %v3659
        %3682 = vmatprep.subr.bf16.mxu0 0
        %3683 = vmatpush1.bf16.msra.mxu0 %v3658
        %3684 = vmatprep.subr.bf16.mxu0 0
        %3685 = vmatpush1.bf16.msra.mxu0 %v3657
        %3686 = vmatprep.subr.bf16.mxu0 0
        %3687 = vmatpush1.bf16.msra.mxu0 %v3656
        %3688 = vmatprep.subr.bf16.mxu0 0
        %3689 = vmatpush2.bf16.msra.mxu0 0
        %3690 = vmatprep.subr.bf16.mxu0 0
        %3691 = vmatpush2.bf16.msra.mxu0 0
        %3692 = vmatprep.subr.bf16.mxu0 0
        %3693 = vmatpush2.bf16.msra.mxu0 0
        %3694 = vmatprep.subr.bf16.mxu0 0
        %3695 = vmatpush2.bf16.msra.mxu0 0
        %3696 = vmatprep.subr.bf16.mxu0 0
        %3697 = vmatpush2.bf16.msra.mxu0 0
        %3698 = vmatprep.subr.bf16.mxu0 0
        %3699 = vmatpush2.bf16.msra.mxu0 0
        %3700 = vmatprep.subr.bf16.mxu0 0
        %3701 = vmatpush2.bf16.msra.mxu0 0
        %3702 = vmatprep.subr.bf16.mxu0 0
        %3703 = vmatpush2.bf16.msra.mxu0 0
        %3704 = vmatprep.mubr.bf16.mxu0 0
        %3705 = vmatmul.mubr.bf16.gmra.mxu0 %v3601
        %v3706 = vpop.f32.mrf.mxu0
        %v3707 = vadd.f32 %v3623, %v3706
        %v3708 = vpop.f32.mrf.mxu0
        %v3709 = vpop.f32.mrf.mxu0
        %v3710 = vpop.f32.mrf.mxu0
        %3711 = vdwg.mxu0
        %v3712 = vadd.f32 %v3530, %v3707
        %v3713 = vld [vmem:[%s3498 + $0x4] sm:$0x1]
        %v3714 = vld [vmem:[%s3498 + $0x5] sm:$0x1]
        %v3715 = vsel %vm430, %v3712, 0.0
        %3716 = vadd.xlane.f32.xlu0 %v3715
        %v3717 = vpop.xlane.xlu0 %3716
        %v3718 = vmul.f32 %v3717, %v1879
        %v3719 = vsub.f32 %v3712, %v3718
        %v3720 = vmul.f32 %v3719, %v3719
        %v3721 = vsel %vm430, %v3720, 0.0
        %3722 = vadd.xlane.f32.xlu0 %v3721
        %v3723 = vpop.xlane.xlu0 %3722
        %v3724 = vmul.f32 %v3723, %v1879
        %v3725 = vadd.f32 %v3724, 1e-05
        %v3726 = vrsqrt.pop %v3725
        %v3727 = vmul.f32 %v3719, %v3726
        %v3728 = vlaneseq
        %v3729 = vshrl.u32 %v3728, 7
        %v3730 = vsub.s32 0, %v3729
        %v3731 = vrot.slane %v3713, %v3730
        %v3732 = vmul.f32 %v3727, %v3731
        %v3733 = vlaneseq
        %v3734 = vshrl.u32 %v3733, 7
        %v3735 = vsub.s32 0, %v3734
        %v3736 = vrot.slane %v3714, %v3735
        %v3737 = vadd.f32 %v3732, %v3736
        %v3738 = vld [vmem:[%s10] sm:$0x1]
        %v3739 = vld [vmem:[#allocation2] sm:$0x1]
        %3741 = vset.pattern.permute.xlu0 0
        %3742 = vperm.xlu0 %3741, %v3739
        %v3743 = vpop.permute.xlu0 %3742
        %v3745 = vlaneseq
        %v3746 = vshrl.u32 %v3745, 7
        %v3747 = vsub.s32 0, %v3746
        %v3748 = vrot.slane %v3743, %v3747
        %v3750 = vsel %vm430, %v3738, 0
        %v3753 = vsel %vm430, %v3737, 0
        %3755 = vmatprep.subr.mxu0 0.0
        %3756 = vmatpush1.xpose.msra.mxu0 0.0
        %3757 = vmatprep.subr.mxu0 0.0
        %3758 = vmatpush1.xpose.msra.mxu0 0.0
        %3759 = vmatprep.subr.mxu0 0.0
        %3760 = vmatpush1.xpose.msra.mxu0 0.0
        %3761 = vmatprep.subr.mxu0 0.0
        %3762 = vmatpush1.xpose.msra.mxu0 0.0
        %3763 = vmatprep.subr.mxu0 0.0
        %3764 = vmatpush1.xpose.msra.mxu0 0.0
        %3765 = vmatprep.subr.mxu0 0.0
        %3766 = vmatpush1.xpose.msra.mxu0 0.0
        %3767 = vmatprep.subr.mxu0 0.0
        %3768 = vmatpush1.xpose.msra.mxu0 0.0
        %3769 = vmatprep.subr.mxu0 0.0
        %3770 = vmatpush1.xpose.msra.mxu0 0.0
        %3771 = vmatprep.subr.mxu0 0.0
        %3772 = vmatpush1.xpose.msra.mxu0 0.0
        %3773 = vmatprep.subr.mxu0 0.0
        %3774 = vmatpush1.xpose.msra.mxu0 0.0
        %3775 = vmatprep.subr.mxu0 0.0
        %3776 = vmatpush1.xpose.msra.mxu0 0.0
        %3777 = vmatprep.subr.mxu0 0.0
        %3778 = vmatpush1.xpose.msra.mxu0 0.0
        %3779 = vmatprep.subr.mxu0 0.0
        %3780 = vmatpush1.xpose.msra.mxu0 0.0
        %3781 = vmatprep.subr.mxu0 0.0
        %3782 = vmatpush1.xpose.msra.mxu0 0.0
        %3783 = vmatprep.subr.mxu0 0.0
        %3784 = vmatpush1.xpose.msra.mxu0 0.0
        %3785 = vmatprep.subr.mxu0 0.0
        %3786 = vmatpush1.xpose.msra.mxu0 %v3753
        %3787 = vmatprep.subr.mxu0 0.0
        %3788 = vmatpush2.xpose.msra.mxu0 0.0
        %3789 = vmatprep.subr.mxu0 0.0
        %3790 = vmatpush2.xpose.msra.mxu0 0.0
        %3791 = vmatprep.subr.mxu0 0.0
        %3792 = vmatpush2.xpose.msra.mxu0 0.0
        %3793 = vmatprep.subr.mxu0 0.0
        %3794 = vmatpush2.xpose.msra.mxu0 0.0
        %3795 = vmatprep.subr.mxu0 0.0
        %3796 = vmatpush2.xpose.msra.mxu0 0.0
        %3797 = vmatprep.subr.mxu0 0.0
        %3798 = vmatpush2.xpose.msra.mxu0 0.0
        %3799 = vmatprep.subr.mxu0 0.0
        %3800 = vmatpush2.xpose.msra.mxu0 0.0
        %3801 = vmatprep.subr.mxu0 0.0
        %3802 = vmatpush2.xpose.msra.mxu0 0.0
        %3803 = vmatprep.subr.mxu0 0.0
        %3804 = vmatpush2.xpose.msra.mxu0 0.0
        %3805 = vmatprep.subr.mxu0 0.0
        %3806 = vmatpush2.xpose.msra.mxu0 0.0
        %3807 = vmatprep.subr.mxu0 0.0
        %3808 = vmatpush2.xpose.msra.mxu0 0.0
        %3809 = vmatprep.subr.mxu0 0.0
        %3810 = vmatpush2.xpose.msra.mxu0 0.0
        %3811 = vmatprep.subr.mxu0 0.0
        %3812 = vmatpush2.xpose.msra.mxu0 0.0
        %3813 = vmatprep.subr.mxu0 0.0
        %3814 = vmatpush2.xpose.msra.mxu0 0.0
        %3815 = vmatprep.subr.mxu0 0.0
        %3816 = vmatpush2.xpose.msra.mxu0 0.0
        %3817 = vmatprep.subr.mxu0 0.0
        %3818 = vmatpush2.xpose.msra.mxu0 0.0
        %3819 = vmatprep.mubr.f32.mxu0 0.0
        %3820 = vmatmul.mubr.f32.gmra.mxu0 %v3750
        %v3821 = vpop.f32.mrf.mxu0
        %v3822 = vadd.f32 %v3748, %v3821
        %v3823 = vpop.f32.mrf.mxu0
        %3824 = vdwg.mxu0
        %vm3825 = vcmask 57344
        %3826 = vst.msk [vmem:[%s405] sm:$0x1] %vm3825, %v3822
        %s3827 = sand.u32 %s293, 1
        %s3828 = scalar_lea.sflag [#allocation4], %s3827
        %s3829 = sand.u32 %s293, 1
        %s3830 = scalar_lea.vmem [#allocation3], %s3829
        // Predicated region
        $region69: #{simple_kws_forward.1} parent=67 // pred_check
          %p3831 = pneg %p303
        $region70: #{simple_kws_forward.1} parent=67 // pred_check_branch
          %3833 = sbr.rel (%p3831) target = $region72
        $region71: #{simple_kws_forward.1} parent=67 // pred_region
          %s3835 = ssub.s32 16, 16
          %3836 = vsyncadd %s3828, %s3835
          %s3837 = smul.addr %s28, 16
          %s3838 = scalar_lea.hbm %s12, %s3837
          %s3840 = sshll.u32 %s3830, 4
          %s3841 = int_to_ptr.vmem [resolvable:$true] %s3840
          %3843 = dma.vmem_to_hbm [thread:$0]  %s3841, 16, %s3838, %s3828
        $region72: #{simple_kws_forward.1} parent=67 // pred_fallthru
          _
      $region68: #{simple_kws_forward.1} parent=5 // pred_fallthru
        _
      %p3844 = scmp.le.s32.totalorder 2, %s23
      // Predicated region
      $region73: #{simple_kws_forward.1} parent=5 // pred_check
        %p3845 = pneg %p3844
      $region74: #{simple_kws_forward.1} parent=5 // pred_check_branch
        %3847 = sbr.rel (%p3845) target = $region76
      $region75: #{simple_kws_forward.1} parent=5 // pred_region
        %s3848 = ssub.s32 %s23, 2
        // Predicated region
        $region77: #{simple_kws_forward.1} parent=75 // pred_check
          %p3849 = pneg %p309
        $region78: #{simple_kws_forward.1} parent=75 // pred_check_branch
          %3851 = sbr.rel (%p3849) target = $region80
        $region79: #{simple_kws_forward.1} parent=75 // pred_region
          %s3852 = sand.u32 %s294, 1
          %s3853 = scalar_lea.sflag [#allocation4], %s3852
          %s3854 = sand.u32 %s294, 1
          %s3855 = scalar_lea.vmem [#allocation3], %s3854
          %3856 = dma.done %s3853, 16
        $region80: #{simple_kws_forward.1} parent=75 // pred_fallthru
          _
      $region76: #{simple_kws_forward.1} parent=5 // pred_fallthru
        _
    $region6: #{simple_kws_forward.1} parent=1 // loop_footer
      %s27 = sadd.s32 1, %s23
    $region7: #{simple_kws_forward.1} parent=1 // loop_footer_branch
      %22 = sbr.rel target = $region3
    $region8: #{simple_kws_forward.1} parent=1 // loop_exit
      _
    %3857 = vsyncpa [#allocation4], 1
    %s3858 = scalar_lea.sflag [#allocation4], 1
    %3859 = vsyncpa %s3858, 1

</llo_original>
